<compile_context>
chip_gen: v7x
topology: tpu7x:2x2x1
jax: 0.10.0
libtpu: 0.0.40
codegen_flags: <defaults>
</compile_context>

<pallas_src>
import functools
import math

import jax
import jax.numpy as jnp
from jax import lax
from jax.experimental import pallas as pl
from jax.experimental.pallas import tpu as pltpu  # noqa: F401  (no TPU-specific params needed at this size)


LANE = 128  # lane-dense output width for the classifier logits

CFG = dict(
    vocab=30,
    hidden=32,
    layers=2,
    heads=4,
    intermediate=64,
    max_pos=16,
    type_vocab=2,
    num_classes=2,
    eps=1e-12,
)


def _gelu_tanh(y):
    # tanh-approx GELU (BERT intermediate activation).
    return 0.5 * y * (1.0 + jnp.tanh(0.7978845608028654 * (y + 0.044715 * y * y * y)))


# ----------------------------------------------------------------------------- fused kernel

def _fused_bert_kernel(
    ids_ref, mask_ref,
    word_ref, pos_ref, type_ref, emb_g_ref, emb_b_ref,
    wqkv_ref, bqkv_ref, wo_ref, bo_ref, ln1_g_ref, ln1_b_ref,
    wi_ref, bi_ref, wo2_ref, bo2_ref, ln2_g_ref, ln2_b_ref,
    pool_w_ref, pool_b_ref, fc_w_ref, fc_b_ref,
    logits_ref,
    *, B, S, H, nH, L, eps,
):
    Dh = H // nH
    G = B * nH
    BS = B * S
    scale = 1.0 / math.sqrt(Dh)
    bf16 = jnp.bfloat16
    f32 = jnp.float32

    def layernorm(v, g, b):
        mean = jnp.mean(v, axis=-1, keepdims=True)
        cen = v - mean
        var = jnp.mean(cen * cen, axis=-1, keepdims=True)
        return cen * lax.rsqrt(var + eps) * g + b

    # ---- Embeddings fused in-kernel.  Word gather = exact one-hot @ table (one MXU push). ----
    V = word_ref.shape[0]
    ids = ids_ref[...]                                                     # [B*S, 1] int32
    onehot = (ids == lax.broadcasted_iota(jnp.int32, (BS, V), 1)).astype(f32)
    we = jnp.dot(onehot, word_ref[...], preferred_element_type=f32)        # [B*S, H]
    pt = pos_ref[0:S, :] + type_ref[0:1, :]                                # [S, H]  (token_type_ids == 0)
    x = (we.reshape(B, S, H) + pt[None, :, :]).reshape(BS, H)
    x = layernorm(x, emb_g_ref[...], emb_b_ref[...])                       # [B*S, H] f32

    # ---- Additive key mask: built ONCE, pre-broadcast to the grouped [B*nH, S, S] layout
    # (h-major grouping: g = h*B + b), shared by both layers. ----
    neg = (1.0 - mask_ref[...].astype(f32)) * (-1e9)                       # [B, S]
    bias_g = jnp.broadcast_to(neg[None, :, None, :], (nH, B, S, S)).reshape(G, S, S)

    def split_heads(t):
        # [B*S, H] -> [nH*B, S, Dh] (h-major).  Only lane slices + leading-dim reshapes/concats,
        # so no sublane<->lane relayout is required.
        return jnp.concatenate(
            [t[:, h * Dh:(h + 1) * Dh].reshape(B, S, Dh) for h in range(nH)], axis=0)

    for l in range(L):                                                     # static unroll (L=2; no spills at this size)
        # Fused QKV projection: one [B*S, H] x [H, 3H] bf16 MXU matmul, f32 accumulate.
        qkv = jnp.dot(x.astype(bf16), wqkv_ref[l],
                      preferred_element_type=f32) + bqkv_ref[l]            # [B*S, 3H]
        q = split_heads(qkv[:, 0:H]).astype(bf16)                          # [G, S, Dh]
        k = split_heads(qkv[:, H:2 * H]).astype(bf16)
        v = split_heads(qkv[:, 2 * H:3 * H]).astype(bf16)

        # Scores for ALL (batch, head) pairs in one batched contraction (contract Dh, no k.T).
        s = jnp.einsum('gqd,gkd->gqk', q, k,
                       preferred_element_type=f32) * scale + bias_g        # [G, S, S]
        s = s - jnp.max(s, axis=-1, keepdims=True)
        p = jnp.exp(s)
        p = p * pl.reciprocal(jnp.sum(p, axis=-1, keepdims=True), approx=True)
        ctx = jnp.einsum('gqk,gkd->gqd', p.astype(bf16), v,
                         preferred_element_type=f32)                       # [G, S, Dh]

        # Re-merge heads on the lane axis (nH*Dh = H <= 128 lanes stays within one vreg) and do a
        # single [B*S, H] x [H, H] output projection instead of per-head partials + VALU adds.
        ctx_m = jnp.concatenate(
            [ctx[h * B:(h + 1) * B] for h in range(nH)], axis=-1)          # [B, S, H]
        ctx_m = ctx_m.reshape(BS, H)
        attn_out = jnp.dot(ctx_m.astype(bf16), wo_ref[l],
                           preferred_element_type=f32) + bo_ref[l]         # [B*S, H]

        x = layernorm(attn_out + x, ln1_g_ref[l], ln1_b_ref[l])

        # Feed-forward: bias + GELU fused as epilogue of the first matmul.
        inter = jnp.dot(x.astype(bf16), wi_ref[l],
                        preferred_element_type=f32) + bi_ref[l]
        inter = _gelu_tanh(inter)
        ffn_out = jnp.dot(inter.astype(bf16), wo2_ref[l],
                          preferred_element_type=f32) + bo2_ref[l]
        x = layernorm(ffn_out + x, ln2_g_ref[l], ln2_b_ref[l])

    # ---- Pooler + classifier on the CLS rows only; lane-dense [B, 128] output write. ----
    cls = jnp.concatenate([x[b * S:b * S + 1, :] for b in range(B)], axis=0)   # [B, H]
    pooled = jnp.tanh(jnp.dot(cls.astype(bf16), pool_w_ref[...],
                              preferred_element_type=f32) + pool_b_ref[...])   # [B, H]
    logits_ref[...] = jnp.dot(pooled.astype(bf16), fc_w_ref[...],
                              preferred_element_type=f32) + fc_b_ref[...]      # [B, 128]


# ----------------------------------------------------------------------------- params / forward

def init_params(key, cfg):
    H, I, L = cfg["hidden"], cfg["intermediate"], cfg["layers"]
    C = cfg["num_classes"]
    Vp = ((cfg["vocab"] + 7) // 8) * 8     # pad vocab rows (sublane multiple) for the one-hot gather matmul
    keys = iter(jax.random.split(key, 64))

    def nrm(shape, dtype=jnp.float32):
        return (jax.random.normal(next(keys), shape, jnp.float32) * 0.02).astype(dtype)

    def stack(make):
        return jnp.stack([make() for _ in range(L)], axis=0)

    # Matmul weights stored in bf16 for the MXU; biases / LN params / embedding tables stay f32.
    # Per-layer tensors are stacked on a leading layer axis so the whole model fits in one call.
    fc_w_core = nrm((H, C))
    return dict(
        word_emb=nrm((Vp, H)),                                   # rows >= vocab never indexed
        pos_emb=nrm((cfg["max_pos"], H)),
        type_emb=nrm((cfg["type_vocab"], H)),
        emb_ln_g=jnp.ones((1, H), jnp.float32),
        emb_ln_b=jnp.zeros((1, H), jnp.float32),
        wqkv=stack(lambda: nrm((H, 3 * H), jnp.bfloat16)),
        bqkv=jnp.zeros((L, 1, 3 * H), jnp.float32),
        wo=stack(lambda: nrm((H, H), jnp.bfloat16)),
        bo=jnp.zeros((L, 1, H), jnp.float32),
        ln1_g=jnp.ones((L, 1, H), jnp.float32),
        ln1_b=jnp.zeros((L, 1, H), jnp.float32),
        wi=stack(lambda: nrm((H, I), jnp.bfloat16)),
        bi=jnp.zeros((L, 1, I), jnp.float32),
        wo2=stack(lambda: nrm((I, H), jnp.bfloat16)),
        bo2=jnp.zeros((L, 1, H), jnp.float32),
        ln2_g=jnp.ones((L, 1, H), jnp.float32),
        ln2_b=jnp.zeros((L, 1, H), jnp.float32),
        pool_w=nrm((H, H), jnp.bfloat16),
        pool_b=jnp.zeros((1, H), jnp.float32),
        # Classifier weights zero-padded to 128 lanes so the kernel's output store is lane-dense.
        fc_w=jnp.pad(fc_w_core, ((0, 0), (0, LANE - C))).astype(jnp.bfloat16),
        fc_b=jnp.zeros((1, LANE), jnp.float32),
    )


def bert_paired_classifier_forward(params, input_ids, attention_mask, cfg=CFG):
    B, S = input_ids.shape
    H, nH, L, C = cfg["hidden"], cfg["heads"], cfg["layers"], cfg["num_classes"]

    ids = input_ids.reshape(B * S, 1).astype(jnp.int32)     # gather itself happens in-kernel
    mask = attention_mask.astype(jnp.int32)                 # [B, S]; cast to f32 in-kernel

    kernel = functools.partial(
        _fused_bert_kernel, B=B, S=S, H=H, nH=nH, L=L, eps=cfg["eps"])

    # Single pallas_call: params + activations (a few tens of KB) all live in VMEM, so no grid /
    # tiling is needed at this size.  For real IgBERT sizes this would stream weights per layer
    # (grid axis over L / emit_pipeline with pl.ANY HBM refs) with bf16 weight tiles + f32
    # accumulators, and a leading 'parallel' grid axis over row blocks for v7x's second core.
    logits_pad = pl.pallas_call(
        kernel,
        out_shape=jax.ShapeDtypeStruct((B, LANE), jnp.float32),
    )(ids, mask,
      params["word_emb"], params["pos_emb"], params["type_emb"],
      params["emb_ln_g"], params["emb_ln_b"],
      params["wqkv"], params["bqkv"], params["wo"], params["bo"],
      params["ln1_g"], params["ln1_b"],
      params["wi"], params["bi"], params["wo2"], params["bo2"],
      params["ln2_g"], params["ln2_b"],
      params["pool_w"], params["pool_b"], params["fc_w"], params["fc_b"])

    # Kernel writes a lane-dense [B, 128] tile; only the first num_classes columns are logits.
    # (dropout(p=0.1) is identity in eval mode.)
    return logits_pad[:, :C]


# ----------------------------------------------------------------------------- main

if __name__ == "__main__":
    key = jax.random.PRNGKey(0)
    k_param, k_ids = jax.random.split(key)

    B, S = 2, 8
    params = init_params(k_param, CFG)
    input_ids = jax.random.randint(k_ids, (B, S), 0, CFG["vocab"], dtype=jnp.int32)
    attention_mask = jnp.array(
        [[1, 1, 1, 1, 1, 1, 1, 1],
         [1, 1, 1, 1, 1, 1, 0, 0]], dtype=jnp.int32)

    forward = jax.jit(bert_paired_classifier_forward)
    logits = forward(params, input_ids, attention_mask)
    jax.block_until_ready(logits)
    assert logits.shape == (B, CFG["num_classes"])
    print("KERNEL_OK")
</pallas_src>

<mosaic_0001>
module attributes {stable_mosaic.version = 11 : i64} {
  func.func @_fused_bert_kernel(%arg0: memref<16x1xi32, #tpu.memory_space<vmem>>, %arg1: memref<2x8xi32, #tpu.memory_space<vmem>>, %arg2: memref<32x32xf32, #tpu.memory_space<vmem>>, %arg3: memref<16x32xf32, #tpu.memory_space<vmem>>, %arg4: memref<2x32xf32, #tpu.memory_space<vmem>>, %arg5: memref<1x32xf32, #tpu.memory_space<vmem>>, %arg6: memref<1x32xf32, #tpu.memory_space<vmem>>, %arg7: memref<2x32x96xbf16, #tpu.memory_space<vmem>>, %arg8: memref<2x1x96xf32, #tpu.memory_space<vmem>>, %arg9: memref<2x32x32xbf16, #tpu.memory_space<vmem>>, %arg10: memref<2x1x32xf32, #tpu.memory_space<vmem>>, %arg11: memref<2x1x32xf32, #tpu.memory_space<vmem>>, %arg12: memref<2x1x32xf32, #tpu.memory_space<vmem>>, %arg13: memref<2x32x64xbf16, #tpu.memory_space<vmem>>, %arg14: memref<2x1x64xf32, #tpu.memory_space<vmem>>, %arg15: memref<2x64x32xbf16, #tpu.memory_space<vmem>>, %arg16: memref<2x1x32xf32, #tpu.memory_space<vmem>>, %arg17: memref<2x1x32xf32, #tpu.memory_space<vmem>>, %arg18: memref<2x1x32xf32, #tpu.memory_space<vmem>>, %arg19: memref<32x32xbf16, #tpu.memory_space<vmem>>, %arg20: memref<1x32xf32, #tpu.memory_space<vmem>>, %arg21: memref<32x128xbf16, #tpu.memory_space<vmem>>, %arg22: memref<1x128xf32, #tpu.memory_space<vmem>>, %arg23: memref<2x128xf32, #tpu.memory_space<vmem>>) attributes {dimension_semantics = [], scalar_prefetch = 0 : i64, scratch_operands = 0 : i64, tpu.core_type = #tpu.core_type<tc>} {
    %c0 = arith.constant 0 : index
    %c0_0 = arith.constant 0 : index
    %0 = vector.load %arg0[%c0, %c0_0] : memref<16x1xi32, #tpu.memory_space<vmem>>, vector<16x1xi32>
    %1 = tpu.iota {dimensions = array<i32: 1>} : vector<16x32xi32>
    %2 = vector.broadcast %0 : vector<16x1xi32> to vector<16x32xi32>
    %3 = arith.cmpi eq, %2, %1 : vector<16x32xi32>
    %4 = arith.extui %3 : vector<16x32xi1> to vector<16x32xi32>
    %5 = arith.sitofp %4 : vector<16x32xi32> to vector<16x32xf32>
    %c0_1 = arith.constant 0 : index
    %c0_2 = arith.constant 0 : index
    %6 = vector.load %arg2[%c0_1, %c0_2] : memref<32x32xf32, #tpu.memory_space<vmem>>, vector<32x32xf32>
    %cst = arith.constant dense<0.000000e+00> : vector<16x32xf32>
    %7 = tpu.matmul %5, %6, %cst {dimension_numbers = #tpu.dot_dimension_numbers<[1], [0], [0], [1], [0, 0, 1, 1], [], []>} : vector<16x32xf32>, vector<32x32xf32>, vector<16x32xf32> -> vector<16x32xf32>
    %c0_3 = arith.constant 0 : index
    %c0_4 = arith.constant 0 : index
    %8 = vector.load %arg3[%c0_3, %c0_4] : memref<16x32xf32, #tpu.memory_space<vmem>>, vector<8x32xf32>
    %c0_5 = arith.constant 0 : index
    %c0_6 = arith.constant 0 : index
    %9 = vector.load %arg4[%c0_5, %c0_6] : memref<2x32xf32, #tpu.memory_space<vmem>>, vector<1x32xf32>
    %10 = vector.broadcast %9 : vector<1x32xf32> to vector<8x32xf32>
    %11 = arith.addf %8, %10 : vector<8x32xf32>
    %12 = vector.shape_cast %7 : vector<16x32xf32> to vector<2x8x32xf32>
    %13 = vector.shape_cast %11 : vector<8x32xf32> to vector<1x8x32xf32>
    %14 = vector.broadcast %13 : vector<1x8x32xf32> to vector<2x8x32xf32>
    %15 = arith.addf %12, %14 : vector<2x8x32xf32>
    %16 = vector.shape_cast %15 : vector<2x8x32xf32> to vector<16x32xf32>
    %c0_7 = arith.constant 0 : index
    %c0_8 = arith.constant 0 : index
    %17 = vector.load %arg5[%c0_7, %c0_8] : memref<1x32xf32, #tpu.memory_space<vmem>>, vector<1x32xf32>
    %c0_9 = arith.constant 0 : index
    %c0_10 = arith.constant 0 : index
    %18 = vector.load %arg6[%c0_9, %c0_10] : memref<1x32xf32, #tpu.memory_space<vmem>>, vector<1x32xf32>
    %cst_11 = arith.constant dense<0.000000e+00> : vector<16xf32>
    %19 = vector.multi_reduction <add>, %16, %cst_11 [1] : vector<16x32xf32> to vector<16xf32>
    %20 = vector.shape_cast %19 : vector<16xf32> to vector<16x1xf32>
    %cst_12 = arith.constant 3.200000e+01 : f32
    %21 = vector.broadcast %cst_12 : f32 to vector<16x1xf32>
    %22 = arith.divf %20, %21 : vector<16x1xf32>
    %23 = vector.broadcast %22 : vector<16x1xf32> to vector<16x32xf32>
    %24 = arith.subf %16, %23 : vector<16x32xf32>
    %25 = arith.mulf %24, %24 : vector<16x32xf32>
    %cst_13 = arith.constant dense<0.000000e+00> : vector<16xf32>
    %26 = vector.multi_reduction <add>, %25, %cst_13 [1] : vector<16x32xf32> to vector<16xf32>
    %27 = vector.shape_cast %26 : vector<16xf32> to vector<16x1xf32>
    %cst_14 = arith.constant 3.200000e+01 : f32
    %28 = vector.broadcast %cst_14 : f32 to vector<16x1xf32>
    %29 = arith.divf %27, %28 : vector<16x1xf32>
    %cst_15 = arith.constant 9.99999996E-13 : f32
    %30 = vector.broadcast %cst_15 : f32 to vector<16x1xf32>
    %31 = arith.addf %29, %30 : vector<16x1xf32>
    %32 = math.rsqrt %31 : vector<16x1xf32>
    %33 = vector.broadcast %32 : vector<16x1xf32> to vector<16x32xf32>
    %34 = arith.mulf %24, %33 : vector<16x32xf32>
    %35 = vector.broadcast %17 : vector<1x32xf32> to vector<16x32xf32>
    %36 = arith.mulf %34, %35 : vector<16x32xf32>
    %37 = vector.broadcast %18 : vector<1x32xf32> to vector<16x32xf32>
    %38 = arith.addf %36, %37 : vector<16x32xf32>
    %c0_16 = arith.constant 0 : index
    %c0_17 = arith.constant 0 : index
    %39 = vector.load %arg1[%c0_16, %c0_17] : memref<2x8xi32, #tpu.memory_space<vmem>>, vector<2x8xi32>
    %40 = arith.sitofp %39 : vector<2x8xi32> to vector<2x8xf32>
    %cst_18 = arith.constant 1.000000e+00 : f32
    %41 = vector.broadcast %cst_18 : f32 to vector<2x8xf32>
    %42 = arith.subf %41, %40 : vector<2x8xf32>
    %cst_19 = arith.constant -1.000000e+09 : f32
    %43 = vector.broadcast %cst_19 : f32 to vector<2x8xf32>
    %44 = arith.mulf %42, %43 : vector<2x8xf32>
    %45 = vector.shape_cast %44 : vector<2x8xf32> to vector<1x2x1x8xf32>
    %46 = vector.shape_cast %45 : vector<1x2x1x8xf32> to vector<1x2x1x8xf32>
    %47 = vector.broadcast %46 : vector<1x2x1x8xf32> to vector<4x2x8x8xf32>
    %48 = vector.shape_cast %47 : vector<4x2x8x8xf32> to vector<8x8x8xf32>
    %49 = arith.truncf %38 : vector<16x32xf32> to vector<16x32xbf16>
    %c0_20 = arith.constant 0 : index
    %c0_21 = arith.constant 0 : index
    %c0_22 = arith.constant 0 : index
    %50 = vector.load %arg7[%c0_20, %c0_21, %c0_22] : memref<2x32x96xbf16, #tpu.memory_space<vmem>>, vector<1x32x96xbf16>
    %51 = vector.shape_cast %50 : vector<1x32x96xbf16> to vector<32x96xbf16>
    %cst_23 = arith.constant dense<0.000000e+00> : vector<16x96xf32>
    %52 = tpu.matmul %49, %51, %cst_23 {dimension_numbers = #tpu.dot_dimension_numbers<[1], [0], [0], [1], [0, 0, 1, 1], [], []>} : vector<16x32xbf16>, vector<32x96xbf16>, vector<16x96xf32> -> vector<16x96xf32>
    %c0_24 = arith.constant 0 : index
    %c0_25 = arith.constant 0 : index
    %c0_26 = arith.constant 0 : index
    %53 = vector.load %arg8[%c0_24, %c0_25, %c0_26] : memref<2x1x96xf32, #tpu.memory_space<vmem>>, vector<1x1x96xf32>
    %54 = vector.shape_cast %53 : vector<1x1x96xf32> to vector<1x96xf32>
    %55 = vector.broadcast %54 : vector<1x96xf32> to vector<16x96xf32>
    %56 = arith.addf %52, %55 : vector<16x96xf32>
    %57 = vector.extract_strided_slice %56 {offsets = [0, 0], sizes = [16, 32], strides = [1, 1]} : vector<16x96xf32> to vector<16x32xf32>
    %58 = vector.extract_strided_slice %57 {offsets = [0, 0], sizes = [16, 8], strides = [1, 1]} : vector<16x32xf32> to vector<16x8xf32>
    %59 = vector.shape_cast %58 : vector<16x8xf32> to vector<2x8x8xf32>
    %60 = vector.extract_strided_slice %57 {offsets = [0, 8], sizes = [16, 8], strides = [1, 1]} : vector<16x32xf32> to vector<16x8xf32>
    %61 = vector.shape_cast %60 : vector<16x8xf32> to vector<2x8x8xf32>
    %62 = vector.extract_strided_slice %57 {offsets = [0, 16], sizes = [16, 8], strides = [1, 1]} : vector<16x32xf32> to vector<16x8xf32>
    %63 = vector.shape_cast %62 : vector<16x8xf32> to vector<2x8x8xf32>
    %64 = vector.extract_strided_slice %57 {offsets = [0, 24], sizes = [16, 8], strides = [1, 1]} : vector<16x32xf32> to vector<16x8xf32>
    %65 = vector.shape_cast %64 : vector<16x8xf32> to vector<2x8x8xf32>
    %66 = tpu.concatenate %59, %61, %63, %65 in 0 : vector<2x8x8xf32>, vector<2x8x8xf32>, vector<2x8x8xf32>, vector<2x8x8xf32> -> vector<8x8x8xf32>
    %67 = arith.truncf %66 : vector<8x8x8xf32> to vector<8x8x8xbf16>
    %68 = vector.extract_strided_slice %56 {offsets = [0, 32], sizes = [16, 32], strides = [1, 1]} : vector<16x96xf32> to vector<16x32xf32>
    %69 = vector.extract_strided_slice %68 {offsets = [0, 0], sizes = [16, 8], strides = [1, 1]} : vector<16x32xf32> to vector<16x8xf32>
    %70 = vector.shape_cast %69 : vector<16x8xf32> to vector<2x8x8xf32>
    %71 = vector.extract_strided_slice %68 {offsets = [0, 8], sizes = [16, 8], strides = [1, 1]} : vector<16x32xf32> to vector<16x8xf32>
    %72 = vector.shape_cast %71 : vector<16x8xf32> to vector<2x8x8xf32>
    %73 = vector.extract_strided_slice %68 {offsets = [0, 16], sizes = [16, 8], strides = [1, 1]} : vector<16x32xf32> to vector<16x8xf32>
    %74 = vector.shape_cast %73 : vector<16x8xf32> to vector<2x8x8xf32>
    %75 = vector.extract_strided_slice %68 {offsets = [0, 24], sizes = [16, 8], strides = [1, 1]} : vector<16x32xf32> to vector<16x8xf32>
    %76 = vector.shape_cast %75 : vector<16x8xf32> to vector<2x8x8xf32>
    %77 = tpu.concatenate %70, %72, %74, %76 in 0 : vector<2x8x8xf32>, vector<2x8x8xf32>, vector<2x8x8xf32>, vector<2x8x8xf32> -> vector<8x8x8xf32>
    %78 = arith.truncf %77 : vector<8x8x8xf32> to vector<8x8x8xbf16>
    %79 = vector.extract_strided_slice %56 {offsets = [0, 64], sizes = [16, 32], strides = [1, 1]} : vector<16x96xf32> to vector<16x32xf32>
    %80 = vector.extract_strided_slice %79 {offsets = [0, 0], sizes = [16, 8], strides = [1, 1]} : vector<16x32xf32> to vector<16x8xf32>
    %81 = vector.shape_cast %80 : vector<16x8xf32> to vector<2x8x8xf32>
    %82 = vector.extract_strided_slice %79 {offsets = [0, 8], sizes = [16, 8], strides = [1, 1]} : vector<16x32xf32> to vector<16x8xf32>
    %83 = vector.shape_cast %82 : vector<16x8xf32> to vector<2x8x8xf32>
    %84 = vector.extract_strided_slice %79 {offsets = [0, 16], sizes = [16, 8], strides = [1, 1]} : vector<16x32xf32> to vector<16x8xf32>
    %85 = vector.shape_cast %84 : vector<16x8xf32> to vector<2x8x8xf32>
    %86 = vector.extract_strided_slice %79 {offsets = [0, 24], sizes = [16, 8], strides = [1, 1]} : vector<16x32xf32> to vector<16x8xf32>
    %87 = vector.shape_cast %86 : vector<16x8xf32> to vector<2x8x8xf32>
    %88 = tpu.concatenate %81, %83, %85, %87 in 0 : vector<2x8x8xf32>, vector<2x8x8xf32>, vector<2x8x8xf32>, vector<2x8x8xf32> -> vector<8x8x8xf32>
    %89 = arith.truncf %88 : vector<8x8x8xf32> to vector<8x8x8xbf16>
    "tpu.trace_start"() <{level = 10 : i32, message = "gqd,gkd->gqk"}> : () -> ()
    %cst_27 = arith.constant dense<0.000000e+00> : vector<8x8x8xf32>
    %90 = tpu.matmul %67, %78, %cst_27 {dimension_numbers = #tpu.dot_dimension_numbers<[2], [2], [1], [1], [0, 0, 0, 1, 1, 1], [0], [0]>} : vector<8x8x8xbf16>, vector<8x8x8xbf16>, vector<8x8x8xf32> -> vector<8x8x8xf32>
    "tpu.trace_stop"() : () -> ()
    %cst_28 = arith.constant 0.353553385 : f32
    %91 = vector.broadcast %cst_28 : f32 to vector<8x8x8xf32>
    %92 = arith.mulf %90, %91 : vector<8x8x8xf32>
    %93 = arith.addf %92, %48 : vector<8x8x8xf32>
    %cst_29 = arith.constant dense<0xFF800000> : vector<8x8xf32>
    %94 = vector.multi_reduction <maximumf>, %93, %cst_29 [2] : vector<8x8x8xf32> to vector<8x8xf32>
    %95 = vector.shape_cast %94 : vector<8x8xf32> to vector<8x8x1xf32>
    %96 = vector.broadcast %95 : vector<8x8x1xf32> to vector<8x8x8xf32>
    %97 = arith.subf %93, %96 : vector<8x8x8xf32>
    %98 = math.exp %97 : vector<8x8x8xf32>
    %cst_30 = arith.constant dense<0.000000e+00> : vector<8x8xf32>
    %99 = vector.multi_reduction <add>, %98, %cst_30 [2] : vector<8x8x8xf32> to vector<8x8xf32>
    %100 = vector.shape_cast %99 : vector<8x8xf32> to vector<8x8x1xf32>
    %101 = tpu.reciprocal %100 {approx = true} : vector<8x8x1xf32> -> vector<8x8x1xf32>
    %102 = vector.broadcast %101 : vector<8x8x1xf32> to vector<8x8x8xf32>
    %103 = arith.mulf %98, %102 : vector<8x8x8xf32>
    %104 = arith.truncf %103 : vector<8x8x8xf32> to vector<8x8x8xbf16>
    "tpu.trace_start"() <{level = 10 : i32, message = "gqk,gkd->gqd"}> : () -> ()
    %cst_31 = arith.constant dense<0.000000e+00> : vector<8x8x8xf32>
    %105 = tpu.matmul %104, %89, %cst_31 {dimension_numbers = #tpu.dot_dimension_numbers<[2], [1], [1], [2], [0, 0, 0, 1, 1, 2], [0], [0]>} : vector<8x8x8xbf16>, vector<8x8x8xbf16>, vector<8x8x8xf32> -> vector<8x8x8xf32>
    "tpu.trace_stop"() : () -> ()
    %106 = vector.extract_strided_slice %105 {offsets = [0, 0, 0], sizes = [2, 8, 8], strides = [1, 1, 1]} : vector<8x8x8xf32> to vector<2x8x8xf32>
    %107 = vector.extract_strided_slice %105 {offsets = [2, 0, 0], sizes = [2, 8, 8], strides = [1, 1, 1]} : vector<8x8x8xf32> to vector<2x8x8xf32>
    %108 = vector.extract_strided_slice %105 {offsets = [4, 0, 0], sizes = [2, 8, 8], strides = [1, 1, 1]} : vector<8x8x8xf32> to vector<2x8x8xf32>
    %109 = vector.extract_strided_slice %105 {offsets = [6, 0, 0], sizes = [2, 8, 8], strides = [1, 1, 1]} : vector<8x8x8xf32> to vector<2x8x8xf32>
    %110 = tpu.concatenate %106, %107, %108, %109 in 2 : vector<2x8x8xf32>, vector<2x8x8xf32>, vector<2x8x8xf32>, vector<2x8x8xf32> -> vector<2x8x32xf32>
    %111 = vector.shape_cast %110 : vector<2x8x32xf32> to vector<16x32xf32>
    %112 = arith.truncf %111 : vector<16x32xf32> to vector<16x32xbf16>
    %c0_32 = arith.constant 0 : index
    %c0_33 = arith.constant 0 : index
    %c0_34 = arith.constant 0 : index
    %113 = vector.load %arg9[%c0_32, %c0_33, %c0_34] : memref<2x32x32xbf16, #tpu.memory_space<vmem>>, vector<1x32x32xbf16>
    %114 = vector.shape_cast %113 : vector<1x32x32xbf16> to vector<32x32xbf16>
    %cst_35 = arith.constant dense<0.000000e+00> : vector<16x32xf32>
    %115 = tpu.matmul %112, %114, %cst_35 {dimension_numbers = #tpu.dot_dimension_numbers<[1], [0], [0], [1], [0, 0, 1, 1], [], []>} : vector<16x32xbf16>, vector<32x32xbf16>, vector<16x32xf32> -> vector<16x32xf32>
    %c0_36 = arith.constant 0 : index
    %c0_37 = arith.constant 0 : index
    %c0_38 = arith.constant 0 : index
    %116 = vector.load %arg10[%c0_36, %c0_37, %c0_38] : memref<2x1x32xf32, #tpu.memory_space<vmem>>, vector<1x1x32xf32>
    %117 = vector.shape_cast %116 : vector<1x1x32xf32> to vector<1x32xf32>
    %118 = vector.broadcast %117 : vector<1x32xf32> to vector<16x32xf32>
    %119 = arith.addf %115, %118 : vector<16x32xf32>
    %120 = arith.addf %119, %38 : vector<16x32xf32>
    %c0_39 = arith.constant 0 : index
    %c0_40 = arith.constant 0 : index
    %c0_41 = arith.constant 0 : index
    %121 = vector.load %arg11[%c0_39, %c0_40, %c0_41] : memref<2x1x32xf32, #tpu.memory_space<vmem>>, vector<1x1x32xf32>
    %122 = vector.shape_cast %121 : vector<1x1x32xf32> to vector<1x32xf32>
    %c0_42 = arith.constant 0 : index
    %c0_43 = arith.constant 0 : index
    %c0_44 = arith.constant 0 : index
    %123 = vector.load %arg12[%c0_42, %c0_43, %c0_44] : memref<2x1x32xf32, #tpu.memory_space<vmem>>, vector<1x1x32xf32>
    %124 = vector.shape_cast %123 : vector<1x1x32xf32> to vector<1x32xf32>
    %cst_45 = arith.constant dense<0.000000e+00> : vector<16xf32>
    %125 = vector.multi_reduction <add>, %120, %cst_45 [1] : vector<16x32xf32> to vector<16xf32>
    %126 = vector.shape_cast %125 : vector<16xf32> to vector<16x1xf32>
    %cst_46 = arith.constant 3.200000e+01 : f32
    %127 = vector.broadcast %cst_46 : f32 to vector<16x1xf32>
    %128 = arith.divf %126, %127 : vector<16x1xf32>
    %129 = vector.broadcast %128 : vector<16x1xf32> to vector<16x32xf32>
    %130 = arith.subf %120, %129 : vector<16x32xf32>
    %131 = arith.mulf %130, %130 : vector<16x32xf32>
    %cst_47 = arith.constant dense<0.000000e+00> : vector<16xf32>
    %132 = vector.multi_reduction <add>, %131, %cst_47 [1] : vector<16x32xf32> to vector<16xf32>
    %133 = vector.shape_cast %132 : vector<16xf32> to vector<16x1xf32>
    %cst_48 = arith.constant 3.200000e+01 : f32
    %134 = vector.broadcast %cst_48 : f32 to vector<16x1xf32>
    %135 = arith.divf %133, %134 : vector<16x1xf32>
    %cst_49 = arith.constant 9.99999996E-13 : f32
    %136 = vector.broadcast %cst_49 : f32 to vector<16x1xf32>
    %137 = arith.addf %135, %136 : vector<16x1xf32>
    %138 = math.rsqrt %137 : vector<16x1xf32>
    %139 = vector.broadcast %138 : vector<16x1xf32> to vector<16x32xf32>
    %140 = arith.mulf %130, %139 : vector<16x32xf32>
    %141 = vector.broadcast %122 : vector<1x32xf32> to vector<16x32xf32>
    %142 = arith.mulf %140, %141 : vector<16x32xf32>
    %143 = vector.broadcast %124 : vector<1x32xf32> to vector<16x32xf32>
    %144 = arith.addf %142, %143 : vector<16x32xf32>
    %145 = arith.truncf %144 : vector<16x32xf32> to vector<16x32xbf16>
    %c0_50 = arith.constant 0 : index
    %c0_51 = arith.constant 0 : index
    %c0_52 = arith.constant 0 : index
    %146 = vector.load %arg13[%c0_50, %c0_51, %c0_52] : memref<2x32x64xbf16, #tpu.memory_space<vmem>>, vector<1x32x64xbf16>
    %147 = vector.shape_cast %146 : vector<1x32x64xbf16> to vector<32x64xbf16>
    %cst_53 = arith.constant dense<0.000000e+00> : vector<16x64xf32>
    %148 = tpu.matmul %145, %147, %cst_53 {dimension_numbers = #tpu.dot_dimension_numbers<[1], [0], [0], [1], [0, 0, 1, 1], [], []>} : vector<16x32xbf16>, vector<32x64xbf16>, vector<16x64xf32> -> vector<16x64xf32>
    %c0_54 = arith.constant 0 : index
    %c0_55 = arith.constant 0 : index
    %c0_56 = arith.constant 0 : index
    %149 = vector.load %arg14[%c0_54, %c0_55, %c0_56] : memref<2x1x64xf32, #tpu.memory_space<vmem>>, vector<1x1x64xf32>
    %150 = vector.shape_cast %149 : vector<1x1x64xf32> to vector<1x64xf32>
    %151 = vector.broadcast %150 : vector<1x64xf32> to vector<16x64xf32>
    %152 = arith.addf %148, %151 : vector<16x64xf32>
    %cst_57 = arith.constant 5.000000e-01 : f32
    %153 = vector.broadcast %cst_57 : f32 to vector<16x64xf32>
    %154 = arith.mulf %153, %152 : vector<16x64xf32>
    %cst_58 = arith.constant 4.471500e-02 : f32
    %155 = vector.broadcast %cst_58 : f32 to vector<16x64xf32>
    %156 = arith.mulf %155, %152 : vector<16x64xf32>
    %157 = arith.mulf %156, %152 : vector<16x64xf32>
    %158 = arith.mulf %157, %152 : vector<16x64xf32>
    %159 = arith.addf %152, %158 : vector<16x64xf32>
    %cst_59 = arith.constant 0.797884583 : f32
    %160 = vector.broadcast %cst_59 : f32 to vector<16x64xf32>
    %161 = arith.mulf %160, %159 : vector<16x64xf32>
    %162 = math.tanh %161 : vector<16x64xf32>
    %cst_60 = arith.constant 1.000000e+00 : f32
    %163 = vector.broadcast %cst_60 : f32 to vector<16x64xf32>
    %164 = arith.addf %163, %162 : vector<16x64xf32>
    %165 = arith.mulf %154, %164 : vector<16x64xf32>
    %166 = arith.truncf %165 : vector<16x64xf32> to vector<16x64xbf16>
    %c0_61 = arith.constant 0 : index
    %c0_62 = arith.constant 0 : index
    %c0_63 = arith.constant 0 : index
    %167 = vector.load %arg15[%c0_61, %c0_62, %c0_63] : memref<2x64x32xbf16, #tpu.memory_space<vmem>>, vector<1x64x32xbf16>
    %168 = vector.shape_cast %167 : vector<1x64x32xbf16> to vector<64x32xbf16>
    %cst_64 = arith.constant dense<0.000000e+00> : vector<16x32xf32>
    %169 = tpu.matmul %166, %168, %cst_64 {dimension_numbers = #tpu.dot_dimension_numbers<[1], [0], [0], [1], [0, 0, 1, 1], [], []>} : vector<16x64xbf16>, vector<64x32xbf16>, vector<16x32xf32> -> vector<16x32xf32>
    %c0_65 = arith.constant 0 : index
    %c0_66 = arith.constant 0 : index
    %c0_67 = arith.constant 0 : index
    %170 = vector.load %arg16[%c0_65, %c0_66, %c0_67] : memref<2x1x32xf32, #tpu.memory_space<vmem>>, vector<1x1x32xf32>
    %171 = vector.shape_cast %170 : vector<1x1x32xf32> to vector<1x32xf32>
    %172 = vector.broadcast %171 : vector<1x32xf32> to vector<16x32xf32>
    %173 = arith.addf %169, %172 : vector<16x32xf32>
    %174 = arith.addf %173, %144 : vector<16x32xf32>
    %c0_68 = arith.constant 0 : index
    %c0_69 = arith.constant 0 : index
    %c0_70 = arith.constant 0 : index
    %175 = vector.load %arg17[%c0_68, %c0_69, %c0_70] : memref<2x1x32xf32, #tpu.memory_space<vmem>>, vector<1x1x32xf32>
    %176 = vector.shape_cast %175 : vector<1x1x32xf32> to vector<1x32xf32>
    %c0_71 = arith.constant 0 : index
    %c0_72 = arith.constant 0 : index
    %c0_73 = arith.constant 0 : index
    %177 = vector.load %arg18[%c0_71, %c0_72, %c0_73] : memref<2x1x32xf32, #tpu.memory_space<vmem>>, vector<1x1x32xf32>
    %178 = vector.shape_cast %177 : vector<1x1x32xf32> to vector<1x32xf32>
    %cst_74 = arith.constant dense<0.000000e+00> : vector<16xf32>
    %179 = vector.multi_reduction <add>, %174, %cst_74 [1] : vector<16x32xf32> to vector<16xf32>
    %180 = vector.shape_cast %179 : vector<16xf32> to vector<16x1xf32>
    %cst_75 = arith.constant 3.200000e+01 : f32
    %181 = vector.broadcast %cst_75 : f32 to vector<16x1xf32>
    %182 = arith.divf %180, %181 : vector<16x1xf32>
    %183 = vector.broadcast %182 : vector<16x1xf32> to vector<16x32xf32>
    %184 = arith.subf %174, %183 : vector<16x32xf32>
    %185 = arith.mulf %184, %184 : vector<16x32xf32>
    %cst_76 = arith.constant dense<0.000000e+00> : vector<16xf32>
    %186 = vector.multi_reduction <add>, %185, %cst_76 [1] : vector<16x32xf32> to vector<16xf32>
    %187 = vector.shape_cast %186 : vector<16xf32> to vector<16x1xf32>
    %cst_77 = arith.constant 3.200000e+01 : f32
    %188 = vector.broadcast %cst_77 : f32 to vector<16x1xf32>
    %189 = arith.divf %187, %188 : vector<16x1xf32>
    %cst_78 = arith.constant 9.99999996E-13 : f32
    %190 = vector.broadcast %cst_78 : f32 to vector<16x1xf32>
    %191 = arith.addf %189, %190 : vector<16x1xf32>
    %192 = math.rsqrt %191 : vector<16x1xf32>
    %193 = vector.broadcast %192 : vector<16x1xf32> to vector<16x32xf32>
    %194 = arith.mulf %184, %193 : vector<16x32xf32>
    %195 = vector.broadcast %176 : vector<1x32xf32> to vector<16x32xf32>
    %196 = arith.mulf %194, %195 : vector<16x32xf32>
    %197 = vector.broadcast %178 : vector<1x32xf32> to vector<16x32xf32>
    %198 = arith.addf %196, %197 : vector<16x32xf32>
    %199 = arith.truncf %198 : vector<16x32xf32> to vector<16x32xbf16>
    %c1 = arith.constant 1 : index
    %c0_79 = arith.constant 0 : index
    %c0_80 = arith.constant 0 : index
    %200 = vector.load %arg7[%c1, %c0_79, %c0_80] : memref<2x32x96xbf16, #tpu.memory_space<vmem>>, vector<1x32x96xbf16>
    %201 = vector.shape_cast %200 : vector<1x32x96xbf16> to vector<32x96xbf16>
    %cst_81 = arith.constant dense<0.000000e+00> : vector<16x96xf32>
    %202 = tpu.matmul %199, %201, %cst_81 {dimension_numbers = #tpu.dot_dimension_numbers<[1], [0], [0], [1], [0, 0, 1, 1], [], []>} : vector<16x32xbf16>, vector<32x96xbf16>, vector<16x96xf32> -> vector<16x96xf32>
    %c1_82 = arith.constant 1 : index
    %c0_83 = arith.constant 0 : index
    %c0_84 = arith.constant 0 : index
    %203 = vector.load %arg8[%c1_82, %c0_83, %c0_84] : memref<2x1x96xf32, #tpu.memory_space<vmem>>, vector<1x1x96xf32>
    %204 = vector.shape_cast %203 : vector<1x1x96xf32> to vector<1x96xf32>
    %205 = vector.broadcast %204 : vector<1x96xf32> to vector<16x96xf32>
    %206 = arith.addf %202, %205 : vector<16x96xf32>
    %207 = vector.extract_strided_slice %206 {offsets = [0, 0], sizes = [16, 32], strides = [1, 1]} : vector<16x96xf32> to vector<16x32xf32>
    %208 = vector.extract_strided_slice %207 {offsets = [0, 0], sizes = [16, 8], strides = [1, 1]} : vector<16x32xf32> to vector<16x8xf32>
    %209 = vector.shape_cast %208 : vector<16x8xf32> to vector<2x8x8xf32>
    %210 = vector.extract_strided_slice %207 {offsets = [0, 8], sizes = [16, 8], strides = [1, 1]} : vector<16x32xf32> to vector<16x8xf32>
    %211 = vector.shape_cast %210 : vector<16x8xf32> to vector<2x8x8xf32>
    %212 = vector.extract_strided_slice %207 {offsets = [0, 16], sizes = [16, 8], strides = [1, 1]} : vector<16x32xf32> to vector<16x8xf32>
    %213 = vector.shape_cast %212 : vector<16x8xf32> to vector<2x8x8xf32>
    %214 = vector.extract_strided_slice %207 {offsets = [0, 24], sizes = [16, 8], strides = [1, 1]} : vector<16x32xf32> to vector<16x8xf32>
    %215 = vector.shape_cast %214 : vector<16x8xf32> to vector<2x8x8xf32>
    %216 = tpu.concatenate %209, %211, %213, %215 in 0 : vector<2x8x8xf32>, vector<2x8x8xf32>, vector<2x8x8xf32>, vector<2x8x8xf32> -> vector<8x8x8xf32>
    %217 = arith.truncf %216 : vector<8x8x8xf32> to vector<8x8x8xbf16>
    %218 = vector.extract_strided_slice %206 {offsets = [0, 32], sizes = [16, 32], strides = [1, 1]} : vector<16x96xf32> to vector<16x32xf32>
    %219 = vector.extract_strided_slice %218 {offsets = [0, 0], sizes = [16, 8], strides = [1, 1]} : vector<16x32xf32> to vector<16x8xf32>
    %220 = vector.shape_cast %219 : vector<16x8xf32> to vector<2x8x8xf32>
    %221 = vector.extract_strided_slice %218 {offsets = [0, 8], sizes = [16, 8], strides = [1, 1]} : vector<16x32xf32> to vector<16x8xf32>
    %222 = vector.shape_cast %221 : vector<16x8xf32> to vector<2x8x8xf32>
    %223 = vector.extract_strided_slice %218 {offsets = [0, 16], sizes = [16, 8], strides = [1, 1]} : vector<16x32xf32> to vector<16x8xf32>
    %224 = vector.shape_cast %223 : vector<16x8xf32> to vector<2x8x8xf32>
    %225 = vector.extract_strided_slice %218 {offsets = [0, 24], sizes = [16, 8], strides = [1, 1]} : vector<16x32xf32> to vector<16x8xf32>
    %226 = vector.shape_cast %225 : vector<16x8xf32> to vector<2x8x8xf32>
    %227 = tpu.concatenate %220, %222, %224, %226 in 0 : vector<2x8x8xf32>, vector<2x8x8xf32>, vector<2x8x8xf32>, vector<2x8x8xf32> -> vector<8x8x8xf32>
    %228 = arith.truncf %227 : vector<8x8x8xf32> to vector<8x8x8xbf16>
    %229 = vector.extract_strided_slice %206 {offsets = [0, 64], sizes = [16, 32], strides = [1, 1]} : vector<16x96xf32> to vector<16x32xf32>
    %230 = vector.extract_strided_slice %229 {offsets = [0, 0], sizes = [16, 8], strides = [1, 1]} : vector<16x32xf32> to vector<16x8xf32>
    %231 = vector.shape_cast %230 : vector<16x8xf32> to vector<2x8x8xf32>
    %232 = vector.extract_strided_slice %229 {offsets = [0, 8], sizes = [16, 8], strides = [1, 1]} : vector<16x32xf32> to vector<16x8xf32>
    %233 = vector.shape_cast %232 : vector<16x8xf32> to vector<2x8x8xf32>
    %234 = vector.extract_strided_slice %229 {offsets = [0, 16], sizes = [16, 8], strides = [1, 1]} : vector<16x32xf32> to vector<16x8xf32>
    %235 = vector.shape_cast %234 : vector<16x8xf32> to vector<2x8x8xf32>
    %236 = vector.extract_strided_slice %229 {offsets = [0, 24], sizes = [16, 8], strides = [1, 1]} : vector<16x32xf32> to vector<16x8xf32>
    %237 = vector.shape_cast %236 : vector<16x8xf32> to vector<2x8x8xf32>
    %238 = tpu.concatenate %231, %233, %235, %237 in 0 : vector<2x8x8xf32>, vector<2x8x8xf32>, vector<2x8x8xf32>, vector<2x8x8xf32> -> vector<8x8x8xf32>
    %239 = arith.truncf %238 : vector<8x8x8xf32> to vector<8x8x8xbf16>
    "tpu.trace_start"() <{level = 10 : i32, message = "gqd,gkd->gqk"}> : () -> ()
    %cst_85 = arith.constant dense<0.000000e+00> : vector<8x8x8xf32>
    %240 = tpu.matmul %217, %228, %cst_85 {dimension_numbers = #tpu.dot_dimension_numbers<[2], [2], [1], [1], [0, 0, 0, 1, 1, 1], [0], [0]>} : vector<8x8x8xbf16>, vector<8x8x8xbf16>, vector<8x8x8xf32> -> vector<8x8x8xf32>
    "tpu.trace_stop"() : () -> ()
    %cst_86 = arith.constant 0.353553385 : f32
    %241 = vector.broadcast %cst_86 : f32 to vector<8x8x8xf32>
    %242 = arith.mulf %240, %241 : vector<8x8x8xf32>
    %243 = arith.addf %242, %48 : vector<8x8x8xf32>
    %cst_87 = arith.constant dense<0xFF800000> : vector<8x8xf32>
    %244 = vector.multi_reduction <maximumf>, %243, %cst_87 [2] : vector<8x8x8xf32> to vector<8x8xf32>
    %245 = vector.shape_cast %244 : vector<8x8xf32> to vector<8x8x1xf32>
    %246 = vector.broadcast %245 : vector<8x8x1xf32> to vector<8x8x8xf32>
    %247 = arith.subf %243, %246 : vector<8x8x8xf32>
    %248 = math.exp %247 : vector<8x8x8xf32>
    %cst_88 = arith.constant dense<0.000000e+00> : vector<8x8xf32>
    %249 = vector.multi_reduction <add>, %248, %cst_88 [2] : vector<8x8x8xf32> to vector<8x8xf32>
    %250 = vector.shape_cast %249 : vector<8x8xf32> to vector<8x8x1xf32>
    %251 = tpu.reciprocal %250 {approx = true} : vector<8x8x1xf32> -> vector<8x8x1xf32>
    %252 = vector.broadcast %251 : vector<8x8x1xf32> to vector<8x8x8xf32>
    %253 = arith.mulf %248, %252 : vector<8x8x8xf32>
    %254 = arith.truncf %253 : vector<8x8x8xf32> to vector<8x8x8xbf16>
    "tpu.trace_start"() <{level = 10 : i32, message = "gqk,gkd->gqd"}> : () -> ()
    %cst_89 = arith.constant dense<0.000000e+00> : vector<8x8x8xf32>
    %255 = tpu.matmul %254, %239, %cst_89 {dimension_numbers = #tpu.dot_dimension_numbers<[2], [1], [1], [2], [0, 0, 0, 1, 1, 2], [0], [0]>} : vector<8x8x8xbf16>, vector<8x8x8xbf16>, vector<8x8x8xf32> -> vector<8x8x8xf32>
    "tpu.trace_stop"() : () -> ()
    %256 = vector.extract_strided_slice %255 {offsets = [0, 0, 0], sizes = [2, 8, 8], strides = [1, 1, 1]} : vector<8x8x8xf32> to vector<2x8x8xf32>
    %257 = vector.extract_strided_slice %255 {offsets = [2, 0, 0], sizes = [2, 8, 8], strides = [1, 1, 1]} : vector<8x8x8xf32> to vector<2x8x8xf32>
    %258 = vector.extract_strided_slice %255 {offsets = [4, 0, 0], sizes = [2, 8, 8], strides = [1, 1, 1]} : vector<8x8x8xf32> to vector<2x8x8xf32>
    %259 = vector.extract_strided_slice %255 {offsets = [6, 0, 0], sizes = [2, 8, 8], strides = [1, 1, 1]} : vector<8x8x8xf32> to vector<2x8x8xf32>
    %260 = tpu.concatenate %256, %257, %258, %259 in 2 : vector<2x8x8xf32>, vector<2x8x8xf32>, vector<2x8x8xf32>, vector<2x8x8xf32> -> vector<2x8x32xf32>
    %261 = vector.shape_cast %260 : vector<2x8x32xf32> to vector<16x32xf32>
    %262 = arith.truncf %261 : vector<16x32xf32> to vector<16x32xbf16>
    %c1_90 = arith.constant 1 : index
    %c0_91 = arith.constant 0 : index
    %c0_92 = arith.constant 0 : index
    %263 = vector.load %arg9[%c1_90, %c0_91, %c0_92] : memref<2x32x32xbf16, #tpu.memory_space<vmem>>, vector<1x32x32xbf16>
    %264 = vector.shape_cast %263 : vector<1x32x32xbf16> to vector<32x32xbf16>
    %cst_93 = arith.constant dense<0.000000e+00> : vector<16x32xf32>
    %265 = tpu.matmul %262, %264, %cst_93 {dimension_numbers = #tpu.dot_dimension_numbers<[1], [0], [0], [1], [0, 0, 1, 1], [], []>} : vector<16x32xbf16>, vector<32x32xbf16>, vector<16x32xf32> -> vector<16x32xf32>
    %c1_94 = arith.constant 1 : index
    %c0_95 = arith.constant 0 : index
    %c0_96 = arith.constant 0 : index
    %266 = vector.load %arg10[%c1_94, %c0_95, %c0_96] : memref<2x1x32xf32, #tpu.memory_space<vmem>>, vector<1x1x32xf32>
    %267 = vector.shape_cast %266 : vector<1x1x32xf32> to vector<1x32xf32>
    %268 = vector.broadcast %267 : vector<1x32xf32> to vector<16x32xf32>
    %269 = arith.addf %265, %268 : vector<16x32xf32>
    %270 = arith.addf %269, %198 : vector<16x32xf32>
    %c1_97 = arith.constant 1 : index
    %c0_98 = arith.constant 0 : index
    %c0_99 = arith.constant 0 : index
    %271 = vector.load %arg11[%c1_97, %c0_98, %c0_99] : memref<2x1x32xf32, #tpu.memory_space<vmem>>, vector<1x1x32xf32>
    %272 = vector.shape_cast %271 : vector<1x1x32xf32> to vector<1x32xf32>
    %c1_100 = arith.constant 1 : index
    %c0_101 = arith.constant 0 : index
    %c0_102 = arith.constant 0 : index
    %273 = vector.load %arg12[%c1_100, %c0_101, %c0_102] : memref<2x1x32xf32, #tpu.memory_space<vmem>>, vector<1x1x32xf32>
    %274 = vector.shape_cast %273 : vector<1x1x32xf32> to vector<1x32xf32>
    %cst_103 = arith.constant dense<0.000000e+00> : vector<16xf32>
    %275 = vector.multi_reduction <add>, %270, %cst_103 [1] : vector<16x32xf32> to vector<16xf32>
    %276 = vector.shape_cast %275 : vector<16xf32> to vector<16x1xf32>
    %cst_104 = arith.constant 3.200000e+01 : f32
    %277 = vector.broadcast %cst_104 : f32 to vector<16x1xf32>
    %278 = arith.divf %276, %277 : vector<16x1xf32>
    %279 = vector.broadcast %278 : vector<16x1xf32> to vector<16x32xf32>
    %280 = arith.subf %270, %279 : vector<16x32xf32>
    %281 = arith.mulf %280, %280 : vector<16x32xf32>
    %cst_105 = arith.constant dense<0.000000e+00> : vector<16xf32>
    %282 = vector.multi_reduction <add>, %281, %cst_105 [1] : vector<16x32xf32> to vector<16xf32>
    %283 = vector.shape_cast %282 : vector<16xf32> to vector<16x1xf32>
    %cst_106 = arith.constant 3.200000e+01 : f32
    %284 = vector.broadcast %cst_106 : f32 to vector<16x1xf32>
    %285 = arith.divf %283, %284 : vector<16x1xf32>
    %cst_107 = arith.constant 9.99999996E-13 : f32
    %286 = vector.broadcast %cst_107 : f32 to vector<16x1xf32>
    %287 = arith.addf %285, %286 : vector<16x1xf32>
    %288 = math.rsqrt %287 : vector<16x1xf32>
    %289 = vector.broadcast %288 : vector<16x1xf32> to vector<16x32xf32>
    %290 = arith.mulf %280, %289 : vector<16x32xf32>
    %291 = vector.broadcast %272 : vector<1x32xf32> to vector<16x32xf32>
    %292 = arith.mulf %290, %291 : vector<16x32xf32>
    %293 = vector.broadcast %274 : vector<1x32xf32> to vector<16x32xf32>
    %294 = arith.addf %292, %293 : vector<16x32xf32>
    %295 = arith.truncf %294 : vector<16x32xf32> to vector<16x32xbf16>
    %c1_108 = arith.constant 1 : index
    %c0_109 = arith.constant 0 : index
    %c0_110 = arith.constant 0 : index
    %296 = vector.load %arg13[%c1_108, %c0_109, %c0_110] : memref<2x32x64xbf16, #tpu.memory_space<vmem>>, vector<1x32x64xbf16>
    %297 = vector.shape_cast %296 : vector<1x32x64xbf16> to vector<32x64xbf16>
    %cst_111 = arith.constant dense<0.000000e+00> : vector<16x64xf32>
    %298 = tpu.matmul %295, %297, %cst_111 {dimension_numbers = #tpu.dot_dimension_numbers<[1], [0], [0], [1], [0, 0, 1, 1], [], []>} : vector<16x32xbf16>, vector<32x64xbf16>, vector<16x64xf32> -> vector<16x64xf32>
    %c1_112 = arith.constant 1 : index
    %c0_113 = arith.constant 0 : index
    %c0_114 = arith.constant 0 : index
    %299 = vector.load %arg14[%c1_112, %c0_113, %c0_114] : memref<2x1x64xf32, #tpu.memory_space<vmem>>, vector<1x1x64xf32>
    %300 = vector.shape_cast %299 : vector<1x1x64xf32> to vector<1x64xf32>
    %301 = vector.broadcast %300 : vector<1x64xf32> to vector<16x64xf32>
    %302 = arith.addf %298, %301 : vector<16x64xf32>
    %cst_115 = arith.constant 5.000000e-01 : f32
    %303 = vector.broadcast %cst_115 : f32 to vector<16x64xf32>
    %304 = arith.mulf %303, %302 : vector<16x64xf32>
    %cst_116 = arith.constant 4.471500e-02 : f32
    %305 = vector.broadcast %cst_116 : f32 to vector<16x64xf32>
    %306 = arith.mulf %305, %302 : vector<16x64xf32>
    %307 = arith.mulf %306, %302 : vector<16x64xf32>
    %308 = arith.mulf %307, %302 : vector<16x64xf32>
    %309 = arith.addf %302, %308 : vector<16x64xf32>
    %cst_117 = arith.constant 0.797884583 : f32
    %310 = vector.broadcast %cst_117 : f32 to vector<16x64xf32>
    %311 = arith.mulf %310, %309 : vector<16x64xf32>
    %312 = math.tanh %311 : vector<16x64xf32>
    %cst_118 = arith.constant 1.000000e+00 : f32
    %313 = vector.broadcast %cst_118 : f32 to vector<16x64xf32>
    %314 = arith.addf %313, %312 : vector<16x64xf32>
    %315 = arith.mulf %304, %314 : vector<16x64xf32>
    %316 = arith.truncf %315 : vector<16x64xf32> to vector<16x64xbf16>
    %c1_119 = arith.constant 1 : index
    %c0_120 = arith.constant 0 : index
    %c0_121 = arith.constant 0 : index
    %317 = vector.load %arg15[%c1_119, %c0_120, %c0_121] : memref<2x64x32xbf16, #tpu.memory_space<vmem>>, vector<1x64x32xbf16>
    %318 = vector.shape_cast %317 : vector<1x64x32xbf16> to vector<64x32xbf16>
    %cst_122 = arith.constant dense<0.000000e+00> : vector<16x32xf32>
    %319 = tpu.matmul %316, %318, %cst_122 {dimension_numbers = #tpu.dot_dimension_numbers<[1], [0], [0], [1], [0, 0, 1, 1], [], []>} : vector<16x64xbf16>, vector<64x32xbf16>, vector<16x32xf32> -> vector<16x32xf32>
    %c1_123 = arith.constant 1 : index
    %c0_124 = arith.constant 0 : index
    %c0_125 = arith.constant 0 : index
    %320 = vector.load %arg16[%c1_123, %c0_124, %c0_125] : memref<2x1x32xf32, #tpu.memory_space<vmem>>, vector<1x1x32xf32>
    %321 = vector.shape_cast %320 : vector<1x1x32xf32> to vector<1x32xf32>
    %322 = vector.broadcast %321 : vector<1x32xf32> to vector<16x32xf32>
    %323 = arith.addf %319, %322 : vector<16x32xf32>
    %324 = arith.addf %323, %294 : vector<16x32xf32>
    %c1_126 = arith.constant 1 : index
    %c0_127 = arith.constant 0 : index
    %c0_128 = arith.constant 0 : index
    %325 = vector.load %arg17[%c1_126, %c0_127, %c0_128] : memref<2x1x32xf32, #tpu.memory_space<vmem>>, vector<1x1x32xf32>
    %326 = vector.shape_cast %325 : vector<1x1x32xf32> to vector<1x32xf32>
    %c1_129 = arith.constant 1 : index
    %c0_130 = arith.constant 0 : index
    %c0_131 = arith.constant 0 : index
    %327 = vector.load %arg18[%c1_129, %c0_130, %c0_131] : memref<2x1x32xf32, #tpu.memory_space<vmem>>, vector<1x1x32xf32>
    %328 = vector.shape_cast %327 : vector<1x1x32xf32> to vector<1x32xf32>
    %cst_132 = arith.constant dense<0.000000e+00> : vector<16xf32>
    %329 = vector.multi_reduction <add>, %324, %cst_132 [1] : vector<16x32xf32> to vector<16xf32>
    %330 = vector.shape_cast %329 : vector<16xf32> to vector<16x1xf32>
    %cst_133 = arith.constant 3.200000e+01 : f32
    %331 = vector.broadcast %cst_133 : f32 to vector<16x1xf32>
    %332 = arith.divf %330, %331 : vector<16x1xf32>
    %333 = vector.broadcast %332 : vector<16x1xf32> to vector<16x32xf32>
    %334 = arith.subf %324, %333 : vector<16x32xf32>
    %335 = arith.mulf %334, %334 : vector<16x32xf32>
    %cst_134 = arith.constant dense<0.000000e+00> : vector<16xf32>
    %336 = vector.multi_reduction <add>, %335, %cst_134 [1] : vector<16x32xf32> to vector<16xf32>
    %337 = vector.shape_cast %336 : vector<16xf32> to vector<16x1xf32>
    %cst_135 = arith.constant 3.200000e+01 : f32
    %338 = vector.broadcast %cst_135 : f32 to vector<16x1xf32>
    %339 = arith.divf %337, %338 : vector<16x1xf32>
    %cst_136 = arith.constant 9.99999996E-13 : f32
    %340 = vector.broadcast %cst_136 : f32 to vector<16x1xf32>
    %341 = arith.addf %339, %340 : vector<16x1xf32>
    %342 = math.rsqrt %341 : vector<16x1xf32>
    %343 = vector.broadcast %342 : vector<16x1xf32> to vector<16x32xf32>
    %344 = arith.mulf %334, %343 : vector<16x32xf32>
    %345 = vector.broadcast %326 : vector<1x32xf32> to vector<16x32xf32>
    %346 = arith.mulf %344, %345 : vector<16x32xf32>
    %347 = vector.broadcast %328 : vector<1x32xf32> to vector<16x32xf32>
    %348 = arith.addf %346, %347 : vector<16x32xf32>
    %349 = vector.extract_strided_slice %348 {offsets = [0, 0], sizes = [1, 32], strides = [1, 1]} : vector<16x32xf32> to vector<1x32xf32>
    %350 = vector.extract_strided_slice %348 {offsets = [8, 0], sizes = [1, 32], strides = [1, 1]} : vector<16x32xf32> to vector<1x32xf32>
    %351 = tpu.concatenate %349, %350 in 0 : vector<1x32xf32>, vector<1x32xf32> -> vector<2x32xf32>
    %352 = arith.truncf %351 : vector<2x32xf32> to vector<2x32xbf16>
    %c0_137 = arith.constant 0 : index
    %c0_138 = arith.constant 0 : index
    %353 = vector.load %arg19[%c0_137, %c0_138] : memref<32x32xbf16, #tpu.memory_space<vmem>>, vector<32x32xbf16>
    %cst_139 = arith.constant dense<0.000000e+00> : vector<2x32xf32>
    %354 = tpu.matmul %352, %353, %cst_139 {dimension_numbers = #tpu.dot_dimension_numbers<[1], [0], [0], [1], [0, 0, 1, 1], [], []>} : vector<2x32xbf16>, vector<32x32xbf16>, vector<2x32xf32> -> vector<2x32xf32>
    %c0_140 = arith.constant 0 : index
    %c0_141 = arith.constant 0 : index
    %355 = vector.load %arg20[%c0_140, %c0_141] : memref<1x32xf32, #tpu.memory_space<vmem>>, vector<1x32xf32>
    %356 = vector.broadcast %355 : vector<1x32xf32> to vector<2x32xf32>
    %357 = arith.addf %354, %356 : vector<2x32xf32>
    %358 = math.tanh %357 : vector<2x32xf32>
    %359 = arith.truncf %358 : vector<2x32xf32> to vector<2x32xbf16>
    %c0_142 = arith.constant 0 : index
    %c0_143 = arith.constant 0 : index
    %360 = vector.load %arg21[%c0_142, %c0_143] : memref<32x128xbf16, #tpu.memory_space<vmem>>, vector<32x128xbf16>
    %cst_144 = arith.constant dense<0.000000e+00> : vector<2x128xf32>
    %361 = tpu.matmul %359, %360, %cst_144 {dimension_numbers = #tpu.dot_dimension_numbers<[1], [0], [0], [1], [0, 0, 1, 1], [], []>} : vector<2x32xbf16>, vector<32x128xbf16>, vector<2x128xf32> -> vector<2x128xf32>
    %c0_145 = arith.constant 0 : index
    %c0_146 = arith.constant 0 : index
    %362 = vector.load %arg22[%c0_145, %c0_146] : memref<1x128xf32, #tpu.memory_space<vmem>>, vector<1x128xf32>
    %363 = vector.broadcast %362 : vector<1x128xf32> to vector<2x128xf32>
    %364 = arith.addf %361, %363 : vector<2x128xf32>
    %c0_147 = arith.constant 0 : index
    %c0_148 = arith.constant 0 : index
    %365 = vector.load %arg23[%c0_147, %c0_148] : memref<2x128xf32, #tpu.memory_space<vmem>>, vector<2x128xf32>
    tpu.vector_store %arg23[%c0_147, %c0_148], %364 {strides = array<i32>} : memref<2x128xf32, #tpu.memory_space<vmem>>, vector<2x128xf32>,
    return
  }
}

</mosaic_0001>

<llo_original>
// kernel: bert_paired_classifier_forward.1
$region0: #{bert_paired_classifier_forward.1}
  #allocation0 [shape = 'u32[]', space=smem, size = 0x4, offset = 0x4, fixed_abs, tag = 'smem constant byte address 0x4 - core index']
  #allocation1 [shape = 'u32[144,128]{1,0:T(1,128)}', space=vmem, size = 0x12000, scoped, tag = 'internal scratch']
  %s0 = inlined_call_operand.vmem [shape: s32[16,1], index: 0, kind: input, shape index: {}]
  %s1 = inlined_call_operand.vmem [shape: s32[2,8], index: 1, kind: input, shape index: {}]
  %s2 = inlined_call_operand.vmem [shape: f32[32,32], index: 2, kind: input, shape index: {}]
  %s3 = inlined_call_operand.hbm [shape: f32[16,32], index: 3, kind: input, shape index: {}]
  %s4 = inlined_call_operand.vmem [shape: f32[2,32], index: 4, kind: input, shape index: {}]
  %s5 = inlined_call_operand.vmem [shape: f32[1,32], index: 5, kind: input, shape index: {}]
  %s6 = inlined_call_operand.hbm [shape: f32[1,32], index: 6, kind: input, shape index: {}]
  %s7 = inlined_call_operand.vmem [shape: bf16[2,32,96], index: 7, kind: input, shape index: {}]
  %s8 = inlined_call_operand.hbm [shape: f32[2,1,96], index: 8, kind: input, shape index: {}]
  %s9 = inlined_call_operand.vmem [shape: bf16[2,32,32], index: 9, kind: input, shape index: {}]
  %s10 = inlined_call_operand.hbm [shape: f32[2,1,32], index: 10, kind: input, shape index: {}]
  %s11 = inlined_call_operand.hbm [shape: f32[2,1,32], index: 11, kind: input, shape index: {}]
  %s12 = inlined_call_operand.hbm [shape: f32[2,1,32], index: 12, kind: input, shape index: {}]
  %s13 = inlined_call_operand.vmem [shape: bf16[2,32,64], index: 13, kind: input, shape index: {}]
  %s14 = inlined_call_operand.hbm [shape: f32[2,1,64], index: 14, kind: input, shape index: {}]
  %s15 = inlined_call_operand.vmem [shape: bf16[2,64,32], index: 15, kind: input, shape index: {}]
  %s16 = inlined_call_operand.hbm [shape: f32[2,1,32], index: 16, kind: input, shape index: {}]
  %s17 = inlined_call_operand.hbm [shape: f32[2,1,32], index: 17, kind: input, shape index: {}]
  %s18 = inlined_call_operand.hbm [shape: f32[2,1,32], index: 18, kind: input, shape index: {}]
  %s19 = inlined_call_operand.hbm [shape: bf16[32,32], index: 19, kind: input, shape index: {}]
  %s20 = inlined_call_operand.hbm [shape: f32[1,32], index: 20, kind: input, shape index: {}]
  %s21 = inlined_call_operand.hbm [shape: bf16[32,128], index: 21, kind: input, shape index: {}]
  %s22 = inlined_call_operand.hbm [shape: f32[1,128], index: 22, kind: input, shape index: {}]
  %s23 = inlined_call_operand.hbm [shape: f32[2,128], index: 23, kind: output, shape index: {}]
  %s24 = sld [smem:[#allocation0]]
  $region158: #{bert_paired_classifier_forward.1} parent=0
    _
  %s26 = ssub.s32 1, %s24
  %s27 = scalar_select 0, %s26, %s24
  $region1: #{bert_paired_classifier_forward.1} parent=0
    #allocation2 [shape = 'u8[8192]{0}', space=vmem, size = 0x2000, scoped, tag = 'input window, operand 3, single buffered']
    #allocation3 [shape = 's32[1]{0}', space=sflag, size = 0x4, scoped, tag = 'scoped memory for bert_paired_classifier_forward.1']
    #allocation4 [shape = 's32[1]{0}', space=sflag, size = 0x4, scoped, tag = 'scoped memory for bert_paired_classifier_forward.1']
    #allocation5 [shape = 'u8[512]{0}', space=vmem, size = 0x400, scoped, tag = 'input window, operand 6, single buffered']
    #allocation6 [shape = 's32[1]{0}', space=sflag, size = 0x4, scoped, tag = 'scoped memory for bert_paired_classifier_forward.1']
    #allocation7 [shape = 'u8[1024]{0}', space=vmem, size = 0x400, scoped, tag = 'input window, operand 8, single buffered']
    #allocation8 [shape = 'u8[1024]{0}', space=vmem, size = 0x400, scoped, tag = 'input window, operand 10, single buffered']
    #allocation9 [shape = 's32[1]{0}', space=sflag, size = 0x4, scoped, tag = 'scoped memory for bert_paired_classifier_forward.1']
    #allocation10 [shape = 'u8[1024]{0}', space=vmem, size = 0x400, scoped, tag = 'input window, operand 11, single buffered']
    #allocation11 [shape = 'u8[1024]{0}', space=vmem, size = 0x400, scoped, tag = 'input window, operand 12, single buffered']
    #allocation12 [shape = 's32[1]{0}', space=sflag, size = 0x4, scoped, tag = 'scoped memory for bert_paired_classifier_forward.1']
    #allocation13 [shape = 'u8[1024]{0}', space=vmem, size = 0x400, scoped, tag = 'input window, operand 14, single buffered']
    #allocation14 [shape = 'u8[1024]{0}', space=vmem, size = 0x400, scoped, tag = 'input window, operand 16, single buffered']
    #allocation15 [shape = 's32[1]{0}', space=sflag, size = 0x4, scoped, tag = 'scoped memory for bert_paired_classifier_forward.1']
    #allocation16 [shape = 'u8[1024]{0}', space=vmem, size = 0x400, scoped, tag = 'input window, operand 17, single buffered']
    #allocation17 [shape = 'u8[1024]{0}', space=vmem, size = 0x400, scoped, tag = 'input window, operand 18, single buffered']
    #allocation18 [shape = 's32[1]{0}', space=sflag, size = 0x4, scoped, tag = 'scoped memory for bert_paired_classifier_forward.1']
    #allocation19 [shape = 'u8[8192]{0}', space=vmem, size = 0x2000, scoped, tag = 'input window, operand 19, single buffered']
    #allocation20 [shape = 'u8[512]{0}', space=vmem, size = 0x400, scoped, tag = 'input window, operand 20, single buffered']
    #allocation21 [shape = 's32[1]{0}', space=sflag, size = 0x4, scoped, tag = 'scoped memory for bert_paired_classifier_forward.1']
    #allocation22 [shape = 'u8[8192]{0}', space=vmem, size = 0x2000, scoped, tag = 'input window, operand 21, single buffered']
    #allocation23 [shape = 'u8[512]{0}', space=vmem, size = 0x400, scoped, tag = 'input window, operand 22, single buffered']
    #allocation24 [shape = 's32[1]{0}', space=sflag, size = 0x4, scoped, tag = 'scoped memory for bert_paired_classifier_forward.1']
    #allocation25 [shape = 'u8[1024]{0}', space=vmem, size = 0x400, scoped, tag = 'output window, operand 0, single buffered']
    %28 = vsyncpa [#allocation3], 0
    %29 = vsyncpa [#allocation6], 0
    %30 = vsyncpa [#allocation9], 0
    %31 = vsyncpa [#allocation12], 0
    %32 = vsyncpa [#allocation15], 0
    %33 = vsyncpa [#allocation18], 0
    %34 = vsyncpa [#allocation21], 0
    %35 = vsyncpa [#allocation24], 0
    %36 = vsyncpa [#allocation4], 0
    // Predicated region
    $region2: #{bert_paired_classifier_forward.1} parent=1 // pred_check
      _
    $region3: #{bert_paired_classifier_forward.1} parent=1 // pred_check_branch
      %38 = sbr.rel (0) target = $region5
    $region4: #{bert_paired_classifier_forward.1} parent=1 // pred_region
      _
    $region5: #{bert_paired_classifier_forward.1} parent=1 // pred_fallthru
      _
    // Predicated region
    $region6: #{bert_paired_classifier_forward.1} parent=1 // pred_check
      _
    $region7: #{bert_paired_classifier_forward.1} parent=1 // pred_check_branch
      %40 = sbr.rel (0) target = $region9
    $region8: #{bert_paired_classifier_forward.1} parent=1 // pred_region
      _
    $region9: #{bert_paired_classifier_forward.1} parent=1 // pred_fallthru
      _
    // Predicated region
    $region10: #{bert_paired_classifier_forward.1} parent=1 // pred_check
      _
    $region11: #{bert_paired_classifier_forward.1} parent=1 // pred_check_branch
      %42 = sbr.rel (0) target = $region13
    $region12: #{bert_paired_classifier_forward.1} parent=1 // pred_region
      _
    $region13: #{bert_paired_classifier_forward.1} parent=1 // pred_fallthru
      _
    // Predicated region
    $region14: #{bert_paired_classifier_forward.1} parent=1 // pred_check
      _
    $region15: #{bert_paired_classifier_forward.1} parent=1 // pred_check_branch
      %44 = sbr.rel (0) target = $region17
    $region16: #{bert_paired_classifier_forward.1} parent=1 // pred_region
      %s46 = ssub.s32 256, 256
      %47 = vsyncadd [#allocation3], %s46
      %s48 = sshll.u32 [#allocation2], 4
      %s49 = int_to_ptr.vmem [resolvable:$true] %s48
      %54 = dma.hbm_to_vmem [thread:$0]  %s3, 256, %s49, [#allocation3], 128, 128, 8
    $region17: #{bert_paired_classifier_forward.1} parent=1 // pred_fallthru
      _
    // Predicated region
    $region18: #{bert_paired_classifier_forward.1} parent=1 // pred_check
      _
    $region19: #{bert_paired_classifier_forward.1} parent=1 // pred_check_branch
      %56 = sbr.rel (0) target = $region21
    $region20: #{bert_paired_classifier_forward.1} parent=1 // pred_region
      _
    $region21: #{bert_paired_classifier_forward.1} parent=1 // pred_fallthru
      _
    // Predicated region
    $region22: #{bert_paired_classifier_forward.1} parent=1 // pred_check
      _
    $region23: #{bert_paired_classifier_forward.1} parent=1 // pred_check_branch
      %58 = sbr.rel (0) target = $region25
    $region24: #{bert_paired_classifier_forward.1} parent=1 // pred_region
      _
    $region25: #{bert_paired_classifier_forward.1} parent=1 // pred_fallthru
      _
    // Predicated region
    $region26: #{bert_paired_classifier_forward.1} parent=1 // pred_check
      _
    $region27: #{bert_paired_classifier_forward.1} parent=1 // pred_check_branch
      %60 = sbr.rel (0) target = $region29
    $region28: #{bert_paired_classifier_forward.1} parent=1 // pred_region
      %s62 = ssub.s32 16, 16
      %63 = vsyncadd [#allocation6], %s62
      %s65 = sshll.u32 [#allocation5], 4
      %s66 = int_to_ptr.vmem [resolvable:$true] %s65
      %68 = dma.hbm_to_vmem [thread:$0]  %s6, 16, %s66, [#allocation6]
    $region29: #{bert_paired_classifier_forward.1} parent=1 // pred_fallthru
      _
    // Predicated region
    $region30: #{bert_paired_classifier_forward.1} parent=1 // pred_check
      _
    $region31: #{bert_paired_classifier_forward.1} parent=1 // pred_check_branch
      %70 = sbr.rel (0) target = $region33
    $region32: #{bert_paired_classifier_forward.1} parent=1 // pred_region
      _
    $region33: #{bert_paired_classifier_forward.1} parent=1 // pred_fallthru
      _
    // Predicated region
    $region34: #{bert_paired_classifier_forward.1} parent=1 // pred_check
      _
    $region35: #{bert_paired_classifier_forward.1} parent=1 // pred_check_branch
      %72 = sbr.rel (0) target = $region37
    $region36: #{bert_paired_classifier_forward.1} parent=1 // pred_region
      %s74 = ssub.s32 32, 32
      %75 = vsyncadd [#allocation6], %s74
      %s76 = sshll.u32 [#allocation7], 4
      %s77 = int_to_ptr.vmem [resolvable:$true] %s76
      %82 = dma.hbm_to_vmem [thread:$0]  %s8, 32, %s77, [#allocation6], 16, 16, 1
    $region37: #{bert_paired_classifier_forward.1} parent=1 // pred_fallthru
      _
    // Predicated region
    $region38: #{bert_paired_classifier_forward.1} parent=1 // pred_check
      _
    $region39: #{bert_paired_classifier_forward.1} parent=1 // pred_check_branch
      %84 = sbr.rel (0) target = $region41
    $region40: #{bert_paired_classifier_forward.1} parent=1 // pred_region
      _
    $region41: #{bert_paired_classifier_forward.1} parent=1 // pred_fallthru
      _
    // Predicated region
    $region42: #{bert_paired_classifier_forward.1} parent=1 // pred_check
      _
    $region43: #{bert_paired_classifier_forward.1} parent=1 // pred_check_branch
      %86 = sbr.rel (0) target = $region45
    $region44: #{bert_paired_classifier_forward.1} parent=1 // pred_region
      %s88 = ssub.s32 32, 32
      %89 = vsyncadd [#allocation9], %s88
      %s90 = sshll.u32 [#allocation8], 4
      %s91 = int_to_ptr.vmem [resolvable:$true] %s90
      %96 = dma.hbm_to_vmem [thread:$0]  %s10, 32, %s91, [#allocation9], 16, 16, 1
    $region45: #{bert_paired_classifier_forward.1} parent=1 // pred_fallthru
      _
    // Predicated region
    $region46: #{bert_paired_classifier_forward.1} parent=1 // pred_check
      _
    $region47: #{bert_paired_classifier_forward.1} parent=1 // pred_check_branch
      %98 = sbr.rel (0) target = $region49
    $region48: #{bert_paired_classifier_forward.1} parent=1 // pred_region
      %s100 = ssub.s32 32, 32
      %101 = vsyncadd [#allocation9], %s100
      %s102 = sshll.u32 [#allocation10], 4
      %s103 = int_to_ptr.vmem [resolvable:$true] %s102
      %108 = dma.hbm_to_vmem [thread:$0]  %s11, 32, %s103, [#allocation9], 16, 16, 1
    $region49: #{bert_paired_classifier_forward.1} parent=1 // pred_fallthru
      _
    // Predicated region
    $region50: #{bert_paired_classifier_forward.1} parent=1 // pred_check
      _
    $region51: #{bert_paired_classifier_forward.1} parent=1 // pred_check_branch
      %110 = sbr.rel (0) target = $region53
    $region52: #{bert_paired_classifier_forward.1} parent=1 // pred_region
      %s112 = ssub.s32 32, 32
      %113 = vsyncadd [#allocation12], %s112
      %s114 = sshll.u32 [#allocation11], 4
      %s115 = int_to_ptr.vmem [resolvable:$true] %s114
      %120 = dma.hbm_to_vmem [thread:$0]  %s12, 32, %s115, [#allocation12], 16, 16, 1
    $region53: #{bert_paired_classifier_forward.1} parent=1 // pred_fallthru
      _
    // Predicated region
    $region54: #{bert_paired_classifier_forward.1} parent=1 // pred_check
      _
    $region55: #{bert_paired_classifier_forward.1} parent=1 // pred_check_branch
      %122 = sbr.rel (0) target = $region57
    $region56: #{bert_paired_classifier_forward.1} parent=1 // pred_region
      _
    $region57: #{bert_paired_classifier_forward.1} parent=1 // pred_fallthru
      _
    // Predicated region
    $region58: #{bert_paired_classifier_forward.1} parent=1 // pred_check
      _
    $region59: #{bert_paired_classifier_forward.1} parent=1 // pred_check_branch
      %124 = sbr.rel (0) target = $region61
    $region60: #{bert_paired_classifier_forward.1} parent=1 // pred_region
      %s126 = ssub.s32 32, 32
      %127 = vsyncadd [#allocation12], %s126
      %s128 = sshll.u32 [#allocation13], 4
      %s129 = int_to_ptr.vmem [resolvable:$true] %s128
      %134 = dma.hbm_to_vmem [thread:$0]  %s14, 32, %s129, [#allocation12], 16, 16, 1
    $region61: #{bert_paired_classifier_forward.1} parent=1 // pred_fallthru
      _
    // Predicated region
    $region62: #{bert_paired_classifier_forward.1} parent=1 // pred_check
      _
    $region63: #{bert_paired_classifier_forward.1} parent=1 // pred_check_branch
      %136 = sbr.rel (0) target = $region65
    $region64: #{bert_paired_classifier_forward.1} parent=1 // pred_region
      _
    $region65: #{bert_paired_classifier_forward.1} parent=1 // pred_fallthru
      _
    // Predicated region
    $region66: #{bert_paired_classifier_forward.1} parent=1 // pred_check
      _
    $region67: #{bert_paired_classifier_forward.1} parent=1 // pred_check_branch
      %138 = sbr.rel (0) target = $region69
    $region68: #{bert_paired_classifier_forward.1} parent=1 // pred_region
      %s140 = ssub.s32 32, 32
      %141 = vsyncadd [#allocation15], %s140
      %s142 = sshll.u32 [#allocation14], 4
      %s143 = int_to_ptr.vmem [resolvable:$true] %s142
      %148 = dma.hbm_to_vmem [thread:$0]  %s16, 32, %s143, [#allocation15], 16, 16, 1
    $region69: #{bert_paired_classifier_forward.1} parent=1 // pred_fallthru
      _
    // Predicated region
    $region70: #{bert_paired_classifier_forward.1} parent=1 // pred_check
      _
    $region71: #{bert_paired_classifier_forward.1} parent=1 // pred_check_branch
      %150 = sbr.rel (0) target = $region73
    $region72: #{bert_paired_classifier_forward.1} parent=1 // pred_region
      %s152 = ssub.s32 32, 32
      %153 = vsyncadd [#allocation15], %s152
      %s154 = sshll.u32 [#allocation16], 4
      %s155 = int_to_ptr.vmem [resolvable:$true] %s154
      %160 = dma.hbm_to_vmem [thread:$0]  %s17, 32, %s155, [#allocation15], 16, 16, 1
    $region73: #{bert_paired_classifier_forward.1} parent=1 // pred_fallthru
      _
    // Predicated region
    $region74: #{bert_paired_classifier_forward.1} parent=1 // pred_check
      _
    $region75: #{bert_paired_classifier_forward.1} parent=1 // pred_check_branch
      %162 = sbr.rel (0) target = $region77
    $region76: #{bert_paired_classifier_forward.1} parent=1 // pred_region
      %s164 = ssub.s32 32, 32
      %165 = vsyncadd [#allocation18], %s164
      %s166 = sshll.u32 [#allocation17], 4
      %s167 = int_to_ptr.vmem [resolvable:$true] %s166
      %172 = dma.hbm_to_vmem [thread:$0]  %s18, 32, %s167, [#allocation18], 16, 16, 1
    $region77: #{bert_paired_classifier_forward.1} parent=1 // pred_fallthru
      _
    // Predicated region
    $region78: #{bert_paired_classifier_forward.1} parent=1 // pred_check
      _
    $region79: #{bert_paired_classifier_forward.1} parent=1 // pred_check_branch
      %174 = sbr.rel (0) target = $region81
    $region80: #{bert_paired_classifier_forward.1} parent=1 // pred_region
      %s176 = ssub.s32 256, 256
      %177 = vsyncadd [#allocation18], %s176
      %s178 = sshll.u32 [#allocation19], 4
      %s179 = int_to_ptr.vmem [resolvable:$true] %s178
      %184 = dma.hbm_to_vmem [thread:$0]  %s19, 256, %s179, [#allocation18], 64, 64, 4
    $region81: #{bert_paired_classifier_forward.1} parent=1 // pred_fallthru
      _
    // Predicated region
    $region82: #{bert_paired_classifier_forward.1} parent=1 // pred_check
      _
    $region83: #{bert_paired_classifier_forward.1} parent=1 // pred_check_branch
      %186 = sbr.rel (0) target = $region85
    $region84: #{bert_paired_classifier_forward.1} parent=1 // pred_region
      %s188 = ssub.s32 16, 16
      %189 = vsyncadd [#allocation21], %s188
      %s191 = sshll.u32 [#allocation20], 4
      %s192 = int_to_ptr.vmem [resolvable:$true] %s191
      %194 = dma.hbm_to_vmem [thread:$0]  %s20, 16, %s192, [#allocation21]
    $region85: #{bert_paired_classifier_forward.1} parent=1 // pred_fallthru
      _
    // Predicated region
    $region86: #{bert_paired_classifier_forward.1} parent=1 // pred_check
      _
    $region87: #{bert_paired_classifier_forward.1} parent=1 // pred_check_branch
      %196 = sbr.rel (0) target = $region89
    $region88: #{bert_paired_classifier_forward.1} parent=1 // pred_region
      %s198 = ssub.s32 256, 256
      %199 = vsyncadd [#allocation21], %s198
      %s200 = sshll.u32 [#allocation22], 4
      %s201 = int_to_ptr.vmem [resolvable:$true] %s200
      %206 = dma.hbm_to_vmem [thread:$0]  %s21, 256, %s201, [#allocation21], 64, 64, 4
    $region89: #{bert_paired_classifier_forward.1} parent=1 // pred_fallthru
      _
    // Predicated region
    $region90: #{bert_paired_classifier_forward.1} parent=1 // pred_check
      _
    $region91: #{bert_paired_classifier_forward.1} parent=1 // pred_check_branch
      %208 = sbr.rel (0) target = $region93
    $region92: #{bert_paired_classifier_forward.1} parent=1 // pred_region
      %s210 = ssub.s32 16, 16
      %211 = vsyncadd [#allocation24], %s210
      %s213 = sshll.u32 [#allocation23], 4
      %s214 = int_to_ptr.vmem [resolvable:$true] %s213
      %216 = dma.hbm_to_vmem [thread:$0]  %s22, 16, %s214, [#allocation24]
    $region93: #{bert_paired_classifier_forward.1} parent=1 // pred_fallthru
      _
    // Predicated region
    $region94: #{bert_paired_classifier_forward.1} parent=1 // pred_check
      _
    $region95: #{bert_paired_classifier_forward.1} parent=1 // pred_check_branch
      %218 = sbr.rel (0) target = $region97
    $region96: #{bert_paired_classifier_forward.1} parent=1 // pred_region
      %219 = dma.done [#allocation3], 256
    $region97: #{bert_paired_classifier_forward.1} parent=1 // pred_fallthru
      _
    // Predicated region
    $region98: #{bert_paired_classifier_forward.1} parent=1 // pred_check
      _
    $region99: #{bert_paired_classifier_forward.1} parent=1 // pred_check_branch
      %221 = sbr.rel (0) target = $region101
    $region100: #{bert_paired_classifier_forward.1} parent=1 // pred_region
      %222 = dma.done [#allocation6], 16
    $region101: #{bert_paired_classifier_forward.1} parent=1 // pred_fallthru
      _
    // Predicated region
    $region102: #{bert_paired_classifier_forward.1} parent=1 // pred_check
      _
    $region103: #{bert_paired_classifier_forward.1} parent=1 // pred_check_branch
      %224 = sbr.rel (0) target = $region105
    $region104: #{bert_paired_classifier_forward.1} parent=1 // pred_region
      %225 = dma.done [#allocation6], 32
    $region105: #{bert_paired_classifier_forward.1} parent=1 // pred_fallthru
      _
    // Predicated region
    $region106: #{bert_paired_classifier_forward.1} parent=1 // pred_check
      _
    $region107: #{bert_paired_classifier_forward.1} parent=1 // pred_check_branch
      %227 = sbr.rel (0) target = $region109
    $region108: #{bert_paired_classifier_forward.1} parent=1 // pred_region
      %228 = dma.done [#allocation9], 32
    $region109: #{bert_paired_classifier_forward.1} parent=1 // pred_fallthru
      _
    // Predicated region
    $region110: #{bert_paired_classifier_forward.1} parent=1 // pred_check
      _
    $region111: #{bert_paired_classifier_forward.1} parent=1 // pred_check_branch
      %230 = sbr.rel (0) target = $region113
    $region112: #{bert_paired_classifier_forward.1} parent=1 // pred_region
      %231 = dma.done [#allocation9], 32
    $region113: #{bert_paired_classifier_forward.1} parent=1 // pred_fallthru
      _
    // Predicated region
    $region114: #{bert_paired_classifier_forward.1} parent=1 // pred_check
      _
    $region115: #{bert_paired_classifier_forward.1} parent=1 // pred_check_branch
      %233 = sbr.rel (0) target = $region117
    $region116: #{bert_paired_classifier_forward.1} parent=1 // pred_region
      %234 = dma.done [#allocation12], 32
    $region117: #{bert_paired_classifier_forward.1} parent=1 // pred_fallthru
      _
    // Predicated region
    $region118: #{bert_paired_classifier_forward.1} parent=1 // pred_check
      _
    $region119: #{bert_paired_classifier_forward.1} parent=1 // pred_check_branch
      %236 = sbr.rel (0) target = $region121
    $region120: #{bert_paired_classifier_forward.1} parent=1 // pred_region
      %237 = dma.done [#allocation12], 32
    $region121: #{bert_paired_classifier_forward.1} parent=1 // pred_fallthru
      _
    // Predicated region
    $region122: #{bert_paired_classifier_forward.1} parent=1 // pred_check
      _
    $region123: #{bert_paired_classifier_forward.1} parent=1 // pred_check_branch
      %239 = sbr.rel (0) target = $region125
    $region124: #{bert_paired_classifier_forward.1} parent=1 // pred_region
      %240 = dma.done [#allocation15], 32
    $region125: #{bert_paired_classifier_forward.1} parent=1 // pred_fallthru
      _
    // Predicated region
    $region126: #{bert_paired_classifier_forward.1} parent=1 // pred_check
      _
    $region127: #{bert_paired_classifier_forward.1} parent=1 // pred_check_branch
      %242 = sbr.rel (0) target = $region129
    $region128: #{bert_paired_classifier_forward.1} parent=1 // pred_region
      %243 = dma.done [#allocation15], 32
    $region129: #{bert_paired_classifier_forward.1} parent=1 // pred_fallthru
      _
    // Predicated region
    $region130: #{bert_paired_classifier_forward.1} parent=1 // pred_check
      _
    $region131: #{bert_paired_classifier_forward.1} parent=1 // pred_check_branch
      %245 = sbr.rel (0) target = $region133
    $region132: #{bert_paired_classifier_forward.1} parent=1 // pred_region
      %246 = dma.done [#allocation18], 32
    $region133: #{bert_paired_classifier_forward.1} parent=1 // pred_fallthru
      _
    // Predicated region
    $region134: #{bert_paired_classifier_forward.1} parent=1 // pred_check
      _
    $region135: #{bert_paired_classifier_forward.1} parent=1 // pred_check_branch
      %248 = sbr.rel (0) target = $region137
    $region136: #{bert_paired_classifier_forward.1} parent=1 // pred_region
      %249 = dma.done [#allocation18], 256
    $region137: #{bert_paired_classifier_forward.1} parent=1 // pred_fallthru
      _
    // Predicated region
    $region138: #{bert_paired_classifier_forward.1} parent=1 // pred_check
      _
    $region139: #{bert_paired_classifier_forward.1} parent=1 // pred_check_branch
      %251 = sbr.rel (0) target = $region141
    $region140: #{bert_paired_classifier_forward.1} parent=1 // pred_region
      %252 = dma.done [#allocation21], 16
    $region141: #{bert_paired_classifier_forward.1} parent=1 // pred_fallthru
      _
    // Predicated region
    $region142: #{bert_paired_classifier_forward.1} parent=1 // pred_check
      _
    $region143: #{bert_paired_classifier_forward.1} parent=1 // pred_check_branch
      %254 = sbr.rel (0) target = $region145
    $region144: #{bert_paired_classifier_forward.1} parent=1 // pred_region
      %255 = dma.done [#allocation21], 256
    $region145: #{bert_paired_classifier_forward.1} parent=1 // pred_fallthru
      _
    // Predicated region
    $region146: #{bert_paired_classifier_forward.1} parent=1 // pred_check
      _
    $region147: #{bert_paired_classifier_forward.1} parent=1 // pred_check_branch
      %257 = sbr.rel (0) target = $region149
    $region148: #{bert_paired_classifier_forward.1} parent=1 // pred_region
      %258 = dma.done [#allocation24], 16
    $region149: #{bert_paired_classifier_forward.1} parent=1 // pred_fallthru
      _
    %v260 = vld [vmem:[%s0] sm:$0xff]
    %v261 = vld [vmem:[%s0 + $0x8] sm:$0xff]
    %v262 = vlaneseq
    %v263 = vand.u32 %v262, 127
    %264 = vset.pattern.permute.xlu0 0
    %265 = vperm.xlu0 %264, %v260
    %v266 = vpop.permute.xlu0 %265
    %267 = vset.pattern.permute.xlu0 0
    %268 = vperm.xlu0 %267, %v261
    %v269 = vpop.permute.xlu0 %268
    %vm270 = vcmp.eq.s32.totalorder %v266, %v263
    %vm271 = vcmp.eq.s32.totalorder %v269, %v263
    %v272 = vsel %vm270, 1, 0
    %v273 = vsel %vm271, 1, 0
    %v274 = vcvt.s32.f32 %v272
    %v275 = vcvt.s32.f32 %v273
    %v276 = vld [vmem:[%s2] sm:$0xff]
    %v277 = vld [vmem:[%s2 + $0x8] sm:$0xff]
    %v278 = vld [vmem:[%s2 + $0x10] sm:$0xff]
    %v279 = vld [vmem:[%s2 + $0x18] sm:$0xff]
    %vm280 = vcmask 261120
    %v282 = vsel %vm280, %v274, 0
    %v285 = vsel %vm280, %v275, 0
    %287 = vmatprep.subr.mxu0 0.0
    %288 = vmatpush1.msra.mxu0 %v276
    %289 = vmatprep.subr.mxu0 0.0
    %290 = vmatpush1.msra.mxu0 %v277
    %291 = vmatprep.subr.mxu0 0.0
    %292 = vmatpush1.msra.mxu0 %v278
    %293 = vmatprep.subr.mxu0 0.0
    %294 = vmatpush1.msra.mxu0 %v279
    %295 = vmatprep.subr.mxu0 0.0
    %296 = vmatpush1.msra.mxu0 0.0
    %297 = vmatprep.subr.mxu0 0.0
    %298 = vmatpush1.msra.mxu0 0.0
    %299 = vmatprep.subr.mxu0 0.0
    %300 = vmatpush1.msra.mxu0 0.0
    %301 = vmatprep.subr.mxu0 0.0
    %302 = vmatpush1.msra.mxu0 0.0
    %303 = vmatprep.subr.mxu0 0.0
    %304 = vmatpush1.msra.mxu0 0.0
    %305 = vmatprep.subr.mxu0 0.0
    %306 = vmatpush1.msra.mxu0 0.0
    %307 = vmatprep.subr.mxu0 0.0
    %308 = vmatpush1.msra.mxu0 0.0
    %309 = vmatprep.subr.mxu0 0.0
    %310 = vmatpush1.msra.mxu0 0.0
    %311 = vmatprep.subr.mxu0 0.0
    %312 = vmatpush1.msra.mxu0 0.0
    %313 = vmatprep.subr.mxu0 0.0
    %314 = vmatpush1.msra.mxu0 0.0
    %315 = vmatprep.subr.mxu0 0.0
    %316 = vmatpush1.msra.mxu0 0.0
    %317 = vmatprep.subr.mxu0 0.0
    %318 = vmatpush1.msra.mxu0 0.0
    %319 = vmatprep.subr.mxu0 0.0
    %320 = vmatpush1.msra.mxu0 0.0
    %321 = vmatprep.subr.mxu0 0.0
    %322 = vmatpush1.msra.mxu0 0.0
    %323 = vmatprep.subr.mxu0 0.0
    %324 = vmatpush1.msra.mxu0 0.0
    %325 = vmatprep.subr.mxu0 0.0
    %326 = vmatpush1.msra.mxu0 0.0
    %327 = vmatprep.subr.mxu0 0.0
    %328 = vmatpush1.msra.mxu0 0.0
    %329 = vmatprep.subr.mxu0 0.0
    %330 = vmatpush1.msra.mxu0 0.0
    %331 = vmatprep.subr.mxu0 0.0
    %332 = vmatpush1.msra.mxu0 0.0
    %333 = vmatprep.subr.mxu0 0.0
    %334 = vmatpush1.msra.mxu0 0.0
    %335 = vmatprep.subr.mxu0 0.0
    %336 = vmatpush1.msra.mxu0 0.0
    %337 = vmatprep.subr.mxu0 0.0
    %338 = vmatpush1.msra.mxu0 0.0
    %339 = vmatprep.subr.mxu0 0.0
    %340 = vmatpush1.msra.mxu0 0.0
    %341 = vmatprep.subr.mxu0 0.0
    %342 = vmatpush1.msra.mxu0 0.0
    %343 = vmatprep.subr.mxu0 0.0
    %344 = vmatpush1.msra.mxu0 0.0
    %345 = vmatprep.subr.mxu0 0.0
    %346 = vmatpush1.msra.mxu0 0.0
    %347 = vmatprep.subr.mxu0 0.0
    %348 = vmatpush1.msra.mxu0 0.0
    %349 = vmatprep.subr.mxu0 0.0
    %350 = vmatpush1.msra.mxu0 0.0
    %351 = vmatprep.mubr.f32.mxu0 0.0
    %352 = vmatmul.mubr.f32.gmra.mrb[0].mxu0 %v282
    %v353 = vpop.f32.mrb[0].mxu0
    %v354 = vadd.f32 0.0, %v353
    %v355 = vpop.f32.mrb[0].mxu0
    %356 = vmatprep.mubr.f32.mxu0 0.0
    %357 = vmatmul.mubr.f32.gmra.mrb[0].mxu0 %v285
    %v358 = vpop.f32.mrb[0].mxu0
    %v359 = vadd.f32 0.0, %v358
    %v360 = vpop.f32.mrb[0].mxu0
    %361 = vdwg.mxu0
    %v362 = vld [vmem:[#allocation2] sm:$0xff]
    %v363 = vld [vmem:[%s4] sm:$0x1]
    %v364 = vlaneseq
    %v365 = vshrl.u32 %v364, 7
    %v366 = vsub.s32 0, %v365
    %v367 = vrot.slane %v363, %v366
    %v368 = vadd.f32 %v362, %v367
    %v369 = vadd.f32 %v354, %v368
    %v370 = vadd.f32 %v359, %v368
    %v371 = vld [vmem:[%s5] sm:$0x1]
    %v372 = vld [vmem:[#allocation5] sm:$0x1]
    %v373 = vsel %vm280, %v369, 0.0
    %374 = vadd.xlane.f32.xlu0 %v373
    %v375 = vpop.xlane.xlu0 %374
    %v376 = vsel %vm280, %v370, 0.0
    %377 = vadd.xlane.f32.xlu0 %v376
    %v378 = vpop.xlane.xlu0 %377
    %v379 = vrcp.pop 32.0
    %v380 = vmul.f32 %v375, %v379
    %v381 = vmul.f32 %v378, %v379
    %v382 = vsub.f32 %v369, %v380
    %v383 = vsub.f32 %v370, %v381
    %v384 = vmul.f32 %v382, %v382
    %v385 = vmul.f32 %v383, %v383
    %v386 = vsel %vm280, %v384, 0.0
    %387 = vadd.xlane.f32.xlu0 %v386
    %v388 = vpop.xlane.xlu0 %387
    %v389 = vsel %vm280, %v385, 0.0
    %390 = vadd.xlane.f32.xlu0 %v389
    %v391 = vpop.xlane.xlu0 %390
    %v392 = vmul.f32 %v388, %v379
    %v393 = vmul.f32 %v391, %v379
    %v394 = vadd.f32 %v392, 1e-12
    %v395 = vadd.f32 %v393, 1e-12
    %v396 = vrsqrt.pop %v394
    %v397 = vrsqrt.pop %v395
    %v398 = vmul.f32 %v382, %v396
    %v399 = vmul.f32 %v383, %v397
    %v401 = vlaneseq
    %v402 = vshrl.u32 %v401, 7
    %v403 = vsub.s32 0, %v402
    %v404 = vrot.slane %v371, %v403
    %v406 = vmul.f32 %v398, %v404
    %v407 = vmul.f32 %v399, %v404
    %v409 = vlaneseq
    %v410 = vshrl.u32 %v409, 7
    %v411 = vsub.s32 0, %v410
    %v412 = vrot.slane %v372, %v411
    %v414 = vadd.f32 %v406, %v412
    %v415 = vadd.f32 %v407, %v412
    %v416 = vld [vmem:[%s1] sm:$0x3]
    %v417 = vcvt.s32.f32 %v416
    %v418 = vsub.f32 1.0, %v417
    %v419 = vmul.f32 %v418, -1e+09
    %v422 = vunpack.c.l.s4 1966171168
    %v423 = vunpack.c.0.s8 %v422
    %v424 = vlaneseq
    %v425 = vshrl.u32 %v424, 7
    %v426 = vsub.s32 %v423, %v425
    %v427 = vrot.slane %v419, %v426
    %v428 = vcombine.high %v427, %v427
    %v430 = vunpack.c.l.s4 1966171168
    %v431 = vunpack.c.0.s8 %v430
    %v432 = vlaneseq
    %v433 = vshrl.u32 %v432, 7
    %v434 = vsub.s32 %v431, %v433
    %v435 = vrot.slane %v427, %v434
    %v437 = vunpack.c.l.s4 1966171168
    %v438 = vunpack.c.0.s8 %v437
    %v439 = vlaneseq
    %v440 = vshrl.u32 %v439, 7
    %v441 = vsub.s32 %v438, %v440
    %v442 = vrot.slane %v428, %v441
    %v443 = vlaneseq
    %v444 = vshrl.u32 %v443, 7
    %v445 = vsub.s32 0, %v444
    %v446 = vrot.slane %v435, %v445
    %v447 = vlaneseq
    %v448 = vshrl.u32 %v447, 7
    %v449 = vsub.s32 0, %v448
    %v450 = vrot.slane %v442, %v449
    %v453 = vpack.c.bf16 %v415, %v414
    %v454 = vld [vmem:[%s7] sm:$0xf]
    %v455 = vld [vmem:[%s7 + $0x4] sm:$0xf]
    %v456 = vld [vmem:[%s7 + $0x8] sm:$0xf]
    %v457 = vld [vmem:[%s7 + $0xc] sm:$0xf]
    %v458 = vld [vmem:[#allocation7] sm:$0x1]
    %v460 = vlaneseq
    %v461 = vshrl.u32 %v460, 7
    %v462 = vsub.s32 0, %v461
    %v463 = vrot.slane %v458, %v462
    %v469 = vunpack.c.l.b16 %v454
    %v470 = vunpack.c.l.b16 %v455
    %v471 = vunpack.c.l.b16 %v456
    %v472 = vunpack.c.l.b16 %v457
    %v473 = vpack.c.b16 %v470, %v469
    %v474 = vpack.c.b16 %v472, %v471
    %v478 = vsel %vm280, %v453, 0
    %480 = vmatprep.subr.bf16.mxu0 0
    %481 = vmatpush1.bf16.msra.mxu0 %v473
    %482 = vmatprep.subr.bf16.mxu0 0
    %483 = vmatpush1.bf16.msra.mxu0 %v474
    %484 = vmatprep.subr.bf16.mxu0 0
    %485 = vmatpush1.bf16.msra.mxu0 0
    %486 = vmatprep.subr.bf16.mxu0 0
    %487 = vmatpush1.bf16.msra.mxu0 0
    %488 = vmatprep.subr.bf16.mxu0 0
    %489 = vmatpush1.bf16.msra.mxu0 0
    %490 = vmatprep.subr.bf16.mxu0 0
    %491 = vmatpush1.bf16.msra.mxu0 0
    %492 = vmatprep.subr.bf16.mxu0 0
    %493 = vmatpush1.bf16.msra.mxu0 0
    %494 = vmatprep.subr.bf16.mxu0 0
    %495 = vmatpush1.bf16.msra.mxu0 0
    %496 = vmatprep.subr.bf16.mxu0 0
    %497 = vmatpush1.bf16.msra.mxu0 0
    %498 = vmatprep.subr.bf16.mxu0 0
    %499 = vmatpush1.bf16.msra.mxu0 0
    %500 = vmatprep.subr.bf16.mxu0 0
    %501 = vmatpush1.bf16.msra.mxu0 0
    %502 = vmatprep.subr.bf16.mxu0 0
    %503 = vmatpush1.bf16.msra.mxu0 0
    %504 = vmatprep.subr.bf16.mxu0 0
    %505 = vmatpush1.bf16.msra.mxu0 0
    %506 = vmatprep.subr.bf16.mxu0 0
    %507 = vmatpush1.bf16.msra.mxu0 0
    %508 = vmatprep.subr.bf16.mxu0 0
    %509 = vmatpush1.bf16.msra.mxu0 0
    %510 = vmatprep.subr.bf16.mxu0 0
    %511 = vmatpush1.bf16.msra.mxu0 0
    %512 = vmatprep.mubr.bf16.mxu0 0
    %513 = vmatmul.mubr.bf16.gmra.mrb[0].mxu0 %v478
    %v514 = vpop.f32.mrb[0].mxu0
    %v515 = vadd.f32 %v463, %v514
    %v516 = vpop.f32.mrb[0].mxu0
    %v517 = vpop.f32.mrb[0].mxu0
    %v518 = vadd.f32 %v463, %v517
    %v519 = vpop.f32.mrb[0].mxu0
    %520 = vdwg.mxu0
    %523 = vrot.lane.b32.xlu0 %v515, 120
    %v524 = vpop.permute.xlu0 %523
    %525 = vrot.lane.b32.xlu0 %v518, 120
    %v526 = vpop.permute.xlu0 %525
    %529 = vrot.lane.b32.xlu0 %v515, 112
    %v530 = vpop.permute.xlu0 %529
    %531 = vrot.lane.b32.xlu0 %v518, 112
    %v532 = vpop.permute.xlu0 %531
    %535 = vrot.lane.b32.xlu0 %v515, 104
    %v536 = vpop.permute.xlu0 %535
    %537 = vrot.lane.b32.xlu0 %v518, 104
    %v538 = vpop.permute.xlu0 %537
    %v541 = vpack.c.bf16 %v515, %v515
    %v542 = vpack.c.bf16 %v518, %v518
    %v543 = vpack.c.bf16 %v524, %v524
    %v544 = vpack.c.bf16 %v526, %v526
    %v545 = vpack.c.bf16 %v530, %v530
    %v546 = vpack.c.bf16 %v532, %v532
    %v547 = vpack.c.bf16 %v536, %v536
    %v548 = vpack.c.bf16 %v538, %v538
    %550 = vrot.lane.b32.xlu0 %v541, 96
    %v551 = vpop.permute.xlu0 %550
    %vm552 = vcmask 64512
    %v554 = vsel %vm552, %v541, 0
    %v557 = vsel %vm552, %v551, 0
    %559 = vmatprep.subr.bf16.mxu0 0
    %560 = vmatpush1.bf16.xpose.msra.mxu0 %v557
    %561 = vmatprep.subr.bf16.mxu0 0
    %562 = vmatpush1.bf16.xpose.msra.mxu0 0
    %563 = vmatprep.subr.bf16.mxu0 0
    %564 = vmatpush1.bf16.xpose.msra.mxu0 0
    %565 = vmatprep.subr.bf16.mxu0 0
    %566 = vmatpush1.bf16.xpose.msra.mxu0 0
    %567 = vmatprep.subr.bf16.mxu0 0
    %568 = vmatpush1.bf16.xpose.msra.mxu0 0
    %569 = vmatprep.subr.bf16.mxu0 0
    %570 = vmatpush1.bf16.xpose.msra.mxu0 0
    %571 = vmatprep.subr.bf16.mxu0 0
    %572 = vmatpush1.bf16.xpose.msra.mxu0 0
    %573 = vmatprep.subr.bf16.mxu0 0
    %574 = vmatpush1.bf16.xpose.msra.mxu0 0
    %575 = vmatprep.subr.bf16.mxu0 0
    %576 = vmatpush1.bf16.xpose.msra.mxu0 0
    %577 = vmatprep.subr.bf16.mxu0 0
    %578 = vmatpush1.bf16.xpose.msra.mxu0 0
    %579 = vmatprep.subr.bf16.mxu0 0
    %580 = vmatpush1.bf16.xpose.msra.mxu0 0
    %581 = vmatprep.subr.bf16.mxu0 0
    %582 = vmatpush1.bf16.xpose.msra.mxu0 0
    %583 = vmatprep.subr.bf16.mxu0 0
    %584 = vmatpush1.bf16.xpose.msra.mxu0 0
    %585 = vmatprep.subr.bf16.mxu0 0
    %586 = vmatpush1.bf16.xpose.msra.mxu0 0
    %587 = vmatprep.subr.bf16.mxu0 0
    %588 = vmatpush1.bf16.xpose.msra.mxu0 0
    %589 = vmatprep.subr.bf16.mxu0 0
    %590 = vmatpush1.bf16.xpose.msra.mxu0 0
    %591 = vmatprep.mubr.bf16.mxu0 0
    %592 = vmatmul.mubr.bf16.gmra.mrb[0].mxu0 %v554
    %v593 = vpop.f32.mrb[0].mxu0
    %v594 = vadd.f32 0.0, %v593
    %v595 = vpop.f32.mrb[0].mxu0
    %v596 = vpop.f32.mrb[0].mxu0
    %v597 = vpop.f32.mrb[0].mxu0
    %598 = vdwg.mxu0
    %600 = vrot.lane.b32.xlu0 %v542, 96
    %v601 = vpop.permute.xlu0 %600
    %v603 = vsel %vm552, %v542, 0
    %v606 = vsel %vm552, %v601, 0
    %608 = vmatprep.subr.bf16.mxu0 0
    %609 = vmatpush1.bf16.xpose.msra.mxu0 %v606
    %610 = vmatprep.subr.bf16.mxu0 0
    %611 = vmatpush1.bf16.xpose.msra.mxu0 0
    %612 = vmatprep.subr.bf16.mxu0 0
    %613 = vmatpush1.bf16.xpose.msra.mxu0 0
    %614 = vmatprep.subr.bf16.mxu0 0
    %615 = vmatpush1.bf16.xpose.msra.mxu0 0
    %616 = vmatprep.subr.bf16.mxu0 0
    %617 = vmatpush1.bf16.xpose.msra.mxu0 0
    %618 = vmatprep.subr.bf16.mxu0 0
    %619 = vmatpush1.bf16.xpose.msra.mxu0 0
    %620 = vmatprep.subr.bf16.mxu0 0
    %621 = vmatpush1.bf16.xpose.msra.mxu0 0
    %622 = vmatprep.subr.bf16.mxu0 0
    %623 = vmatpush1.bf16.xpose.msra.mxu0 0
    %624 = vmatprep.subr.bf16.mxu0 0
    %625 = vmatpush1.bf16.xpose.msra.mxu0 0
    %626 = vmatprep.subr.bf16.mxu0 0
    %627 = vmatpush1.bf16.xpose.msra.mxu0 0
    %628 = vmatprep.subr.bf16.mxu0 0
    %629 = vmatpush1.bf16.xpose.msra.mxu0 0
    %630 = vmatprep.subr.bf16.mxu0 0
    %631 = vmatpush1.bf16.xpose.msra.mxu0 0
    %632 = vmatprep.subr.bf16.mxu0 0
    %633 = vmatpush1.bf16.xpose.msra.mxu0 0
    %634 = vmatprep.subr.bf16.mxu0 0
    %635 = vmatpush1.bf16.xpose.msra.mxu0 0
    %636 = vmatprep.subr.bf16.mxu0 0
    %637 = vmatpush1.bf16.xpose.msra.mxu0 0
    %638 = vmatprep.subr.bf16.mxu0 0
    %639 = vmatpush1.bf16.xpose.msra.mxu0 0
    %640 = vmatprep.mubr.bf16.mxu0 0
    %641 = vmatmul.mubr.bf16.gmra.mrb[0].mxu0 %v603
    %v642 = vpop.f32.mrb[0].mxu0
    %v643 = vadd.f32 0.0, %v642
    %v644 = vpop.f32.mrb[0].mxu0
    %v645 = vpop.f32.mrb[0].mxu0
    %v646 = vpop.f32.mrb[0].mxu0
    %647 = vdwg.mxu0
    %649 = vrot.lane.b32.xlu0 %v543, 96
    %v650 = vpop.permute.xlu0 %649
    %v652 = vsel %vm552, %v543, 0
    %v655 = vsel %vm552, %v650, 0
    %657 = vmatprep.subr.bf16.mxu0 0
    %658 = vmatpush1.bf16.xpose.msra.mxu0 %v655
    %659 = vmatprep.subr.bf16.mxu0 0
    %660 = vmatpush1.bf16.xpose.msra.mxu0 0
    %661 = vmatprep.subr.bf16.mxu0 0
    %662 = vmatpush1.bf16.xpose.msra.mxu0 0
    %663 = vmatprep.subr.bf16.mxu0 0
    %664 = vmatpush1.bf16.xpose.msra.mxu0 0
    %665 = vmatprep.subr.bf16.mxu0 0
    %666 = vmatpush1.bf16.xpose.msra.mxu0 0
    %667 = vmatprep.subr.bf16.mxu0 0
    %668 = vmatpush1.bf16.xpose.msra.mxu0 0
    %669 = vmatprep.subr.bf16.mxu0 0
    %670 = vmatpush1.bf16.xpose.msra.mxu0 0
    %671 = vmatprep.subr.bf16.mxu0 0
    %672 = vmatpush1.bf16.xpose.msra.mxu0 0
    %673 = vmatprep.subr.bf16.mxu0 0
    %674 = vmatpush1.bf16.xpose.msra.mxu0 0
    %675 = vmatprep.subr.bf16.mxu0 0
    %676 = vmatpush1.bf16.xpose.msra.mxu0 0
    %677 = vmatprep.subr.bf16.mxu0 0
    %678 = vmatpush1.bf16.xpose.msra.mxu0 0
    %679 = vmatprep.subr.bf16.mxu0 0
    %680 = vmatpush1.bf16.xpose.msra.mxu0 0
    %681 = vmatprep.subr.bf16.mxu0 0
    %682 = vmatpush1.bf16.xpose.msra.mxu0 0
    %683 = vmatprep.subr.bf16.mxu0 0
    %684 = vmatpush1.bf16.xpose.msra.mxu0 0
    %685 = vmatprep.subr.bf16.mxu0 0
    %686 = vmatpush1.bf16.xpose.msra.mxu0 0
    %687 = vmatprep.subr.bf16.mxu0 0
    %688 = vmatpush1.bf16.xpose.msra.mxu0 0
    %689 = vmatprep.mubr.bf16.mxu0 0
    %690 = vmatmul.mubr.bf16.gmra.mrb[0].mxu0 %v652
    %v691 = vpop.f32.mrb[0].mxu0
    %v692 = vadd.f32 0.0, %v691
    %v693 = vpop.f32.mrb[0].mxu0
    %v694 = vpop.f32.mrb[0].mxu0
    %v695 = vpop.f32.mrb[0].mxu0
    %696 = vdwg.mxu0
    %698 = vrot.lane.b32.xlu0 %v544, 96
    %v699 = vpop.permute.xlu0 %698
    %v701 = vsel %vm552, %v544, 0
    %v704 = vsel %vm552, %v699, 0
    %706 = vmatprep.subr.bf16.mxu0 0
    %707 = vmatpush1.bf16.xpose.msra.mxu0 %v704
    %708 = vmatprep.subr.bf16.mxu0 0
    %709 = vmatpush1.bf16.xpose.msra.mxu0 0
    %710 = vmatprep.subr.bf16.mxu0 0
    %711 = vmatpush1.bf16.xpose.msra.mxu0 0
    %712 = vmatprep.subr.bf16.mxu0 0
    %713 = vmatpush1.bf16.xpose.msra.mxu0 0
    %714 = vmatprep.subr.bf16.mxu0 0
    %715 = vmatpush1.bf16.xpose.msra.mxu0 0
    %716 = vmatprep.subr.bf16.mxu0 0
    %717 = vmatpush1.bf16.xpose.msra.mxu0 0
    %718 = vmatprep.subr.bf16.mxu0 0
    %719 = vmatpush1.bf16.xpose.msra.mxu0 0
    %720 = vmatprep.subr.bf16.mxu0 0
    %721 = vmatpush1.bf16.xpose.msra.mxu0 0
    %722 = vmatprep.subr.bf16.mxu0 0
    %723 = vmatpush1.bf16.xpose.msra.mxu0 0
    %724 = vmatprep.subr.bf16.mxu0 0
    %725 = vmatpush1.bf16.xpose.msra.mxu0 0
    %726 = vmatprep.subr.bf16.mxu0 0
    %727 = vmatpush1.bf16.xpose.msra.mxu0 0
    %728 = vmatprep.subr.bf16.mxu0 0
    %729 = vmatpush1.bf16.xpose.msra.mxu0 0
    %730 = vmatprep.subr.bf16.mxu0 0
    %731 = vmatpush1.bf16.xpose.msra.mxu0 0
    %732 = vmatprep.subr.bf16.mxu0 0
    %733 = vmatpush1.bf16.xpose.msra.mxu0 0
    %734 = vmatprep.subr.bf16.mxu0 0
    %735 = vmatpush1.bf16.xpose.msra.mxu0 0
    %736 = vmatprep.subr.bf16.mxu0 0
    %737 = vmatpush1.bf16.xpose.msra.mxu0 0
    %738 = vmatprep.mubr.bf16.mxu0 0
    %739 = vmatmul.mubr.bf16.gmra.mrb[0].mxu0 %v701
    %v740 = vpop.f32.mrb[0].mxu0
    %v741 = vadd.f32 0.0, %v740
    %v742 = vpop.f32.mrb[0].mxu0
    %v743 = vpop.f32.mrb[0].mxu0
    %v744 = vpop.f32.mrb[0].mxu0
    %745 = vdwg.mxu0
    %747 = vrot.lane.b32.xlu0 %v545, 96
    %v748 = vpop.permute.xlu0 %747
    %v750 = vsel %vm552, %v545, 0
    %v753 = vsel %vm552, %v748, 0
    %755 = vmatprep.subr.bf16.mxu0 0
    %756 = vmatpush1.bf16.xpose.msra.mxu0 %v753
    %757 = vmatprep.subr.bf16.mxu0 0
    %758 = vmatpush1.bf16.xpose.msra.mxu0 0
    %759 = vmatprep.subr.bf16.mxu0 0
    %760 = vmatpush1.bf16.xpose.msra.mxu0 0
    %761 = vmatprep.subr.bf16.mxu0 0
    %762 = vmatpush1.bf16.xpose.msra.mxu0 0
    %763 = vmatprep.subr.bf16.mxu0 0
    %764 = vmatpush1.bf16.xpose.msra.mxu0 0
    %765 = vmatprep.subr.bf16.mxu0 0
    %766 = vmatpush1.bf16.xpose.msra.mxu0 0
    %767 = vmatprep.subr.bf16.mxu0 0
    %768 = vmatpush1.bf16.xpose.msra.mxu0 0
    %769 = vmatprep.subr.bf16.mxu0 0
    %770 = vmatpush1.bf16.xpose.msra.mxu0 0
    %771 = vmatprep.subr.bf16.mxu0 0
    %772 = vmatpush1.bf16.xpose.msra.mxu0 0
    %773 = vmatprep.subr.bf16.mxu0 0
    %774 = vmatpush1.bf16.xpose.msra.mxu0 0
    %775 = vmatprep.subr.bf16.mxu0 0
    %776 = vmatpush1.bf16.xpose.msra.mxu0 0
    %777 = vmatprep.subr.bf16.mxu0 0
    %778 = vmatpush1.bf16.xpose.msra.mxu0 0
    %779 = vmatprep.subr.bf16.mxu0 0
    %780 = vmatpush1.bf16.xpose.msra.mxu0 0
    %781 = vmatprep.subr.bf16.mxu0 0
    %782 = vmatpush1.bf16.xpose.msra.mxu0 0
    %783 = vmatprep.subr.bf16.mxu0 0
    %784 = vmatpush1.bf16.xpose.msra.mxu0 0
    %785 = vmatprep.subr.bf16.mxu0 0
    %786 = vmatpush1.bf16.xpose.msra.mxu0 0
    %787 = vmatprep.mubr.bf16.mxu0 0
    %788 = vmatmul.mubr.bf16.gmra.mrb[0].mxu0 %v750
    %v789 = vpop.f32.mrb[0].mxu0
    %v790 = vadd.f32 0.0, %v789
    %v791 = vpop.f32.mrb[0].mxu0
    %v792 = vpop.f32.mrb[0].mxu0
    %v793 = vpop.f32.mrb[0].mxu0
    %794 = vdwg.mxu0
    %796 = vrot.lane.b32.xlu0 %v546, 96
    %v797 = vpop.permute.xlu0 %796
    %v799 = vsel %vm552, %v546, 0
    %v802 = vsel %vm552, %v797, 0
    %804 = vmatprep.subr.bf16.mxu0 0
    %805 = vmatpush1.bf16.xpose.msra.mxu0 %v802
    %806 = vmatprep.subr.bf16.mxu0 0
    %807 = vmatpush1.bf16.xpose.msra.mxu0 0
    %808 = vmatprep.subr.bf16.mxu0 0
    %809 = vmatpush1.bf16.xpose.msra.mxu0 0
    %810 = vmatprep.subr.bf16.mxu0 0
    %811 = vmatpush1.bf16.xpose.msra.mxu0 0
    %812 = vmatprep.subr.bf16.mxu0 0
    %813 = vmatpush1.bf16.xpose.msra.mxu0 0
    %814 = vmatprep.subr.bf16.mxu0 0
    %815 = vmatpush1.bf16.xpose.msra.mxu0 0
    %816 = vmatprep.subr.bf16.mxu0 0
    %817 = vmatpush1.bf16.xpose.msra.mxu0 0
    %818 = vmatprep.subr.bf16.mxu0 0
    %819 = vmatpush1.bf16.xpose.msra.mxu0 0
    %820 = vmatprep.subr.bf16.mxu0 0
    %821 = vmatpush1.bf16.xpose.msra.mxu0 0
    %822 = vmatprep.subr.bf16.mxu0 0
    %823 = vmatpush1.bf16.xpose.msra.mxu0 0
    %824 = vmatprep.subr.bf16.mxu0 0
    %825 = vmatpush1.bf16.xpose.msra.mxu0 0
    %826 = vmatprep.subr.bf16.mxu0 0
    %827 = vmatpush1.bf16.xpose.msra.mxu0 0
    %828 = vmatprep.subr.bf16.mxu0 0
    %829 = vmatpush1.bf16.xpose.msra.mxu0 0
    %830 = vmatprep.subr.bf16.mxu0 0
    %831 = vmatpush1.bf16.xpose.msra.mxu0 0
    %832 = vmatprep.subr.bf16.mxu0 0
    %833 = vmatpush1.bf16.xpose.msra.mxu0 0
    %834 = vmatprep.subr.bf16.mxu0 0
    %835 = vmatpush1.bf16.xpose.msra.mxu0 0
    %836 = vmatprep.mubr.bf16.mxu0 0
    %837 = vmatmul.mubr.bf16.gmra.mrb[0].mxu0 %v799
    %v838 = vpop.f32.mrb[0].mxu0
    %v839 = vadd.f32 0.0, %v838
    %v840 = vpop.f32.mrb[0].mxu0
    %v841 = vpop.f32.mrb[0].mxu0
    %v842 = vpop.f32.mrb[0].mxu0
    %843 = vdwg.mxu0
    %845 = vrot.lane.b32.xlu0 %v547, 96
    %v846 = vpop.permute.xlu0 %845
    %v848 = vsel %vm552, %v547, 0
    %v851 = vsel %vm552, %v846, 0
    %853 = vmatprep.subr.bf16.mxu0 0
    %854 = vmatpush1.bf16.xpose.msra.mxu0 %v851
    %855 = vmatprep.subr.bf16.mxu0 0
    %856 = vmatpush1.bf16.xpose.msra.mxu0 0
    %857 = vmatprep.subr.bf16.mxu0 0
    %858 = vmatpush1.bf16.xpose.msra.mxu0 0
    %859 = vmatprep.subr.bf16.mxu0 0
    %860 = vmatpush1.bf16.xpose.msra.mxu0 0
    %861 = vmatprep.subr.bf16.mxu0 0
    %862 = vmatpush1.bf16.xpose.msra.mxu0 0
    %863 = vmatprep.subr.bf16.mxu0 0
    %864 = vmatpush1.bf16.xpose.msra.mxu0 0
    %865 = vmatprep.subr.bf16.mxu0 0
    %866 = vmatpush1.bf16.xpose.msra.mxu0 0
    %867 = vmatprep.subr.bf16.mxu0 0
    %868 = vmatpush1.bf16.xpose.msra.mxu0 0
    %869 = vmatprep.subr.bf16.mxu0 0
    %870 = vmatpush1.bf16.xpose.msra.mxu0 0
    %871 = vmatprep.subr.bf16.mxu0 0
    %872 = vmatpush1.bf16.xpose.msra.mxu0 0
    %873 = vmatprep.subr.bf16.mxu0 0
    %874 = vmatpush1.bf16.xpose.msra.mxu0 0
    %875 = vmatprep.subr.bf16.mxu0 0
    %876 = vmatpush1.bf16.xpose.msra.mxu0 0
    %877 = vmatprep.subr.bf16.mxu0 0
    %878 = vmatpush1.bf16.xpose.msra.mxu0 0
    %879 = vmatprep.subr.bf16.mxu0 0
    %880 = vmatpush1.bf16.xpose.msra.mxu0 0
    %881 = vmatprep.subr.bf16.mxu0 0
    %882 = vmatpush1.bf16.xpose.msra.mxu0 0
    %883 = vmatprep.subr.bf16.mxu0 0
    %884 = vmatpush1.bf16.xpose.msra.mxu0 0
    %885 = vmatprep.mubr.bf16.mxu0 0
    %886 = vmatmul.mubr.bf16.gmra.mrb[0].mxu0 %v848
    %v887 = vpop.f32.mrb[0].mxu0
    %v888 = vadd.f32 0.0, %v887
    %v889 = vpop.f32.mrb[0].mxu0
    %v890 = vpop.f32.mrb[0].mxu0
    %v891 = vpop.f32.mrb[0].mxu0
    %892 = vdwg.mxu0
    %894 = vrot.lane.b32.xlu0 %v548, 96
    %v895 = vpop.permute.xlu0 %894
    %v897 = vsel %vm552, %v548, 0
    %v900 = vsel %vm552, %v895, 0
    %902 = vmatprep.subr.bf16.mxu0 0
    %903 = vmatpush1.bf16.xpose.msra.mxu0 %v900
    %904 = vmatprep.subr.bf16.mxu0 0
    %905 = vmatpush1.bf16.xpose.msra.mxu0 0
    %906 = vmatprep.subr.bf16.mxu0 0
    %907 = vmatpush1.bf16.xpose.msra.mxu0 0
    %908 = vmatprep.subr.bf16.mxu0 0
    %909 = vmatpush1.bf16.xpose.msra.mxu0 0
    %910 = vmatprep.subr.bf16.mxu0 0
    %911 = vmatpush1.bf16.xpose.msra.mxu0 0
    %912 = vmatprep.subr.bf16.mxu0 0
    %913 = vmatpush1.bf16.xpose.msra.mxu0 0
    %914 = vmatprep.subr.bf16.mxu0 0
    %915 = vmatpush1.bf16.xpose.msra.mxu0 0
    %916 = vmatprep.subr.bf16.mxu0 0
    %917 = vmatpush1.bf16.xpose.msra.mxu0 0
    %918 = vmatprep.subr.bf16.mxu0 0
    %919 = vmatpush1.bf16.xpose.msra.mxu0 0
    %920 = vmatprep.subr.bf16.mxu0 0
    %921 = vmatpush1.bf16.xpose.msra.mxu0 0
    %922 = vmatprep.subr.bf16.mxu0 0
    %923 = vmatpush1.bf16.xpose.msra.mxu0 0
    %924 = vmatprep.subr.bf16.mxu0 0
    %925 = vmatpush1.bf16.xpose.msra.mxu0 0
    %926 = vmatprep.subr.bf16.mxu0 0
    %927 = vmatpush1.bf16.xpose.msra.mxu0 0
    %928 = vmatprep.subr.bf16.mxu0 0
    %929 = vmatpush1.bf16.xpose.msra.mxu0 0
    %930 = vmatprep.subr.bf16.mxu0 0
    %931 = vmatpush1.bf16.xpose.msra.mxu0 0
    %932 = vmatprep.subr.bf16.mxu0 0
    %933 = vmatpush1.bf16.xpose.msra.mxu0 0
    %934 = vmatprep.mubr.bf16.mxu0 0
    %935 = vmatmul.mubr.bf16.gmra.mrb[0].mxu0 %v897
    %v936 = vpop.f32.mrb[0].mxu0
    %v937 = vadd.f32 0.0, %v936
    %v938 = vpop.f32.mrb[0].mxu0
    %v939 = vpop.f32.mrb[0].mxu0
    %v940 = vpop.f32.mrb[0].mxu0
    %941 = vdwg.mxu0
    %v942 = vmul.f32 %v594, 0.35355338
    %v943 = vmul.f32 %v643, 0.35355338
    %v944 = vmul.f32 %v692, 0.35355338
    %v945 = vmul.f32 %v741, 0.35355338
    %v946 = vmul.f32 %v790, 0.35355338
    %v947 = vmul.f32 %v839, 0.35355338
    %v948 = vmul.f32 %v888, 0.35355338
    %v949 = vmul.f32 %v937, 0.35355338
    %v950 = vadd.f32 %v942, %v446
    %v951 = vadd.f32 %v943, %v450
    %v952 = vadd.f32 %v944, %v446
    %v953 = vadd.f32 %v945, %v450
    %v954 = vadd.f32 %v946, %v446
    %v955 = vadd.f32 %v947, %v450
    %v956 = vadd.f32 %v948, %v446
    %v957 = vadd.f32 %v949, %v450
    %v958 = vsel %vm552, %v950, -inf
    %959 = vmax.xlane.f32.xlu0 %v958
    %v960 = vpop.xlane.xlu0 %959
    %v961 = vsel %vm552, %v951, -inf
    %962 = vmax.xlane.f32.xlu0 %v961
    %v963 = vpop.xlane.xlu0 %962
    %v964 = vsel %vm552, %v952, -inf
    %965 = vmax.xlane.f32.xlu0 %v964
    %v966 = vpop.xlane.xlu0 %965
    %v967 = vsel %vm552, %v953, -inf
    %968 = vmax.xlane.f32.xlu0 %v967
    %v969 = vpop.xlane.xlu0 %968
    %v970 = vsel %vm552, %v954, -inf
    %971 = vmax.xlane.f32.xlu0 %v970
    %v972 = vpop.xlane.xlu0 %971
    %v973 = vsel %vm552, %v955, -inf
    %974 = vmax.xlane.f32.xlu0 %v973
    %v975 = vpop.xlane.xlu0 %974
    %v976 = vsel %vm552, %v956, -inf
    %977 = vmax.xlane.f32.xlu0 %v976
    %v978 = vpop.xlane.xlu0 %977
    %v979 = vsel %vm552, %v957, -inf
    %980 = vmax.xlane.f32.xlu0 %v979
    %v981 = vpop.xlane.xlu0 %980
    %v982 = vsub.f32 %v950, %v960
    %v983 = vsub.f32 %v951, %v963
    %v984 = vsub.f32 %v952, %v966
    %v985 = vsub.f32 %v953, %v969
    %v986 = vsub.f32 %v954, %v972
    %v987 = vsub.f32 %v955, %v975
    %v988 = vsub.f32 %v956, %v978
    %v989 = vsub.f32 %v957, %v981
    %v990 = vmul.f32 %v982, 1.442695
    %v991 = vpow.pop %v990
    %v992 = vmul.f32 %v983, 1.442695
    %v993 = vpow.pop %v992
    %v994 = vmul.f32 %v984, 1.442695
    %v995 = vpow.pop %v994
    %v996 = vmul.f32 %v985, 1.442695
    %v997 = vpow.pop %v996
    %v998 = vmul.f32 %v986, 1.442695
    %v999 = vpow.pop %v998
    %v1000 = vmul.f32 %v987, 1.442695
    %v1001 = vpow.pop %v1000
    %v1002 = vmul.f32 %v988, 1.442695
    %v1003 = vpow.pop %v1002
    %v1004 = vmul.f32 %v989, 1.442695
    %v1005 = vpow.pop %v1004
    %v1006 = vsel %vm552, %v991, 0.0
    %1007 = vadd.xlane.f32.xlu0 %v1006
    %v1008 = vpop.xlane.xlu0 %1007
    %v1009 = vsel %vm552, %v993, 0.0
    %1010 = vadd.xlane.f32.xlu0 %v1009
    %v1011 = vpop.xlane.xlu0 %1010
    %v1012 = vsel %vm552, %v995, 0.0
    %1013 = vadd.xlane.f32.xlu0 %v1012
    %v1014 = vpop.xlane.xlu0 %1013
    %v1015 = vsel %vm552, %v997, 0.0
    %1016 = vadd.xlane.f32.xlu0 %v1015
    %v1017 = vpop.xlane.xlu0 %1016
    %v1018 = vsel %vm552, %v999, 0.0
    %1019 = vadd.xlane.f32.xlu0 %v1018
    %v1020 = vpop.xlane.xlu0 %1019
    %v1021 = vsel %vm552, %v1001, 0.0
    %1022 = vadd.xlane.f32.xlu0 %v1021
    %v1023 = vpop.xlane.xlu0 %1022
    %v1024 = vsel %vm552, %v1003, 0.0
    %1025 = vadd.xlane.f32.xlu0 %v1024
    %v1026 = vpop.xlane.xlu0 %1025
    %v1027 = vsel %vm552, %v1005, 0.0
    %1028 = vadd.xlane.f32.xlu0 %v1027
    %v1029 = vpop.xlane.xlu0 %1028
    %v1030 = vrcp.pop %v1008
    %v1031 = vrcp.pop %v1011
    %v1032 = vrcp.pop %v1014
    %v1033 = vrcp.pop %v1017
    %v1034 = vrcp.pop %v1020
    %v1035 = vrcp.pop %v1023
    %v1036 = vrcp.pop %v1026
    %v1037 = vrcp.pop %v1029
    %v1038 = vmul.f32 %v991, %v1030
    %v1039 = vmul.f32 %v993, %v1031
    %v1040 = vmul.f32 %v995, %v1032
    %v1041 = vmul.f32 %v997, %v1033
    %v1042 = vmul.f32 %v999, %v1034
    %v1043 = vmul.f32 %v1001, %v1035
    %v1044 = vmul.f32 %v1003, %v1036
    %v1045 = vmul.f32 %v1005, %v1037
    %v1046 = vpack.c.bf16 %v1038, %v1038
    %v1047 = vpack.c.bf16 %v1039, %v1039
    %v1048 = vpack.c.bf16 %v1040, %v1040
    %v1049 = vpack.c.bf16 %v1041, %v1041
    %v1050 = vpack.c.bf16 %v1042, %v1042
    %v1051 = vpack.c.bf16 %v1043, %v1043
    %v1052 = vpack.c.bf16 %v1044, %v1044
    %v1053 = vpack.c.bf16 %v1045, %v1045
    %1054 = vrot.lane.b32.xlu0 %v541, 64
    %v1055 = vpop.permute.xlu0 %1054
    %v1057 = vsel %vm552, %v1046, 0
    %vm1059 = vcmask 1043456
    %v1061 = vsel %vm1059, %v1055, 0
    %1063 = vmatprep.subr.bf16.mxu0 0
    %1064 = vmatpush1.bf16.msra.mxu0 %v1061
    %1065 = vmatprep.subr.bf16.mxu0 0
    %1066 = vmatpush1.bf16.msra.mxu0 0
    %1067 = vmatprep.subr.bf16.mxu0 0
    %1068 = vmatpush1.bf16.msra.mxu0 0
    %1069 = vmatprep.subr.bf16.mxu0 0
    %1070 = vmatpush1.bf16.msra.mxu0 0
    %1071 = vmatprep.subr.bf16.mxu0 0
    %1072 = vmatpush1.bf16.msra.mxu0 0
    %1073 = vmatprep.subr.bf16.mxu0 0
    %1074 = vmatpush1.bf16.msra.mxu0 0
    %1075 = vmatprep.subr.bf16.mxu0 0
    %1076 = vmatpush1.bf16.msra.mxu0 0
    %1077 = vmatprep.subr.bf16.mxu0 0
    %1078 = vmatpush1.bf16.msra.mxu0 0
    %1079 = vmatprep.subr.bf16.mxu0 0
    %1080 = vmatpush1.bf16.msra.mxu0 0
    %1081 = vmatprep.subr.bf16.mxu0 0
    %1082 = vmatpush1.bf16.msra.mxu0 0
    %1083 = vmatprep.subr.bf16.mxu0 0
    %1084 = vmatpush1.bf16.msra.mxu0 0
    %1085 = vmatprep.subr.bf16.mxu0 0
    %1086 = vmatpush1.bf16.msra.mxu0 0
    %1087 = vmatprep.subr.bf16.mxu0 0
    %1088 = vmatpush1.bf16.msra.mxu0 0
    %1089 = vmatprep.subr.bf16.mxu0 0
    %1090 = vmatpush1.bf16.msra.mxu0 0
    %1091 = vmatprep.subr.bf16.mxu0 0
    %1092 = vmatpush1.bf16.msra.mxu0 0
    %1093 = vmatprep.subr.bf16.mxu0 0
    %1094 = vmatpush1.bf16.msra.mxu0 0
    %1095 = vmatprep.mubr.bf16.mxu0 0
    %1096 = vmatmul.mubr.bf16.gmra.mrb[0].mxu0 %v1057
    %v1097 = vpop.f32.mrb[0].mxu0
    %v1098 = vadd.f32 0.0, %v1097
    %v1099 = vpop.f32.mrb[0].mxu0
    %v1100 = vpop.f32.mrb[0].mxu0
    %v1101 = vpop.f32.mrb[0].mxu0
    %1102 = vdwg.mxu0
    %1103 = vrot.lane.b32.xlu0 %v542, 64
    %v1104 = vpop.permute.xlu0 %1103
    %v1106 = vsel %vm552, %v1047, 0
    %v1109 = vsel %vm1059, %v1104, 0
    %1111 = vmatprep.subr.bf16.mxu0 0
    %1112 = vmatpush1.bf16.msra.mxu0 %v1109
    %1113 = vmatprep.subr.bf16.mxu0 0
    %1114 = vmatpush1.bf16.msra.mxu0 0
    %1115 = vmatprep.subr.bf16.mxu0 0
    %1116 = vmatpush1.bf16.msra.mxu0 0
    %1117 = vmatprep.subr.bf16.mxu0 0
    %1118 = vmatpush1.bf16.msra.mxu0 0
    %1119 = vmatprep.subr.bf16.mxu0 0
    %1120 = vmatpush1.bf16.msra.mxu0 0
    %1121 = vmatprep.subr.bf16.mxu0 0
    %1122 = vmatpush1.bf16.msra.mxu0 0
    %1123 = vmatprep.subr.bf16.mxu0 0
    %1124 = vmatpush1.bf16.msra.mxu0 0
    %1125 = vmatprep.subr.bf16.mxu0 0
    %1126 = vmatpush1.bf16.msra.mxu0 0
    %1127 = vmatprep.subr.bf16.mxu0 0
    %1128 = vmatpush1.bf16.msra.mxu0 0
    %1129 = vmatprep.subr.bf16.mxu0 0
    %1130 = vmatpush1.bf16.msra.mxu0 0
    %1131 = vmatprep.subr.bf16.mxu0 0
    %1132 = vmatpush1.bf16.msra.mxu0 0
    %1133 = vmatprep.subr.bf16.mxu0 0
    %1134 = vmatpush1.bf16.msra.mxu0 0
    %1135 = vmatprep.subr.bf16.mxu0 0
    %1136 = vmatpush1.bf16.msra.mxu0 0
    %1137 = vmatprep.subr.bf16.mxu0 0
    %1138 = vmatpush1.bf16.msra.mxu0 0
    %1139 = vmatprep.subr.bf16.mxu0 0
    %1140 = vmatpush1.bf16.msra.mxu0 0
    %1141 = vmatprep.subr.bf16.mxu0 0
    %1142 = vmatpush1.bf16.msra.mxu0 0
    %1143 = vmatprep.mubr.bf16.mxu0 0
    %1144 = vmatmul.mubr.bf16.gmra.mrb[0].mxu0 %v1106
    %v1145 = vpop.f32.mrb[0].mxu0
    %v1146 = vadd.f32 0.0, %v1145
    %v1147 = vpop.f32.mrb[0].mxu0
    %v1148 = vpop.f32.mrb[0].mxu0
    %v1149 = vpop.f32.mrb[0].mxu0
    %1150 = vdwg.mxu0
    %1151 = vrot.lane.b32.xlu0 %v543, 64
    %v1152 = vpop.permute.xlu0 %1151
    %v1154 = vsel %vm552, %v1048, 0
    %v1157 = vsel %vm1059, %v1152, 0
    %1159 = vmatprep.subr.bf16.mxu0 0
    %1160 = vmatpush1.bf16.msra.mxu0 %v1157
    %1161 = vmatprep.subr.bf16.mxu0 0
    %1162 = vmatpush1.bf16.msra.mxu0 0
    %1163 = vmatprep.subr.bf16.mxu0 0
    %1164 = vmatpush1.bf16.msra.mxu0 0
    %1165 = vmatprep.subr.bf16.mxu0 0
    %1166 = vmatpush1.bf16.msra.mxu0 0
    %1167 = vmatprep.subr.bf16.mxu0 0
    %1168 = vmatpush1.bf16.msra.mxu0 0
    %1169 = vmatprep.subr.bf16.mxu0 0
    %1170 = vmatpush1.bf16.msra.mxu0 0
    %1171 = vmatprep.subr.bf16.mxu0 0
    %1172 = vmatpush1.bf16.msra.mxu0 0
    %1173 = vmatprep.subr.bf16.mxu0 0
    %1174 = vmatpush1.bf16.msra.mxu0 0
    %1175 = vmatprep.subr.bf16.mxu0 0
    %1176 = vmatpush1.bf16.msra.mxu0 0
    %1177 = vmatprep.subr.bf16.mxu0 0
    %1178 = vmatpush1.bf16.msra.mxu0 0
    %1179 = vmatprep.subr.bf16.mxu0 0
    %1180 = vmatpush1.bf16.msra.mxu0 0
    %1181 = vmatprep.subr.bf16.mxu0 0
    %1182 = vmatpush1.bf16.msra.mxu0 0
    %1183 = vmatprep.subr.bf16.mxu0 0
    %1184 = vmatpush1.bf16.msra.mxu0 0
    %1185 = vmatprep.subr.bf16.mxu0 0
    %1186 = vmatpush1.bf16.msra.mxu0 0
    %1187 = vmatprep.subr.bf16.mxu0 0
    %1188 = vmatpush1.bf16.msra.mxu0 0
    %1189 = vmatprep.subr.bf16.mxu0 0
    %1190 = vmatpush1.bf16.msra.mxu0 0
    %1191 = vmatprep.mubr.bf16.mxu0 0
    %1192 = vmatmul.mubr.bf16.gmra.mrb[0].mxu0 %v1154
    %v1193 = vpop.f32.mrb[0].mxu0
    %v1194 = vadd.f32 0.0, %v1193
    %v1195 = vpop.f32.mrb[0].mxu0
    %v1196 = vpop.f32.mrb[0].mxu0
    %v1197 = vpop.f32.mrb[0].mxu0
    %1198 = vdwg.mxu0
    %1199 = vrot.lane.b32.xlu0 %v544, 64
    %v1200 = vpop.permute.xlu0 %1199
    %v1202 = vsel %vm552, %v1049, 0
    %v1205 = vsel %vm1059, %v1200, 0
    %1207 = vmatprep.subr.bf16.mxu0 0
    %1208 = vmatpush1.bf16.msra.mxu0 %v1205
    %1209 = vmatprep.subr.bf16.mxu0 0
    %1210 = vmatpush1.bf16.msra.mxu0 0
    %1211 = vmatprep.subr.bf16.mxu0 0
    %1212 = vmatpush1.bf16.msra.mxu0 0
    %1213 = vmatprep.subr.bf16.mxu0 0
    %1214 = vmatpush1.bf16.msra.mxu0 0
    %1215 = vmatprep.subr.bf16.mxu0 0
    %1216 = vmatpush1.bf16.msra.mxu0 0
    %1217 = vmatprep.subr.bf16.mxu0 0
    %1218 = vmatpush1.bf16.msra.mxu0 0
    %1219 = vmatprep.subr.bf16.mxu0 0
    %1220 = vmatpush1.bf16.msra.mxu0 0
    %1221 = vmatprep.subr.bf16.mxu0 0
    %1222 = vmatpush1.bf16.msra.mxu0 0
    %1223 = vmatprep.subr.bf16.mxu0 0
    %1224 = vmatpush1.bf16.msra.mxu0 0
    %1225 = vmatprep.subr.bf16.mxu0 0
    %1226 = vmatpush1.bf16.msra.mxu0 0
    %1227 = vmatprep.subr.bf16.mxu0 0
    %1228 = vmatpush1.bf16.msra.mxu0 0
    %1229 = vmatprep.subr.bf16.mxu0 0
    %1230 = vmatpush1.bf16.msra.mxu0 0
    %1231 = vmatprep.subr.bf16.mxu0 0
    %1232 = vmatpush1.bf16.msra.mxu0 0
    %1233 = vmatprep.subr.bf16.mxu0 0
    %1234 = vmatpush1.bf16.msra.mxu0 0
    %1235 = vmatprep.subr.bf16.mxu0 0
    %1236 = vmatpush1.bf16.msra.mxu0 0
    %1237 = vmatprep.subr.bf16.mxu0 0
    %1238 = vmatpush1.bf16.msra.mxu0 0
    %1239 = vmatprep.mubr.bf16.mxu0 0
    %1240 = vmatmul.mubr.bf16.gmra.mrb[0].mxu0 %v1202
    %v1241 = vpop.f32.mrb[0].mxu0
    %v1242 = vadd.f32 0.0, %v1241
    %v1243 = vpop.f32.mrb[0].mxu0
    %v1244 = vpop.f32.mrb[0].mxu0
    %v1245 = vpop.f32.mrb[0].mxu0
    %1246 = vdwg.mxu0
    %1247 = vrot.lane.b32.xlu0 %v545, 64
    %v1248 = vpop.permute.xlu0 %1247
    %v1250 = vsel %vm552, %v1050, 0
    %v1253 = vsel %vm1059, %v1248, 0
    %1255 = vmatprep.subr.bf16.mxu0 0
    %1256 = vmatpush1.bf16.msra.mxu0 %v1253
    %1257 = vmatprep.subr.bf16.mxu0 0
    %1258 = vmatpush1.bf16.msra.mxu0 0
    %1259 = vmatprep.subr.bf16.mxu0 0
    %1260 = vmatpush1.bf16.msra.mxu0 0
    %1261 = vmatprep.subr.bf16.mxu0 0
    %1262 = vmatpush1.bf16.msra.mxu0 0
    %1263 = vmatprep.subr.bf16.mxu0 0
    %1264 = vmatpush1.bf16.msra.mxu0 0
    %1265 = vmatprep.subr.bf16.mxu0 0
    %1266 = vmatpush1.bf16.msra.mxu0 0
    %1267 = vmatprep.subr.bf16.mxu0 0
    %1268 = vmatpush1.bf16.msra.mxu0 0
    %1269 = vmatprep.subr.bf16.mxu0 0
    %1270 = vmatpush1.bf16.msra.mxu0 0
    %1271 = vmatprep.subr.bf16.mxu0 0
    %1272 = vmatpush1.bf16.msra.mxu0 0
    %1273 = vmatprep.subr.bf16.mxu0 0
    %1274 = vmatpush1.bf16.msra.mxu0 0
    %1275 = vmatprep.subr.bf16.mxu0 0
    %1276 = vmatpush1.bf16.msra.mxu0 0
    %1277 = vmatprep.subr.bf16.mxu0 0
    %1278 = vmatpush1.bf16.msra.mxu0 0
    %1279 = vmatprep.subr.bf16.mxu0 0
    %1280 = vmatpush1.bf16.msra.mxu0 0
    %1281 = vmatprep.subr.bf16.mxu0 0
    %1282 = vmatpush1.bf16.msra.mxu0 0
    %1283 = vmatprep.subr.bf16.mxu0 0
    %1284 = vmatpush1.bf16.msra.mxu0 0
    %1285 = vmatprep.subr.bf16.mxu0 0
    %1286 = vmatpush1.bf16.msra.mxu0 0
    %1287 = vmatprep.mubr.bf16.mxu0 0
    %1288 = vmatmul.mubr.bf16.gmra.mrb[0].mxu0 %v1250
    %v1289 = vpop.f32.mrb[0].mxu0
    %v1290 = vadd.f32 0.0, %v1289
    %v1291 = vpop.f32.mrb[0].mxu0
    %v1292 = vpop.f32.mrb[0].mxu0
    %v1293 = vpop.f32.mrb[0].mxu0
    %1294 = vdwg.mxu0
    %1295 = vrot.lane.b32.xlu0 %v546, 64
    %v1296 = vpop.permute.xlu0 %1295
    %v1298 = vsel %vm552, %v1051, 0
    %v1301 = vsel %vm1059, %v1296, 0
    %1303 = vmatprep.subr.bf16.mxu0 0
    %1304 = vmatpush1.bf16.msra.mxu0 %v1301
    %1305 = vmatprep.subr.bf16.mxu0 0
    %1306 = vmatpush1.bf16.msra.mxu0 0
    %1307 = vmatprep.subr.bf16.mxu0 0
    %1308 = vmatpush1.bf16.msra.mxu0 0
    %1309 = vmatprep.subr.bf16.mxu0 0
    %1310 = vmatpush1.bf16.msra.mxu0 0
    %1311 = vmatprep.subr.bf16.mxu0 0
    %1312 = vmatpush1.bf16.msra.mxu0 0
    %1313 = vmatprep.subr.bf16.mxu0 0
    %1314 = vmatpush1.bf16.msra.mxu0 0
    %1315 = vmatprep.subr.bf16.mxu0 0
    %1316 = vmatpush1.bf16.msra.mxu0 0
    %1317 = vmatprep.subr.bf16.mxu0 0
    %1318 = vmatpush1.bf16.msra.mxu0 0
    %1319 = vmatprep.subr.bf16.mxu0 0
    %1320 = vmatpush1.bf16.msra.mxu0 0
    %1321 = vmatprep.subr.bf16.mxu0 0
    %1322 = vmatpush1.bf16.msra.mxu0 0
    %1323 = vmatprep.subr.bf16.mxu0 0
    %1324 = vmatpush1.bf16.msra.mxu0 0
    %1325 = vmatprep.subr.bf16.mxu0 0
    %1326 = vmatpush1.bf16.msra.mxu0 0
    %1327 = vmatprep.subr.bf16.mxu0 0
    %1328 = vmatpush1.bf16.msra.mxu0 0
    %1329 = vmatprep.subr.bf16.mxu0 0
    %1330 = vmatpush1.bf16.msra.mxu0 0
    %1331 = vmatprep.subr.bf16.mxu0 0
    %1332 = vmatpush1.bf16.msra.mxu0 0
    %1333 = vmatprep.subr.bf16.mxu0 0
    %1334 = vmatpush1.bf16.msra.mxu0 0
    %1335 = vmatprep.mubr.bf16.mxu0 0
    %1336 = vmatmul.mubr.bf16.gmra.mrb[0].mxu0 %v1298
    %v1337 = vpop.f32.mrb[0].mxu0
    %v1338 = vadd.f32 0.0, %v1337
    %v1339 = vpop.f32.mrb[0].mxu0
    %v1340 = vpop.f32.mrb[0].mxu0
    %v1341 = vpop.f32.mrb[0].mxu0
    %1342 = vdwg.mxu0
    %1343 = vrot.lane.b32.xlu0 %v547, 64
    %v1344 = vpop.permute.xlu0 %1343
    %v1346 = vsel %vm552, %v1052, 0
    %v1349 = vsel %vm1059, %v1344, 0
    %1351 = vmatprep.subr.bf16.mxu0 0
    %1352 = vmatpush1.bf16.msra.mxu0 %v1349
    %1353 = vmatprep.subr.bf16.mxu0 0
    %1354 = vmatpush1.bf16.msra.mxu0 0
    %1355 = vmatprep.subr.bf16.mxu0 0
    %1356 = vmatpush1.bf16.msra.mxu0 0
    %1357 = vmatprep.subr.bf16.mxu0 0
    %1358 = vmatpush1.bf16.msra.mxu0 0
    %1359 = vmatprep.subr.bf16.mxu0 0
    %1360 = vmatpush1.bf16.msra.mxu0 0
    %1361 = vmatprep.subr.bf16.mxu0 0
    %1362 = vmatpush1.bf16.msra.mxu0 0
    %1363 = vmatprep.subr.bf16.mxu0 0
    %1364 = vmatpush1.bf16.msra.mxu0 0
    %1365 = vmatprep.subr.bf16.mxu0 0
    %1366 = vmatpush1.bf16.msra.mxu0 0
    %1367 = vmatprep.subr.bf16.mxu0 0
    %1368 = vmatpush1.bf16.msra.mxu0 0
    %1369 = vmatprep.subr.bf16.mxu0 0
    %1370 = vmatpush1.bf16.msra.mxu0 0
    %1371 = vmatprep.subr.bf16.mxu0 0
    %1372 = vmatpush1.bf16.msra.mxu0 0
    %1373 = vmatprep.subr.bf16.mxu0 0
    %1374 = vmatpush1.bf16.msra.mxu0 0
    %1375 = vmatprep.subr.bf16.mxu0 0
    %1376 = vmatpush1.bf16.msra.mxu0 0
    %1377 = vmatprep.subr.bf16.mxu0 0
    %1378 = vmatpush1.bf16.msra.mxu0 0
    %1379 = vmatprep.subr.bf16.mxu0 0
    %1380 = vmatpush1.bf16.msra.mxu0 0
    %1381 = vmatprep.subr.bf16.mxu0 0
    %1382 = vmatpush1.bf16.msra.mxu0 0
    %1383 = vmatprep.mubr.bf16.mxu0 0
    %1384 = vmatmul.mubr.bf16.gmra.mrb[0].mxu0 %v1346
    %v1385 = vpop.f32.mrb[0].mxu0
    %v1386 = vadd.f32 0.0, %v1385
    %v1387 = vpop.f32.mrb[0].mxu0
    %v1388 = vpop.f32.mrb[0].mxu0
    %v1389 = vpop.f32.mrb[0].mxu0
    %1390 = vdwg.mxu0
    %1391 = vrot.lane.b32.xlu0 %v548, 64
    %v1392 = vpop.permute.xlu0 %1391
    %v1394 = vsel %vm552, %v1053, 0
    %v1397 = vsel %vm1059, %v1392, 0
    %1399 = vmatprep.subr.bf16.mxu0 0
    %1400 = vmatpush1.bf16.msra.mxu0 %v1397
    %1401 = vmatprep.subr.bf16.mxu0 0
    %1402 = vmatpush1.bf16.msra.mxu0 0
    %1403 = vmatprep.subr.bf16.mxu0 0
    %1404 = vmatpush1.bf16.msra.mxu0 0
    %1405 = vmatprep.subr.bf16.mxu0 0
    %1406 = vmatpush1.bf16.msra.mxu0 0
    %1407 = vmatprep.subr.bf16.mxu0 0
    %1408 = vmatpush1.bf16.msra.mxu0 0
    %1409 = vmatprep.subr.bf16.mxu0 0
    %1410 = vmatpush1.bf16.msra.mxu0 0
    %1411 = vmatprep.subr.bf16.mxu0 0
    %1412 = vmatpush1.bf16.msra.mxu0 0
    %1413 = vmatprep.subr.bf16.mxu0 0
    %1414 = vmatpush1.bf16.msra.mxu0 0
    %1415 = vmatprep.subr.bf16.mxu0 0
    %1416 = vmatpush1.bf16.msra.mxu0 0
    %1417 = vmatprep.subr.bf16.mxu0 0
    %1418 = vmatpush1.bf16.msra.mxu0 0
    %1419 = vmatprep.subr.bf16.mxu0 0
    %1420 = vmatpush1.bf16.msra.mxu0 0
    %1421 = vmatprep.subr.bf16.mxu0 0
    %1422 = vmatpush1.bf16.msra.mxu0 0
    %1423 = vmatprep.subr.bf16.mxu0 0
    %1424 = vmatpush1.bf16.msra.mxu0 0
    %1425 = vmatprep.subr.bf16.mxu0 0
    %1426 = vmatpush1.bf16.msra.mxu0 0
    %1427 = vmatprep.subr.bf16.mxu0 0
    %1428 = vmatpush1.bf16.msra.mxu0 0
    %1429 = vmatprep.subr.bf16.mxu0 0
    %1430 = vmatpush1.bf16.msra.mxu0 0
    %1431 = vmatprep.mubr.bf16.mxu0 0
    %1432 = vmatmul.mubr.bf16.gmra.mrb[0].mxu0 %v1394
    %v1433 = vpop.f32.mrb[0].mxu0
    %v1434 = vadd.f32 0.0, %v1433
    %v1435 = vpop.f32.mrb[0].mxu0
    %v1436 = vpop.f32.mrb[0].mxu0
    %v1437 = vpop.f32.mrb[0].mxu0
    %1438 = vdwg.mxu0
    %1441 = vrot.lane.b32.xlu0 %v1194, 8
    %v1442 = vpop.permute.xlu0 %1441
    %1443 = vrot.lane.b32.xlu0 %v1242, 8
    %v1444 = vpop.permute.xlu0 %1443
    %1449 = vrot.lane.b32.xlu0 %v1290, 16
    %v1450 = vpop.permute.xlu0 %1449
    %1451 = vrot.lane.b32.xlu0 %v1338, 16
    %v1452 = vpop.permute.xlu0 %1451
    %1457 = vrot.lane.b32.xlu0 %v1386, 24
    %v1458 = vpop.permute.xlu0 %1457
    %1459 = vrot.lane.b32.xlu0 %v1434, 24
    %v1460 = vpop.permute.xlu0 %1459
    %v1463 = vsel %vm552, %v1098, %v1442
    %v1464 = vsel %vm552, %v1146, %v1444
    %vm1465 = vcmask 130048
    %v1466 = vsel %vm1465, %v1463, %v1450
    %v1467 = vsel %vm1465, %v1464, %v1452
    %vm1468 = vcmask 195584
    %v1469 = vsel %vm1468, %v1466, %v1458
    %v1470 = vsel %vm1468, %v1467, %v1460
    %v1471 = vpack.c.bf16 %v1470, %v1469
    %v1472 = vld [vmem:[%s9] sm:$0xf]
    %v1473 = vld [vmem:[%s9 + $0x4] sm:$0xf]
    %v1474 = vld [vmem:[%s9 + $0x8] sm:$0xf]
    %v1475 = vld [vmem:[%s9 + $0xc] sm:$0xf]
    %v1476 = vld [vmem:[#allocation8] sm:$0x1]
    %v1478 = vlaneseq
    %v1479 = vshrl.u32 %v1478, 7
    %v1480 = vsub.s32 0, %v1479
    %v1481 = vrot.slane %v1476, %v1480
    %v1487 = vunpack.c.l.b16 %v1472
    %v1488 = vunpack.c.l.b16 %v1473
    %v1489 = vunpack.c.l.b16 %v1474
    %v1490 = vunpack.c.l.b16 %v1475
    %v1491 = vpack.c.b16 %v1488, %v1487
    %v1492 = vpack.c.b16 %v1490, %v1489
    %v1496 = vsel %vm280, %v1471, 0
    %1498 = vmatprep.subr.bf16.mxu0 0
    %1499 = vmatpush1.bf16.msra.mxu0 %v1491
    %1500 = vmatprep.subr.bf16.mxu0 0
    %1501 = vmatpush1.bf16.msra.mxu0 %v1492
    %1502 = vmatprep.subr.bf16.mxu0 0
    %1503 = vmatpush1.bf16.msra.mxu0 0
    %1504 = vmatprep.subr.bf16.mxu0 0
    %1505 = vmatpush1.bf16.msra.mxu0 0
    %1506 = vmatprep.subr.bf16.mxu0 0
    %1507 = vmatpush1.bf16.msra.mxu0 0
    %1508 = vmatprep.subr.bf16.mxu0 0
    %1509 = vmatpush1.bf16.msra.mxu0 0
    %1510 = vmatprep.subr.bf16.mxu0 0
    %1511 = vmatpush1.bf16.msra.mxu0 0
    %1512 = vmatprep.subr.bf16.mxu0 0
    %1513 = vmatpush1.bf16.msra.mxu0 0
    %1514 = vmatprep.subr.bf16.mxu0 0
    %1515 = vmatpush1.bf16.msra.mxu0 0
    %1516 = vmatprep.subr.bf16.mxu0 0
    %1517 = vmatpush1.bf16.msra.mxu0 0
    %1518 = vmatprep.subr.bf16.mxu0 0
    %1519 = vmatpush1.bf16.msra.mxu0 0
    %1520 = vmatprep.subr.bf16.mxu0 0
    %1521 = vmatpush1.bf16.msra.mxu0 0
    %1522 = vmatprep.subr.bf16.mxu0 0
    %1523 = vmatpush1.bf16.msra.mxu0 0
    %1524 = vmatprep.subr.bf16.mxu0 0
    %1525 = vmatpush1.bf16.msra.mxu0 0
    %1526 = vmatprep.subr.bf16.mxu0 0
    %1527 = vmatpush1.bf16.msra.mxu0 0
    %1528 = vmatprep.subr.bf16.mxu0 0
    %1529 = vmatpush1.bf16.msra.mxu0 0
    %1530 = vmatprep.mubr.bf16.mxu0 0
    %1531 = vmatmul.mubr.bf16.gmra.mrb[0].mxu0 %v1496
    %v1532 = vpop.f32.mrb[0].mxu0
    %v1533 = vadd.f32 %v1481, %v1532
    %v1534 = vpop.f32.mrb[0].mxu0
    %v1535 = vpop.f32.mrb[0].mxu0
    %v1536 = vadd.f32 %v1481, %v1535
    %v1537 = vpop.f32.mrb[0].mxu0
    %1538 = vdwg.mxu0
    %v1539 = vadd.f32 %v1533, %v414
    %v1540 = vadd.f32 %v1536, %v415
    %v1541 = vld [vmem:[#allocation10] sm:$0x1]
    %v1542 = vld [vmem:[#allocation11] sm:$0x1]
    %v1543 = vsel %vm280, %v1539, 0.0
    %1544 = vadd.xlane.f32.xlu0 %v1543
    %v1545 = vpop.xlane.xlu0 %1544
    %v1546 = vsel %vm280, %v1540, 0.0
    %1547 = vadd.xlane.f32.xlu0 %v1546
    %v1548 = vpop.xlane.xlu0 %1547
    %v1549 = vmul.f32 %v1545, %v379
    %v1550 = vmul.f32 %v1548, %v379
    %v1551 = vsub.f32 %v1539, %v1549
    %v1552 = vsub.f32 %v1540, %v1550
    %v1553 = vmul.f32 %v1551, %v1551
    %v1554 = vmul.f32 %v1552, %v1552
    %v1555 = vsel %vm280, %v1553, 0.0
    %1556 = vadd.xlane.f32.xlu0 %v1555
    %v1557 = vpop.xlane.xlu0 %1556
    %v1558 = vsel %vm280, %v1554, 0.0
    %1559 = vadd.xlane.f32.xlu0 %v1558
    %v1560 = vpop.xlane.xlu0 %1559
    %v1561 = vmul.f32 %v1557, %v379
    %v1562 = vmul.f32 %v1560, %v379
    %v1563 = vadd.f32 %v1561, 1e-12
    %v1564 = vadd.f32 %v1562, 1e-12
    %v1565 = vrsqrt.pop %v1563
    %v1566 = vrsqrt.pop %v1564
    %v1567 = vmul.f32 %v1551, %v1565
    %v1568 = vmul.f32 %v1552, %v1566
    %v1570 = vlaneseq
    %v1571 = vshrl.u32 %v1570, 7
    %v1572 = vsub.s32 0, %v1571
    %v1573 = vrot.slane %v1541, %v1572
    %v1575 = vmul.f32 %v1567, %v1573
    %v1576 = vmul.f32 %v1568, %v1573
    %v1578 = vlaneseq
    %v1579 = vshrl.u32 %v1578, 7
    %v1580 = vsub.s32 0, %v1579
    %v1581 = vrot.slane %v1542, %v1580
    %v1583 = vadd.f32 %v1575, %v1581
    %v1584 = vadd.f32 %v1576, %v1581
    %v1585 = vpack.c.bf16 %v1584, %v1583
    %v1586 = vld [vmem:[%s13] sm:$0xf]
    %v1587 = vld [vmem:[%s13 + $0x4] sm:$0xf]
    %v1588 = vld [vmem:[%s13 + $0x8] sm:$0xf]
    %v1589 = vld [vmem:[%s13 + $0xc] sm:$0xf]
    %v1590 = vld [vmem:[#allocation13] sm:$0x1]
    %v1592 = vlaneseq
    %v1593 = vshrl.u32 %v1592, 7
    %v1594 = vsub.s32 0, %v1593
    %v1595 = vrot.slane %v1590, %v1594
    %v1601 = vunpack.c.l.b16 %v1586
    %v1602 = vunpack.c.l.b16 %v1587
    %v1603 = vunpack.c.l.b16 %v1588
    %v1604 = vunpack.c.l.b16 %v1589
    %v1605 = vpack.c.b16 %v1602, %v1601
    %v1606 = vpack.c.b16 %v1604, %v1603
    %v1610 = vsel %vm280, %v1585, 0
    %1612 = vmatprep.subr.bf16.mxu0 0
    %1613 = vmatpush1.bf16.msra.mxu0 %v1605
    %1614 = vmatprep.subr.bf16.mxu0 0
    %1615 = vmatpush1.bf16.msra.mxu0 %v1606
    %1616 = vmatprep.subr.bf16.mxu0 0
    %1617 = vmatpush1.bf16.msra.mxu0 0
    %1618 = vmatprep.subr.bf16.mxu0 0
    %1619 = vmatpush1.bf16.msra.mxu0 0
    %1620 = vmatprep.subr.bf16.mxu0 0
    %1621 = vmatpush1.bf16.msra.mxu0 0
    %1622 = vmatprep.subr.bf16.mxu0 0
    %1623 = vmatpush1.bf16.msra.mxu0 0
    %1624 = vmatprep.subr.bf16.mxu0 0
    %1625 = vmatpush1.bf16.msra.mxu0 0
    %1626 = vmatprep.subr.bf16.mxu0 0
    %1627 = vmatpush1.bf16.msra.mxu0 0
    %1628 = vmatprep.subr.bf16.mxu0 0
    %1629 = vmatpush1.bf16.msra.mxu0 0
    %1630 = vmatprep.subr.bf16.mxu0 0
    %1631 = vmatpush1.bf16.msra.mxu0 0
    %1632 = vmatprep.subr.bf16.mxu0 0
    %1633 = vmatpush1.bf16.msra.mxu0 0
    %1634 = vmatprep.subr.bf16.mxu0 0
    %1635 = vmatpush1.bf16.msra.mxu0 0
    %1636 = vmatprep.subr.bf16.mxu0 0
    %1637 = vmatpush1.bf16.msra.mxu0 0
    %1638 = vmatprep.subr.bf16.mxu0 0
    %1639 = vmatpush1.bf16.msra.mxu0 0
    %1640 = vmatprep.subr.bf16.mxu0 0
    %1641 = vmatpush1.bf16.msra.mxu0 0
    %1642 = vmatprep.subr.bf16.mxu0 0
    %1643 = vmatpush1.bf16.msra.mxu0 0
    %1644 = vmatprep.mubr.bf16.mxu0 0
    %1645 = vmatmul.mubr.bf16.gmra.mrb[0].mxu0 %v1610
    %v1646 = vpop.f32.mrb[0].mxu0
    %v1647 = vadd.f32 %v1595, %v1646
    %v1648 = vpop.f32.mrb[0].mxu0
    %v1649 = vpop.f32.mrb[0].mxu0
    %v1650 = vadd.f32 %v1595, %v1649
    %v1651 = vpop.f32.mrb[0].mxu0
    %1652 = vdwg.mxu0
    %v1653 = vmul.f32 %v1647, 0.5
    %v1654 = vmul.f32 %v1650, 0.5
    %v1655 = vmul.f32 %v1647, 0.044715
    %v1656 = vmul.f32 %v1650, 0.044715
    %v1657 = vmul.f32 %v1655, %v1647
    %v1658 = vmul.f32 %v1656, %v1650
    %v1659 = vmul.f32 %v1657, %v1647
    %v1660 = vmul.f32 %v1658, %v1650
    %v1661 = vadd.f32 %v1647, %v1659
    %v1662 = vadd.f32 %v1650, %v1660
    %v1663 = vmul.f32 %v1661, 0.7978846
    %v1664 = vmul.f32 %v1662, 0.7978846
    %v1665 = vtanh.pop %v1663
    %v1666 = vtanh.pop %v1664
    %v1667 = vadd.f32 %v1665, 1.0
    %v1668 = vadd.f32 %v1666, 1.0
    %v1669 = vmul.f32 %v1653, %v1667
    %v1670 = vmul.f32 %v1654, %v1668
    %v1671 = vpack.c.bf16 %v1670, %v1669
    %v1672 = vld [vmem:[%s15] sm:$0xf]
    %v1673 = vld [vmem:[%s15 + $0x4] sm:$0xf]
    %v1674 = vld [vmem:[%s15 + $0x8] sm:$0xf]
    %v1675 = vld [vmem:[%s15 + $0xc] sm:$0xf]
    %v1676 = vld [vmem:[%s15 + $0x10] sm:$0xf]
    %v1677 = vld [vmem:[%s15 + $0x14] sm:$0xf]
    %v1678 = vld [vmem:[%s15 + $0x18] sm:$0xf]
    %v1679 = vld [vmem:[%s15 + $0x1c] sm:$0xf]
    %v1680 = vld [vmem:[#allocation14] sm:$0x1]
    %v1682 = vlaneseq
    %v1683 = vshrl.u32 %v1682, 7
    %v1684 = vsub.s32 0, %v1683
    %v1685 = vrot.slane %v1680, %v1684
    %v1695 = vunpack.c.l.b16 %v1672
    %v1696 = vunpack.c.l.b16 %v1673
    %v1697 = vunpack.c.l.b16 %v1674
    %v1698 = vunpack.c.l.b16 %v1675
    %v1699 = vunpack.c.l.b16 %v1676
    %v1700 = vunpack.c.l.b16 %v1677
    %v1701 = vunpack.c.l.b16 %v1678
    %v1702 = vunpack.c.l.b16 %v1679
    %v1703 = vpack.c.b16 %v1696, %v1695
    %v1704 = vpack.c.b16 %v1698, %v1697
    %v1705 = vpack.c.b16 %v1700, %v1699
    %v1706 = vpack.c.b16 %v1702, %v1701
    %vm1711 = vcmask 523264
    %v1713 = vsel %vm1711, %v1671, 0
    %1715 = vmatprep.subr.bf16.mxu0 0
    %1716 = vmatpush1.bf16.msra.mxu0 %v1703
    %1717 = vmatprep.subr.bf16.mxu0 0
    %1718 = vmatpush1.bf16.msra.mxu0 %v1704
    %1719 = vmatprep.subr.bf16.mxu0 0
    %1720 = vmatpush1.bf16.msra.mxu0 %v1705
    %1721 = vmatprep.subr.bf16.mxu0 0
    %1722 = vmatpush1.bf16.msra.mxu0 %v1706
    %1723 = vmatprep.subr.bf16.mxu0 0
    %1724 = vmatpush1.bf16.msra.mxu0 0
    %1725 = vmatprep.subr.bf16.mxu0 0
    %1726 = vmatpush1.bf16.msra.mxu0 0
    %1727 = vmatprep.subr.bf16.mxu0 0
    %1728 = vmatpush1.bf16.msra.mxu0 0
    %1729 = vmatprep.subr.bf16.mxu0 0
    %1730 = vmatpush1.bf16.msra.mxu0 0
    %1731 = vmatprep.subr.bf16.mxu0 0
    %1732 = vmatpush1.bf16.msra.mxu0 0
    %1733 = vmatprep.subr.bf16.mxu0 0
    %1734 = vmatpush1.bf16.msra.mxu0 0
    %1735 = vmatprep.subr.bf16.mxu0 0
    %1736 = vmatpush1.bf16.msra.mxu0 0
    %1737 = vmatprep.subr.bf16.mxu0 0
    %1738 = vmatpush1.bf16.msra.mxu0 0
    %1739 = vmatprep.subr.bf16.mxu0 0
    %1740 = vmatpush1.bf16.msra.mxu0 0
    %1741 = vmatprep.subr.bf16.mxu0 0
    %1742 = vmatpush1.bf16.msra.mxu0 0
    %1743 = vmatprep.subr.bf16.mxu0 0
    %1744 = vmatpush1.bf16.msra.mxu0 0
    %1745 = vmatprep.subr.bf16.mxu0 0
    %1746 = vmatpush1.bf16.msra.mxu0 0
    %1747 = vmatprep.mubr.bf16.mxu0 0
    %1748 = vmatmul.mubr.bf16.gmra.mrb[0].mxu0 %v1713
    %v1749 = vpop.f32.mrb[0].mxu0
    %v1750 = vadd.f32 %v1685, %v1749
    %v1751 = vpop.f32.mrb[0].mxu0
    %v1752 = vpop.f32.mrb[0].mxu0
    %v1753 = vadd.f32 %v1685, %v1752
    %v1754 = vpop.f32.mrb[0].mxu0
    %1755 = vdwg.mxu0
    %v1756 = vadd.f32 %v1750, %v1583
    %v1757 = vadd.f32 %v1753, %v1584
    %v1758 = vld [vmem:[#allocation16] sm:$0x1]
    %v1759 = vld [vmem:[#allocation17] sm:$0x1]
    %v1760 = vsel %vm280, %v1756, 0.0
    %1761 = vadd.xlane.f32.xlu0 %v1760
    %v1762 = vpop.xlane.xlu0 %1761
    %v1763 = vsel %vm280, %v1757, 0.0
    %1764 = vadd.xlane.f32.xlu0 %v1763
    %v1765 = vpop.xlane.xlu0 %1764
    %v1766 = vmul.f32 %v1762, %v379
    %v1767 = vmul.f32 %v1765, %v379
    %v1768 = vsub.f32 %v1756, %v1766
    %v1769 = vsub.f32 %v1757, %v1767
    %v1770 = vmul.f32 %v1768, %v1768
    %v1771 = vmul.f32 %v1769, %v1769
    %v1772 = vsel %vm280, %v1770, 0.0
    %1773 = vadd.xlane.f32.xlu0 %v1772
    %v1774 = vpop.xlane.xlu0 %1773
    %v1775 = vsel %vm280, %v1771, 0.0
    %1776 = vadd.xlane.f32.xlu0 %v1775
    %v1777 = vpop.xlane.xlu0 %1776
    %v1778 = vmul.f32 %v1774, %v379
    %v1779 = vmul.f32 %v1777, %v379
    %v1780 = vadd.f32 %v1778, 1e-12
    %v1781 = vadd.f32 %v1779, 1e-12
    %v1782 = vrsqrt.pop %v1780
    %v1783 = vrsqrt.pop %v1781
    %v1784 = vmul.f32 %v1768, %v1782
    %v1785 = vmul.f32 %v1769, %v1783
    %v1787 = vlaneseq
    %v1788 = vshrl.u32 %v1787, 7
    %v1789 = vsub.s32 0, %v1788
    %v1790 = vrot.slane %v1758, %v1789
    %v1792 = vmul.f32 %v1784, %v1790
    %v1793 = vmul.f32 %v1785, %v1790
    %v1795 = vlaneseq
    %v1796 = vshrl.u32 %v1795, 7
    %v1797 = vsub.s32 0, %v1796
    %v1798 = vrot.slane %v1759, %v1797
    %v1800 = vadd.f32 %v1792, %v1798
    %v1801 = vadd.f32 %v1793, %v1798
    %v1802 = vpack.c.bf16 %v1801, %v1800
    %s1803 = scalar_lea.vmem %s7, 16
    %v1804 = vld [vmem:[%s1803] sm:$0xf]
    %v1805 = vld [vmem:[%s1803 + $0x4] sm:$0xf]
    %v1806 = vld [vmem:[%s1803 + $0x8] sm:$0xf]
    %v1807 = vld [vmem:[%s1803 + $0xc] sm:$0xf]
    %s1808 = scalar_lea.vmem [#allocation7], 1
    %v1809 = vld [vmem:[%s1808] sm:$0x1]
    %v1811 = vlaneseq
    %v1812 = vshrl.u32 %v1811, 7
    %v1813 = vsub.s32 0, %v1812
    %v1814 = vrot.slane %v1809, %v1813
    %v1820 = vunpack.c.l.b16 %v1804
    %v1821 = vunpack.c.l.b16 %v1805
    %v1822 = vunpack.c.l.b16 %v1806
    %v1823 = vunpack.c.l.b16 %v1807
    %v1824 = vpack.c.b16 %v1821, %v1820
    %v1825 = vpack.c.b16 %v1823, %v1822
    %v1829 = vsel %vm280, %v1802, 0
    %1831 = vmatprep.subr.bf16.mxu0 0
    %1832 = vmatpush1.bf16.msra.mxu0 %v1824
    %1833 = vmatprep.subr.bf16.mxu0 0
    %1834 = vmatpush1.bf16.msra.mxu0 %v1825
    %1835 = vmatprep.subr.bf16.mxu0 0
    %1836 = vmatpush1.bf16.msra.mxu0 0
    %1837 = vmatprep.subr.bf16.mxu0 0
    %1838 = vmatpush1.bf16.msra.mxu0 0
    %1839 = vmatprep.subr.bf16.mxu0 0
    %1840 = vmatpush1.bf16.msra.mxu0 0
    %1841 = vmatprep.subr.bf16.mxu0 0
    %1842 = vmatpush1.bf16.msra.mxu0 0
    %1843 = vmatprep.subr.bf16.mxu0 0
    %1844 = vmatpush1.bf16.msra.mxu0 0
    %1845 = vmatprep.subr.bf16.mxu0 0
    %1846 = vmatpush1.bf16.msra.mxu0 0
    %1847 = vmatprep.subr.bf16.mxu0 0
    %1848 = vmatpush1.bf16.msra.mxu0 0
    %1849 = vmatprep.subr.bf16.mxu0 0
    %1850 = vmatpush1.bf16.msra.mxu0 0
    %1851 = vmatprep.subr.bf16.mxu0 0
    %1852 = vmatpush1.bf16.msra.mxu0 0
    %1853 = vmatprep.subr.bf16.mxu0 0
    %1854 = vmatpush1.bf16.msra.mxu0 0
    %1855 = vmatprep.subr.bf16.mxu0 0
    %1856 = vmatpush1.bf16.msra.mxu0 0
    %1857 = vmatprep.subr.bf16.mxu0 0
    %1858 = vmatpush1.bf16.msra.mxu0 0
    %1859 = vmatprep.subr.bf16.mxu0 0
    %1860 = vmatpush1.bf16.msra.mxu0 0
    %1861 = vmatprep.subr.bf16.mxu0 0
    %1862 = vmatpush1.bf16.msra.mxu0 0
    %1863 = vmatprep.mubr.bf16.mxu0 0
    %1864 = vmatmul.mubr.bf16.gmra.mrb[0].mxu0 %v1829
    %v1865 = vpop.f32.mrb[0].mxu0
    %v1866 = vadd.f32 %v1814, %v1865
    %v1867 = vpop.f32.mrb[0].mxu0
    %v1868 = vpop.f32.mrb[0].mxu0
    %v1869 = vadd.f32 %v1814, %v1868
    %v1870 = vpop.f32.mrb[0].mxu0
    %1871 = vdwg.mxu0
    %1874 = vrot.lane.b32.xlu0 %v1866, 120
    %v1875 = vpop.permute.xlu0 %1874
    %1876 = vrot.lane.b32.xlu0 %v1869, 120
    %v1877 = vpop.permute.xlu0 %1876
    %1880 = vrot.lane.b32.xlu0 %v1866, 112
    %v1881 = vpop.permute.xlu0 %1880
    %1882 = vrot.lane.b32.xlu0 %v1869, 112
    %v1883 = vpop.permute.xlu0 %1882
    %1886 = vrot.lane.b32.xlu0 %v1866, 104
    %v1887 = vpop.permute.xlu0 %1886
    %1888 = vrot.lane.b32.xlu0 %v1869, 104
    %v1889 = vpop.permute.xlu0 %1888
    %v1892 = vpack.c.bf16 %v1866, %v1866
    %v1893 = vpack.c.bf16 %v1869, %v1869
    %v1894 = vpack.c.bf16 %v1875, %v1875
    %v1895 = vpack.c.bf16 %v1877, %v1877
    %v1896 = vpack.c.bf16 %v1881, %v1881
    %v1897 = vpack.c.bf16 %v1883, %v1883
    %v1898 = vpack.c.bf16 %v1887, %v1887
    %v1899 = vpack.c.bf16 %v1889, %v1889
    %1901 = vrot.lane.b32.xlu0 %v1892, 96
    %v1902 = vpop.permute.xlu0 %1901
    %v1904 = vsel %vm552, %v1892, 0
    %v1907 = vsel %vm552, %v1902, 0
    %1909 = vmatprep.subr.bf16.mxu0 0
    %1910 = vmatpush1.bf16.xpose.msra.mxu0 %v1907
    %1911 = vmatprep.subr.bf16.mxu0 0
    %1912 = vmatpush1.bf16.xpose.msra.mxu0 0
    %1913 = vmatprep.subr.bf16.mxu0 0
    %1914 = vmatpush1.bf16.xpose.msra.mxu0 0
    %1915 = vmatprep.subr.bf16.mxu0 0
    %1916 = vmatpush1.bf16.xpose.msra.mxu0 0
    %1917 = vmatprep.subr.bf16.mxu0 0
    %1918 = vmatpush1.bf16.xpose.msra.mxu0 0
    %1919 = vmatprep.subr.bf16.mxu0 0
    %1920 = vmatpush1.bf16.xpose.msra.mxu0 0
    %1921 = vmatprep.subr.bf16.mxu0 0
    %1922 = vmatpush1.bf16.xpose.msra.mxu0 0
    %1923 = vmatprep.subr.bf16.mxu0 0
    %1924 = vmatpush1.bf16.xpose.msra.mxu0 0
    %1925 = vmatprep.subr.bf16.mxu0 0
    %1926 = vmatpush1.bf16.xpose.msra.mxu0 0
    %1927 = vmatprep.subr.bf16.mxu0 0
    %1928 = vmatpush1.bf16.xpose.msra.mxu0 0
    %1929 = vmatprep.subr.bf16.mxu0 0
    %1930 = vmatpush1.bf16.xpose.msra.mxu0 0
    %1931 = vmatprep.subr.bf16.mxu0 0
    %1932 = vmatpush1.bf16.xpose.msra.mxu0 0
    %1933 = vmatprep.subr.bf16.mxu0 0
    %1934 = vmatpush1.bf16.xpose.msra.mxu0 0
    %1935 = vmatprep.subr.bf16.mxu0 0
    %1936 = vmatpush1.bf16.xpose.msra.mxu0 0
    %1937 = vmatprep.subr.bf16.mxu0 0
    %1938 = vmatpush1.bf16.xpose.msra.mxu0 0
    %1939 = vmatprep.subr.bf16.mxu0 0
    %1940 = vmatpush1.bf16.xpose.msra.mxu0 0
    %1941 = vmatprep.mubr.bf16.mxu0 0
    %1942 = vmatmul.mubr.bf16.gmra.mrb[0].mxu0 %v1904
    %v1943 = vpop.f32.mrb[0].mxu0
    %v1944 = vadd.f32 0.0, %v1943
    %v1945 = vpop.f32.mrb[0].mxu0
    %v1946 = vpop.f32.mrb[0].mxu0
    %v1947 = vpop.f32.mrb[0].mxu0
    %1948 = vdwg.mxu0
    %1950 = vrot.lane.b32.xlu0 %v1893, 96
    %v1951 = vpop.permute.xlu0 %1950
    %v1953 = vsel %vm552, %v1893, 0
    %v1956 = vsel %vm552, %v1951, 0
    %1958 = vmatprep.subr.bf16.mxu0 0
    %1959 = vmatpush1.bf16.xpose.msra.mxu0 %v1956
    %1960 = vmatprep.subr.bf16.mxu0 0
    %1961 = vmatpush1.bf16.xpose.msra.mxu0 0
    %1962 = vmatprep.subr.bf16.mxu0 0
    %1963 = vmatpush1.bf16.xpose.msra.mxu0 0
    %1964 = vmatprep.subr.bf16.mxu0 0
    %1965 = vmatpush1.bf16.xpose.msra.mxu0 0
    %1966 = vmatprep.subr.bf16.mxu0 0
    %1967 = vmatpush1.bf16.xpose.msra.mxu0 0
    %1968 = vmatprep.subr.bf16.mxu0 0
    %1969 = vmatpush1.bf16.xpose.msra.mxu0 0
    %1970 = vmatprep.subr.bf16.mxu0 0
    %1971 = vmatpush1.bf16.xpose.msra.mxu0 0
    %1972 = vmatprep.subr.bf16.mxu0 0
    %1973 = vmatpush1.bf16.xpose.msra.mxu0 0
    %1974 = vmatprep.subr.bf16.mxu0 0
    %1975 = vmatpush1.bf16.xpose.msra.mxu0 0
    %1976 = vmatprep.subr.bf16.mxu0 0
    %1977 = vmatpush1.bf16.xpose.msra.mxu0 0
    %1978 = vmatprep.subr.bf16.mxu0 0
    %1979 = vmatpush1.bf16.xpose.msra.mxu0 0
    %1980 = vmatprep.subr.bf16.mxu0 0
    %1981 = vmatpush1.bf16.xpose.msra.mxu0 0
    %1982 = vmatprep.subr.bf16.mxu0 0
    %1983 = vmatpush1.bf16.xpose.msra.mxu0 0
    %1984 = vmatprep.subr.bf16.mxu0 0
    %1985 = vmatpush1.bf16.xpose.msra.mxu0 0
    %1986 = vmatprep.subr.bf16.mxu0 0
    %1987 = vmatpush1.bf16.xpose.msra.mxu0 0
    %1988 = vmatprep.subr.bf16.mxu0 0
    %1989 = vmatpush1.bf16.xpose.msra.mxu0 0
    %1990 = vmatprep.mubr.bf16.mxu0 0
    %1991 = vmatmul.mubr.bf16.gmra.mrb[0].mxu0 %v1953
    %v1992 = vpop.f32.mrb[0].mxu0
    %v1993 = vadd.f32 0.0, %v1992
    %v1994 = vpop.f32.mrb[0].mxu0
    %v1995 = vpop.f32.mrb[0].mxu0
    %v1996 = vpop.f32.mrb[0].mxu0
    %1997 = vdwg.mxu0
    %1999 = vrot.lane.b32.xlu0 %v1894, 96
    %v2000 = vpop.permute.xlu0 %1999
    %v2002 = vsel %vm552, %v1894, 0
    %v2005 = vsel %vm552, %v2000, 0
    %2007 = vmatprep.subr.bf16.mxu0 0
    %2008 = vmatpush1.bf16.xpose.msra.mxu0 %v2005
    %2009 = vmatprep.subr.bf16.mxu0 0
    %2010 = vmatpush1.bf16.xpose.msra.mxu0 0
    %2011 = vmatprep.subr.bf16.mxu0 0
    %2012 = vmatpush1.bf16.xpose.msra.mxu0 0
    %2013 = vmatprep.subr.bf16.mxu0 0
    %2014 = vmatpush1.bf16.xpose.msra.mxu0 0
    %2015 = vmatprep.subr.bf16.mxu0 0
    %2016 = vmatpush1.bf16.xpose.msra.mxu0 0
    %2017 = vmatprep.subr.bf16.mxu0 0
    %2018 = vmatpush1.bf16.xpose.msra.mxu0 0
    %2019 = vmatprep.subr.bf16.mxu0 0
    %2020 = vmatpush1.bf16.xpose.msra.mxu0 0
    %2021 = vmatprep.subr.bf16.mxu0 0
    %2022 = vmatpush1.bf16.xpose.msra.mxu0 0
    %2023 = vmatprep.subr.bf16.mxu0 0
    %2024 = vmatpush1.bf16.xpose.msra.mxu0 0
    %2025 = vmatprep.subr.bf16.mxu0 0
    %2026 = vmatpush1.bf16.xpose.msra.mxu0 0
    %2027 = vmatprep.subr.bf16.mxu0 0
    %2028 = vmatpush1.bf16.xpose.msra.mxu0 0
    %2029 = vmatprep.subr.bf16.mxu0 0
    %2030 = vmatpush1.bf16.xpose.msra.mxu0 0
    %2031 = vmatprep.subr.bf16.mxu0 0
    %2032 = vmatpush1.bf16.xpose.msra.mxu0 0
    %2033 = vmatprep.subr.bf16.mxu0 0
    %2034 = vmatpush1.bf16.xpose.msra.mxu0 0
    %2035 = vmatprep.subr.bf16.mxu0 0
    %2036 = vmatpush1.bf16.xpose.msra.mxu0 0
    %2037 = vmatprep.subr.bf16.mxu0 0
    %2038 = vmatpush1.bf16.xpose.msra.mxu0 0
    %2039 = vmatprep.mubr.bf16.mxu0 0
    %2040 = vmatmul.mubr.bf16.gmra.mrb[0].mxu0 %v2002
    %v2041 = vpop.f32.mrb[0].mxu0
    %v2042 = vadd.f32 0.0, %v2041
    %v2043 = vpop.f32.mrb[0].mxu0
    %v2044 = vpop.f32.mrb[0].mxu0
    %v2045 = vpop.f32.mrb[0].mxu0
    %2046 = vdwg.mxu0
    %2048 = vrot.lane.b32.xlu0 %v1895, 96
    %v2049 = vpop.permute.xlu0 %2048
    %v2051 = vsel %vm552, %v1895, 0
    %v2054 = vsel %vm552, %v2049, 0
    %2056 = vmatprep.subr.bf16.mxu0 0
    %2057 = vmatpush1.bf16.xpose.msra.mxu0 %v2054
    %2058 = vmatprep.subr.bf16.mxu0 0
    %2059 = vmatpush1.bf16.xpose.msra.mxu0 0
    %2060 = vmatprep.subr.bf16.mxu0 0
    %2061 = vmatpush1.bf16.xpose.msra.mxu0 0
    %2062 = vmatprep.subr.bf16.mxu0 0
    %2063 = vmatpush1.bf16.xpose.msra.mxu0 0
    %2064 = vmatprep.subr.bf16.mxu0 0
    %2065 = vmatpush1.bf16.xpose.msra.mxu0 0
    %2066 = vmatprep.subr.bf16.mxu0 0
    %2067 = vmatpush1.bf16.xpose.msra.mxu0 0
    %2068 = vmatprep.subr.bf16.mxu0 0
    %2069 = vmatpush1.bf16.xpose.msra.mxu0 0
    %2070 = vmatprep.subr.bf16.mxu0 0
    %2071 = vmatpush1.bf16.xpose.msra.mxu0 0
    %2072 = vmatprep.subr.bf16.mxu0 0
    %2073 = vmatpush1.bf16.xpose.msra.mxu0 0
    %2074 = vmatprep.subr.bf16.mxu0 0
    %2075 = vmatpush1.bf16.xpose.msra.mxu0 0
    %2076 = vmatprep.subr.bf16.mxu0 0
    %2077 = vmatpush1.bf16.xpose.msra.mxu0 0
    %2078 = vmatprep.subr.bf16.mxu0 0
    %2079 = vmatpush1.bf16.xpose.msra.mxu0 0
    %2080 = vmatprep.subr.bf16.mxu0 0
    %2081 = vmatpush1.bf16.xpose.msra.mxu0 0
    %2082 = vmatprep.subr.bf16.mxu0 0
    %2083 = vmatpush1.bf16.xpose.msra.mxu0 0
    %2084 = vmatprep.subr.bf16.mxu0 0
    %2085 = vmatpush1.bf16.xpose.msra.mxu0 0
    %2086 = vmatprep.subr.bf16.mxu0 0
    %2087 = vmatpush1.bf16.xpose.msra.mxu0 0
    %2088 = vmatprep.mubr.bf16.mxu0 0
    %2089 = vmatmul.mubr.bf16.gmra.mrb[0].mxu0 %v2051
    %v2090 = vpop.f32.mrb[0].mxu0
    %v2091 = vadd.f32 0.0, %v2090
    %v2092 = vpop.f32.mrb[0].mxu0
    %v2093 = vpop.f32.mrb[0].mxu0
    %v2094 = vpop.f32.mrb[0].mxu0
    %2095 = vdwg.mxu0
    %2097 = vrot.lane.b32.xlu0 %v1896, 96
    %v2098 = vpop.permute.xlu0 %2097
    %v2100 = vsel %vm552, %v1896, 0
    %v2103 = vsel %vm552, %v2098, 0
    %2105 = vmatprep.subr.bf16.mxu0 0
    %2106 = vmatpush1.bf16.xpose.msra.mxu0 %v2103
    %2107 = vmatprep.subr.bf16.mxu0 0
    %2108 = vmatpush1.bf16.xpose.msra.mxu0 0
    %2109 = vmatprep.subr.bf16.mxu0 0
    %2110 = vmatpush1.bf16.xpose.msra.mxu0 0
    %2111 = vmatprep.subr.bf16.mxu0 0
    %2112 = vmatpush1.bf16.xpose.msra.mxu0 0
    %2113 = vmatprep.subr.bf16.mxu0 0
    %2114 = vmatpush1.bf16.xpose.msra.mxu0 0
    %2115 = vmatprep.subr.bf16.mxu0 0
    %2116 = vmatpush1.bf16.xpose.msra.mxu0 0
    %2117 = vmatprep.subr.bf16.mxu0 0
    %2118 = vmatpush1.bf16.xpose.msra.mxu0 0
    %2119 = vmatprep.subr.bf16.mxu0 0
    %2120 = vmatpush1.bf16.xpose.msra.mxu0 0
    %2121 = vmatprep.subr.bf16.mxu0 0
    %2122 = vmatpush1.bf16.xpose.msra.mxu0 0
    %2123 = vmatprep.subr.bf16.mxu0 0
    %2124 = vmatpush1.bf16.xpose.msra.mxu0 0
    %2125 = vmatprep.subr.bf16.mxu0 0
    %2126 = vmatpush1.bf16.xpose.msra.mxu0 0
    %2127 = vmatprep.subr.bf16.mxu0 0
    %2128 = vmatpush1.bf16.xpose.msra.mxu0 0
    %2129 = vmatprep.subr.bf16.mxu0 0
    %2130 = vmatpush1.bf16.xpose.msra.mxu0 0
    %2131 = vmatprep.subr.bf16.mxu0 0
    %2132 = vmatpush1.bf16.xpose.msra.mxu0 0
    %2133 = vmatprep.subr.bf16.mxu0 0
    %2134 = vmatpush1.bf16.xpose.msra.mxu0 0
    %2135 = vmatprep.subr.bf16.mxu0 0
    %2136 = vmatpush1.bf16.xpose.msra.mxu0 0
    %2137 = vmatprep.mubr.bf16.mxu0 0
    %2138 = vmatmul.mubr.bf16.gmra.mrb[0].mxu0 %v2100
    %v2139 = vpop.f32.mrb[0].mxu0
    %v2140 = vadd.f32 0.0, %v2139
    %v2141 = vpop.f32.mrb[0].mxu0
    %v2142 = vpop.f32.mrb[0].mxu0
    %v2143 = vpop.f32.mrb[0].mxu0
    %2144 = vdwg.mxu0
    %2146 = vrot.lane.b32.xlu0 %v1897, 96
    %v2147 = vpop.permute.xlu0 %2146
    %v2149 = vsel %vm552, %v1897, 0
    %v2152 = vsel %vm552, %v2147, 0
    %2154 = vmatprep.subr.bf16.mxu0 0
    %2155 = vmatpush1.bf16.xpose.msra.mxu0 %v2152
    %2156 = vmatprep.subr.bf16.mxu0 0
    %2157 = vmatpush1.bf16.xpose.msra.mxu0 0
    %2158 = vmatprep.subr.bf16.mxu0 0
    %2159 = vmatpush1.bf16.xpose.msra.mxu0 0
    %2160 = vmatprep.subr.bf16.mxu0 0
    %2161 = vmatpush1.bf16.xpose.msra.mxu0 0
    %2162 = vmatprep.subr.bf16.mxu0 0
    %2163 = vmatpush1.bf16.xpose.msra.mxu0 0
    %2164 = vmatprep.subr.bf16.mxu0 0
    %2165 = vmatpush1.bf16.xpose.msra.mxu0 0
    %2166 = vmatprep.subr.bf16.mxu0 0
    %2167 = vmatpush1.bf16.xpose.msra.mxu0 0
    %2168 = vmatprep.subr.bf16.mxu0 0
    %2169 = vmatpush1.bf16.xpose.msra.mxu0 0
    %2170 = vmatprep.subr.bf16.mxu0 0
    %2171 = vmatpush1.bf16.xpose.msra.mxu0 0
    %2172 = vmatprep.subr.bf16.mxu0 0
    %2173 = vmatpush1.bf16.xpose.msra.mxu0 0
    %2174 = vmatprep.subr.bf16.mxu0 0
    %2175 = vmatpush1.bf16.xpose.msra.mxu0 0
    %2176 = vmatprep.subr.bf16.mxu0 0
    %2177 = vmatpush1.bf16.xpose.msra.mxu0 0
    %2178 = vmatprep.subr.bf16.mxu0 0
    %2179 = vmatpush1.bf16.xpose.msra.mxu0 0
    %2180 = vmatprep.subr.bf16.mxu0 0
    %2181 = vmatpush1.bf16.xpose.msra.mxu0 0
    %2182 = vmatprep.subr.bf16.mxu0 0
    %2183 = vmatpush1.bf16.xpose.msra.mxu0 0
    %2184 = vmatprep.subr.bf16.mxu0 0
    %2185 = vmatpush1.bf16.xpose.msra.mxu0 0
    %2186 = vmatprep.mubr.bf16.mxu0 0
    %2187 = vmatmul.mubr.bf16.gmra.mrb[0].mxu0 %v2149
    %v2188 = vpop.f32.mrb[0].mxu0
    %v2189 = vadd.f32 0.0, %v2188
    %v2190 = vpop.f32.mrb[0].mxu0
    %v2191 = vpop.f32.mrb[0].mxu0
    %v2192 = vpop.f32.mrb[0].mxu0
    %2193 = vdwg.mxu0
    %2195 = vrot.lane.b32.xlu0 %v1898, 96
    %v2196 = vpop.permute.xlu0 %2195
    %v2198 = vsel %vm552, %v1898, 0
    %v2201 = vsel %vm552, %v2196, 0
    %2203 = vmatprep.subr.bf16.mxu0 0
    %2204 = vmatpush1.bf16.xpose.msra.mxu0 %v2201
    %2205 = vmatprep.subr.bf16.mxu0 0
    %2206 = vmatpush1.bf16.xpose.msra.mxu0 0
    %2207 = vmatprep.subr.bf16.mxu0 0
    %2208 = vmatpush1.bf16.xpose.msra.mxu0 0
    %2209 = vmatprep.subr.bf16.mxu0 0
    %2210 = vmatpush1.bf16.xpose.msra.mxu0 0
    %2211 = vmatprep.subr.bf16.mxu0 0
    %2212 = vmatpush1.bf16.xpose.msra.mxu0 0
    %2213 = vmatprep.subr.bf16.mxu0 0
    %2214 = vmatpush1.bf16.xpose.msra.mxu0 0
    %2215 = vmatprep.subr.bf16.mxu0 0
    %2216 = vmatpush1.bf16.xpose.msra.mxu0 0
    %2217 = vmatprep.subr.bf16.mxu0 0
    %2218 = vmatpush1.bf16.xpose.msra.mxu0 0
    %2219 = vmatprep.subr.bf16.mxu0 0
    %2220 = vmatpush1.bf16.xpose.msra.mxu0 0
    %2221 = vmatprep.subr.bf16.mxu0 0
    %2222 = vmatpush1.bf16.xpose.msra.mxu0 0
    %2223 = vmatprep.subr.bf16.mxu0 0
    %2224 = vmatpush1.bf16.xpose.msra.mxu0 0
    %2225 = vmatprep.subr.bf16.mxu0 0
    %2226 = vmatpush1.bf16.xpose.msra.mxu0 0
    %2227 = vmatprep.subr.bf16.mxu0 0
    %2228 = vmatpush1.bf16.xpose.msra.mxu0 0
    %2229 = vmatprep.subr.bf16.mxu0 0
    %2230 = vmatpush1.bf16.xpose.msra.mxu0 0
    %2231 = vmatprep.subr.bf16.mxu0 0
    %2232 = vmatpush1.bf16.xpose.msra.mxu0 0
    %2233 = vmatprep.subr.bf16.mxu0 0
    %2234 = vmatpush1.bf16.xpose.msra.mxu0 0
    %2235 = vmatprep.mubr.bf16.mxu0 0
    %2236 = vmatmul.mubr.bf16.gmra.mrb[0].mxu0 %v2198
    %v2237 = vpop.f32.mrb[0].mxu0
    %v2238 = vadd.f32 0.0, %v2237
    %v2239 = vpop.f32.mrb[0].mxu0
    %v2240 = vpop.f32.mrb[0].mxu0
    %v2241 = vpop.f32.mrb[0].mxu0
    %2242 = vdwg.mxu0
    %2244 = vrot.lane.b32.xlu0 %v1899, 96
    %v2245 = vpop.permute.xlu0 %2244
    %v2247 = vsel %vm552, %v1899, 0
    %v2250 = vsel %vm552, %v2245, 0
    %2252 = vmatprep.subr.bf16.mxu0 0
    %2253 = vmatpush1.bf16.xpose.msra.mxu0 %v2250
    %2254 = vmatprep.subr.bf16.mxu0 0
    %2255 = vmatpush1.bf16.xpose.msra.mxu0 0
    %2256 = vmatprep.subr.bf16.mxu0 0
    %2257 = vmatpush1.bf16.xpose.msra.mxu0 0
    %2258 = vmatprep.subr.bf16.mxu0 0
    %2259 = vmatpush1.bf16.xpose.msra.mxu0 0
    %2260 = vmatprep.subr.bf16.mxu0 0
    %2261 = vmatpush1.bf16.xpose.msra.mxu0 0
    %2262 = vmatprep.subr.bf16.mxu0 0
    %2263 = vmatpush1.bf16.xpose.msra.mxu0 0
    %2264 = vmatprep.subr.bf16.mxu0 0
    %2265 = vmatpush1.bf16.xpose.msra.mxu0 0
    %2266 = vmatprep.subr.bf16.mxu0 0
    %2267 = vmatpush1.bf16.xpose.msra.mxu0 0
    %2268 = vmatprep.subr.bf16.mxu0 0
    %2269 = vmatpush1.bf16.xpose.msra.mxu0 0
    %2270 = vmatprep.subr.bf16.mxu0 0
    %2271 = vmatpush1.bf16.xpose.msra.mxu0 0
    %2272 = vmatprep.subr.bf16.mxu0 0
    %2273 = vmatpush1.bf16.xpose.msra.mxu0 0
    %2274 = vmatprep.subr.bf16.mxu0 0
    %2275 = vmatpush1.bf16.xpose.msra.mxu0 0
    %2276 = vmatprep.subr.bf16.mxu0 0
    %2277 = vmatpush1.bf16.xpose.msra.mxu0 0
    %2278 = vmatprep.subr.bf16.mxu0 0
    %2279 = vmatpush1.bf16.xpose.msra.mxu0 0
    %2280 = vmatprep.subr.bf16.mxu0 0
    %2281 = vmatpush1.bf16.xpose.msra.mxu0 0
    %2282 = vmatprep.subr.bf16.mxu0 0
    %2283 = vmatpush1.bf16.xpose.msra.mxu0 0
    %2284 = vmatprep.mubr.bf16.mxu0 0
    %2285 = vmatmul.mubr.bf16.gmra.mrb[0].mxu0 %v2247
    %v2286 = vpop.f32.mrb[0].mxu0
    %v2287 = vadd.f32 0.0, %v2286
    %v2288 = vpop.f32.mrb[0].mxu0
    %v2289 = vpop.f32.mrb[0].mxu0
    %v2290 = vpop.f32.mrb[0].mxu0
    %2291 = vdwg.mxu0
    %v2292 = vmul.f32 %v1944, 0.35355338
    %v2293 = vmul.f32 %v1993, 0.35355338
    %v2294 = vmul.f32 %v2042, 0.35355338
    %v2295 = vmul.f32 %v2091, 0.35355338
    %v2296 = vmul.f32 %v2140, 0.35355338
    %v2297 = vmul.f32 %v2189, 0.35355338
    %v2298 = vmul.f32 %v2238, 0.35355338
    %v2299 = vmul.f32 %v2287, 0.35355338
    %v2300 = vadd.f32 %v2292, %v446
    %v2301 = vadd.f32 %v2293, %v450
    %v2302 = vadd.f32 %v2294, %v446
    %v2303 = vadd.f32 %v2295, %v450
    %v2304 = vadd.f32 %v2296, %v446
    %v2305 = vadd.f32 %v2297, %v450
    %v2306 = vadd.f32 %v2298, %v446
    %v2307 = vadd.f32 %v2299, %v450
    %v2308 = vsel %vm552, %v2300, -inf
    %2309 = vmax.xlane.f32.xlu0 %v2308
    %v2310 = vpop.xlane.xlu0 %2309
    %v2311 = vsel %vm552, %v2301, -inf
    %2312 = vmax.xlane.f32.xlu0 %v2311
    %v2313 = vpop.xlane.xlu0 %2312
    %v2314 = vsel %vm552, %v2302, -inf
    %2315 = vmax.xlane.f32.xlu0 %v2314
    %v2316 = vpop.xlane.xlu0 %2315
    %v2317 = vsel %vm552, %v2303, -inf
    %2318 = vmax.xlane.f32.xlu0 %v2317
    %v2319 = vpop.xlane.xlu0 %2318
    %v2320 = vsel %vm552, %v2304, -inf
    %2321 = vmax.xlane.f32.xlu0 %v2320
    %v2322 = vpop.xlane.xlu0 %2321
    %v2323 = vsel %vm552, %v2305, -inf
    %2324 = vmax.xlane.f32.xlu0 %v2323
    %v2325 = vpop.xlane.xlu0 %2324
    %v2326 = vsel %vm552, %v2306, -inf
    %2327 = vmax.xlane.f32.xlu0 %v2326
    %v2328 = vpop.xlane.xlu0 %2327
    %v2329 = vsel %vm552, %v2307, -inf
    %2330 = vmax.xlane.f32.xlu0 %v2329
    %v2331 = vpop.xlane.xlu0 %2330
    %v2332 = vsub.f32 %v2300, %v2310
    %v2333 = vsub.f32 %v2301, %v2313
    %v2334 = vsub.f32 %v2302, %v2316
    %v2335 = vsub.f32 %v2303, %v2319
    %v2336 = vsub.f32 %v2304, %v2322
    %v2337 = vsub.f32 %v2305, %v2325
    %v2338 = vsub.f32 %v2306, %v2328
    %v2339 = vsub.f32 %v2307, %v2331
    %v2340 = vmul.f32 %v2332, 1.442695
    %v2341 = vpow.pop %v2340
    %v2342 = vmul.f32 %v2333, 1.442695
    %v2343 = vpow.pop %v2342
    %v2344 = vmul.f32 %v2334, 1.442695
    %v2345 = vpow.pop %v2344
    %v2346 = vmul.f32 %v2335, 1.442695
    %v2347 = vpow.pop %v2346
    %v2348 = vmul.f32 %v2336, 1.442695
    %v2349 = vpow.pop %v2348
    %v2350 = vmul.f32 %v2337, 1.442695
    %v2351 = vpow.pop %v2350
    %v2352 = vmul.f32 %v2338, 1.442695
    %v2353 = vpow.pop %v2352
    %v2354 = vmul.f32 %v2339, 1.442695
    %v2355 = vpow.pop %v2354
    %v2356 = vsel %vm552, %v2341, 0.0
    %2357 = vadd.xlane.f32.xlu0 %v2356
    %v2358 = vpop.xlane.xlu0 %2357
    %v2359 = vsel %vm552, %v2343, 0.0
    %2360 = vadd.xlane.f32.xlu0 %v2359
    %v2361 = vpop.xlane.xlu0 %2360
    %v2362 = vsel %vm552, %v2345, 0.0
    %2363 = vadd.xlane.f32.xlu0 %v2362
    %v2364 = vpop.xlane.xlu0 %2363
    %v2365 = vsel %vm552, %v2347, 0.0
    %2366 = vadd.xlane.f32.xlu0 %v2365
    %v2367 = vpop.xlane.xlu0 %2366
    %v2368 = vsel %vm552, %v2349, 0.0
    %2369 = vadd.xlane.f32.xlu0 %v2368
    %v2370 = vpop.xlane.xlu0 %2369
    %v2371 = vsel %vm552, %v2351, 0.0
    %2372 = vadd.xlane.f32.xlu0 %v2371
    %v2373 = vpop.xlane.xlu0 %2372
    %v2374 = vsel %vm552, %v2353, 0.0
    %2375 = vadd.xlane.f32.xlu0 %v2374
    %v2376 = vpop.xlane.xlu0 %2375
    %v2377 = vsel %vm552, %v2355, 0.0
    %2378 = vadd.xlane.f32.xlu0 %v2377
    %v2379 = vpop.xlane.xlu0 %2378
    %v2380 = vrcp.pop %v2358
    %v2381 = vrcp.pop %v2361
    %v2382 = vrcp.pop %v2364
    %v2383 = vrcp.pop %v2367
    %v2384 = vrcp.pop %v2370
    %v2385 = vrcp.pop %v2373
    %v2386 = vrcp.pop %v2376
    %v2387 = vrcp.pop %v2379
    %v2388 = vmul.f32 %v2341, %v2380
    %v2389 = vmul.f32 %v2343, %v2381
    %v2390 = vmul.f32 %v2345, %v2382
    %v2391 = vmul.f32 %v2347, %v2383
    %v2392 = vmul.f32 %v2349, %v2384
    %v2393 = vmul.f32 %v2351, %v2385
    %v2394 = vmul.f32 %v2353, %v2386
    %v2395 = vmul.f32 %v2355, %v2387
    %v2396 = vpack.c.bf16 %v2388, %v2388
    %v2397 = vpack.c.bf16 %v2389, %v2389
    %v2398 = vpack.c.bf16 %v2390, %v2390
    %v2399 = vpack.c.bf16 %v2391, %v2391
    %v2400 = vpack.c.bf16 %v2392, %v2392
    %v2401 = vpack.c.bf16 %v2393, %v2393
    %v2402 = vpack.c.bf16 %v2394, %v2394
    %v2403 = vpack.c.bf16 %v2395, %v2395
    %2404 = vrot.lane.b32.xlu0 %v1892, 64
    %v2405 = vpop.permute.xlu0 %2404
    %v2407 = vsel %vm552, %v2396, 0
    %v2410 = vsel %vm1059, %v2405, 0
    %2412 = vmatprep.subr.bf16.mxu0 0
    %2413 = vmatpush1.bf16.msra.mxu0 %v2410
    %2414 = vmatprep.subr.bf16.mxu0 0
    %2415 = vmatpush1.bf16.msra.mxu0 0
    %2416 = vmatprep.subr.bf16.mxu0 0
    %2417 = vmatpush1.bf16.msra.mxu0 0
    %2418 = vmatprep.subr.bf16.mxu0 0
    %2419 = vmatpush1.bf16.msra.mxu0 0
    %2420 = vmatprep.subr.bf16.mxu0 0
    %2421 = vmatpush1.bf16.msra.mxu0 0
    %2422 = vmatprep.subr.bf16.mxu0 0
    %2423 = vmatpush1.bf16.msra.mxu0 0
    %2424 = vmatprep.subr.bf16.mxu0 0
    %2425 = vmatpush1.bf16.msra.mxu0 0
    %2426 = vmatprep.subr.bf16.mxu0 0
    %2427 = vmatpush1.bf16.msra.mxu0 0
    %2428 = vmatprep.subr.bf16.mxu0 0
    %2429 = vmatpush1.bf16.msra.mxu0 0
    %2430 = vmatprep.subr.bf16.mxu0 0
    %2431 = vmatpush1.bf16.msra.mxu0 0
    %2432 = vmatprep.subr.bf16.mxu0 0
    %2433 = vmatpush1.bf16.msra.mxu0 0
    %2434 = vmatprep.subr.bf16.mxu0 0
    %2435 = vmatpush1.bf16.msra.mxu0 0
    %2436 = vmatprep.subr.bf16.mxu0 0
    %2437 = vmatpush1.bf16.msra.mxu0 0
    %2438 = vmatprep.subr.bf16.mxu0 0
    %2439 = vmatpush1.bf16.msra.mxu0 0
    %2440 = vmatprep.subr.bf16.mxu0 0
    %2441 = vmatpush1.bf16.msra.mxu0 0
    %2442 = vmatprep.subr.bf16.mxu0 0
    %2443 = vmatpush1.bf16.msra.mxu0 0
    %2444 = vmatprep.mubr.bf16.mxu0 0
    %2445 = vmatmul.mubr.bf16.gmra.mrb[0].mxu0 %v2407
    %v2446 = vpop.f32.mrb[0].mxu0
    %v2447 = vadd.f32 0.0, %v2446
    %v2448 = vpop.f32.mrb[0].mxu0
    %v2449 = vpop.f32.mrb[0].mxu0
    %v2450 = vpop.f32.mrb[0].mxu0
    %2451 = vdwg.mxu0
    %2452 = vrot.lane.b32.xlu0 %v1893, 64
    %v2453 = vpop.permute.xlu0 %2452
    %v2455 = vsel %vm552, %v2397, 0
    %v2458 = vsel %vm1059, %v2453, 0
    %2460 = vmatprep.subr.bf16.mxu0 0
    %2461 = vmatpush1.bf16.msra.mxu0 %v2458
    %2462 = vmatprep.subr.bf16.mxu0 0
    %2463 = vmatpush1.bf16.msra.mxu0 0
    %2464 = vmatprep.subr.bf16.mxu0 0
    %2465 = vmatpush1.bf16.msra.mxu0 0
    %2466 = vmatprep.subr.bf16.mxu0 0
    %2467 = vmatpush1.bf16.msra.mxu0 0
    %2468 = vmatprep.subr.bf16.mxu0 0
    %2469 = vmatpush1.bf16.msra.mxu0 0
    %2470 = vmatprep.subr.bf16.mxu0 0
    %2471 = vmatpush1.bf16.msra.mxu0 0
    %2472 = vmatprep.subr.bf16.mxu0 0
    %2473 = vmatpush1.bf16.msra.mxu0 0
    %2474 = vmatprep.subr.bf16.mxu0 0
    %2475 = vmatpush1.bf16.msra.mxu0 0
    %2476 = vmatprep.subr.bf16.mxu0 0
    %2477 = vmatpush1.bf16.msra.mxu0 0
    %2478 = vmatprep.subr.bf16.mxu0 0
    %2479 = vmatpush1.bf16.msra.mxu0 0
    %2480 = vmatprep.subr.bf16.mxu0 0
    %2481 = vmatpush1.bf16.msra.mxu0 0
    %2482 = vmatprep.subr.bf16.mxu0 0
    %2483 = vmatpush1.bf16.msra.mxu0 0
    %2484 = vmatprep.subr.bf16.mxu0 0
    %2485 = vmatpush1.bf16.msra.mxu0 0
    %2486 = vmatprep.subr.bf16.mxu0 0
    %2487 = vmatpush1.bf16.msra.mxu0 0
    %2488 = vmatprep.subr.bf16.mxu0 0
    %2489 = vmatpush1.bf16.msra.mxu0 0
    %2490 = vmatprep.subr.bf16.mxu0 0
    %2491 = vmatpush1.bf16.msra.mxu0 0
    %2492 = vmatprep.mubr.bf16.mxu0 0
    %2493 = vmatmul.mubr.bf16.gmra.mrb[0].mxu0 %v2455
    %v2494 = vpop.f32.mrb[0].mxu0
    %v2495 = vadd.f32 0.0, %v2494
    %v2496 = vpop.f32.mrb[0].mxu0
    %v2497 = vpop.f32.mrb[0].mxu0
    %v2498 = vpop.f32.mrb[0].mxu0
    %2499 = vdwg.mxu0
    %2500 = vrot.lane.b32.xlu0 %v1894, 64
    %v2501 = vpop.permute.xlu0 %2500
    %v2503 = vsel %vm552, %v2398, 0
    %v2506 = vsel %vm1059, %v2501, 0
    %2508 = vmatprep.subr.bf16.mxu0 0
    %2509 = vmatpush1.bf16.msra.mxu0 %v2506
    %2510 = vmatprep.subr.bf16.mxu0 0
    %2511 = vmatpush1.bf16.msra.mxu0 0
    %2512 = vmatprep.subr.bf16.mxu0 0
    %2513 = vmatpush1.bf16.msra.mxu0 0
    %2514 = vmatprep.subr.bf16.mxu0 0
    %2515 = vmatpush1.bf16.msra.mxu0 0
    %2516 = vmatprep.subr.bf16.mxu0 0
    %2517 = vmatpush1.bf16.msra.mxu0 0
    %2518 = vmatprep.subr.bf16.mxu0 0
    %2519 = vmatpush1.bf16.msra.mxu0 0
    %2520 = vmatprep.subr.bf16.mxu0 0
    %2521 = vmatpush1.bf16.msra.mxu0 0
    %2522 = vmatprep.subr.bf16.mxu0 0
    %2523 = vmatpush1.bf16.msra.mxu0 0
    %2524 = vmatprep.subr.bf16.mxu0 0
    %2525 = vmatpush1.bf16.msra.mxu0 0
    %2526 = vmatprep.subr.bf16.mxu0 0
    %2527 = vmatpush1.bf16.msra.mxu0 0
    %2528 = vmatprep.subr.bf16.mxu0 0
    %2529 = vmatpush1.bf16.msra.mxu0 0
    %2530 = vmatprep.subr.bf16.mxu0 0
    %2531 = vmatpush1.bf16.msra.mxu0 0
    %2532 = vmatprep.subr.bf16.mxu0 0
    %2533 = vmatpush1.bf16.msra.mxu0 0
    %2534 = vmatprep.subr.bf16.mxu0 0
    %2535 = vmatpush1.bf16.msra.mxu0 0
    %2536 = vmatprep.subr.bf16.mxu0 0
    %2537 = vmatpush1.bf16.msra.mxu0 0
    %2538 = vmatprep.subr.bf16.mxu0 0
    %2539 = vmatpush1.bf16.msra.mxu0 0
    %2540 = vmatprep.mubr.bf16.mxu0 0
    %2541 = vmatmul.mubr.bf16.gmra.mrb[0].mxu0 %v2503
    %v2542 = vpop.f32.mrb[0].mxu0
    %v2543 = vadd.f32 0.0, %v2542
    %v2544 = vpop.f32.mrb[0].mxu0
    %v2545 = vpop.f32.mrb[0].mxu0
    %v2546 = vpop.f32.mrb[0].mxu0
    %2547 = vdwg.mxu0
    %2548 = vrot.lane.b32.xlu0 %v1895, 64
    %v2549 = vpop.permute.xlu0 %2548
    %v2551 = vsel %vm552, %v2399, 0
    %v2554 = vsel %vm1059, %v2549, 0
    %2556 = vmatprep.subr.bf16.mxu0 0
    %2557 = vmatpush1.bf16.msra.mxu0 %v2554
    %2558 = vmatprep.subr.bf16.mxu0 0
    %2559 = vmatpush1.bf16.msra.mxu0 0
    %2560 = vmatprep.subr.bf16.mxu0 0
    %2561 = vmatpush1.bf16.msra.mxu0 0
    %2562 = vmatprep.subr.bf16.mxu0 0
    %2563 = vmatpush1.bf16.msra.mxu0 0
    %2564 = vmatprep.subr.bf16.mxu0 0
    %2565 = vmatpush1.bf16.msra.mxu0 0
    %2566 = vmatprep.subr.bf16.mxu0 0
    %2567 = vmatpush1.bf16.msra.mxu0 0
    %2568 = vmatprep.subr.bf16.mxu0 0
    %2569 = vmatpush1.bf16.msra.mxu0 0
    %2570 = vmatprep.subr.bf16.mxu0 0
    %2571 = vmatpush1.bf16.msra.mxu0 0
    %2572 = vmatprep.subr.bf16.mxu0 0
    %2573 = vmatpush1.bf16.msra.mxu0 0
    %2574 = vmatprep.subr.bf16.mxu0 0
    %2575 = vmatpush1.bf16.msra.mxu0 0
    %2576 = vmatprep.subr.bf16.mxu0 0
    %2577 = vmatpush1.bf16.msra.mxu0 0
    %2578 = vmatprep.subr.bf16.mxu0 0
    %2579 = vmatpush1.bf16.msra.mxu0 0
    %2580 = vmatprep.subr.bf16.mxu0 0
    %2581 = vmatpush1.bf16.msra.mxu0 0
    %2582 = vmatprep.subr.bf16.mxu0 0
    %2583 = vmatpush1.bf16.msra.mxu0 0
    %2584 = vmatprep.subr.bf16.mxu0 0
    %2585 = vmatpush1.bf16.msra.mxu0 0
    %2586 = vmatprep.subr.bf16.mxu0 0
    %2587 = vmatpush1.bf16.msra.mxu0 0
    %2588 = vmatprep.mubr.bf16.mxu0 0
    %2589 = vmatmul.mubr.bf16.gmra.mrb[0].mxu0 %v2551
    %v2590 = vpop.f32.mrb[0].mxu0
    %v2591 = vadd.f32 0.0, %v2590
    %v2592 = vpop.f32.mrb[0].mxu0
    %v2593 = vpop.f32.mrb[0].mxu0
    %v2594 = vpop.f32.mrb[0].mxu0
    %2595 = vdwg.mxu0
    %2596 = vrot.lane.b32.xlu0 %v1896, 64
    %v2597 = vpop.permute.xlu0 %2596
    %v2599 = vsel %vm552, %v2400, 0
    %v2602 = vsel %vm1059, %v2597, 0
    %2604 = vmatprep.subr.bf16.mxu0 0
    %2605 = vmatpush1.bf16.msra.mxu0 %v2602
    %2606 = vmatprep.subr.bf16.mxu0 0
    %2607 = vmatpush1.bf16.msra.mxu0 0
    %2608 = vmatprep.subr.bf16.mxu0 0
    %2609 = vmatpush1.bf16.msra.mxu0 0
    %2610 = vmatprep.subr.bf16.mxu0 0
    %2611 = vmatpush1.bf16.msra.mxu0 0
    %2612 = vmatprep.subr.bf16.mxu0 0
    %2613 = vmatpush1.bf16.msra.mxu0 0
    %2614 = vmatprep.subr.bf16.mxu0 0
    %2615 = vmatpush1.bf16.msra.mxu0 0
    %2616 = vmatprep.subr.bf16.mxu0 0
    %2617 = vmatpush1.bf16.msra.mxu0 0
    %2618 = vmatprep.subr.bf16.mxu0 0
    %2619 = vmatpush1.bf16.msra.mxu0 0
    %2620 = vmatprep.subr.bf16.mxu0 0
    %2621 = vmatpush1.bf16.msra.mxu0 0
    %2622 = vmatprep.subr.bf16.mxu0 0
    %2623 = vmatpush1.bf16.msra.mxu0 0
    %2624 = vmatprep.subr.bf16.mxu0 0
    %2625 = vmatpush1.bf16.msra.mxu0 0
    %2626 = vmatprep.subr.bf16.mxu0 0
    %2627 = vmatpush1.bf16.msra.mxu0 0
    %2628 = vmatprep.subr.bf16.mxu0 0
    %2629 = vmatpush1.bf16.msra.mxu0 0
    %2630 = vmatprep.subr.bf16.mxu0 0
    %2631 = vmatpush1.bf16.msra.mxu0 0
    %2632 = vmatprep.subr.bf16.mxu0 0
    %2633 = vmatpush1.bf16.msra.mxu0 0
    %2634 = vmatprep.subr.bf16.mxu0 0
    %2635 = vmatpush1.bf16.msra.mxu0 0
    %2636 = vmatprep.mubr.bf16.mxu0 0
    %2637 = vmatmul.mubr.bf16.gmra.mrb[0].mxu0 %v2599
    %v2638 = vpop.f32.mrb[0].mxu0
    %v2639 = vadd.f32 0.0, %v2638
    %v2640 = vpop.f32.mrb[0].mxu0
    %v2641 = vpop.f32.mrb[0].mxu0
    %v2642 = vpop.f32.mrb[0].mxu0
    %2643 = vdwg.mxu0
    %2644 = vrot.lane.b32.xlu0 %v1897, 64
    %v2645 = vpop.permute.xlu0 %2644
    %v2647 = vsel %vm552, %v2401, 0
    %v2650 = vsel %vm1059, %v2645, 0
    %2652 = vmatprep.subr.bf16.mxu0 0
    %2653 = vmatpush1.bf16.msra.mxu0 %v2650
    %2654 = vmatprep.subr.bf16.mxu0 0
    %2655 = vmatpush1.bf16.msra.mxu0 0
    %2656 = vmatprep.subr.bf16.mxu0 0
    %2657 = vmatpush1.bf16.msra.mxu0 0
    %2658 = vmatprep.subr.bf16.mxu0 0
    %2659 = vmatpush1.bf16.msra.mxu0 0
    %2660 = vmatprep.subr.bf16.mxu0 0
    %2661 = vmatpush1.bf16.msra.mxu0 0
    %2662 = vmatprep.subr.bf16.mxu0 0
    %2663 = vmatpush1.bf16.msra.mxu0 0
    %2664 = vmatprep.subr.bf16.mxu0 0
    %2665 = vmatpush1.bf16.msra.mxu0 0
    %2666 = vmatprep.subr.bf16.mxu0 0
    %2667 = vmatpush1.bf16.msra.mxu0 0
    %2668 = vmatprep.subr.bf16.mxu0 0
    %2669 = vmatpush1.bf16.msra.mxu0 0
    %2670 = vmatprep.subr.bf16.mxu0 0
    %2671 = vmatpush1.bf16.msra.mxu0 0
    %2672 = vmatprep.subr.bf16.mxu0 0
    %2673 = vmatpush1.bf16.msra.mxu0 0
    %2674 = vmatprep.subr.bf16.mxu0 0
    %2675 = vmatpush1.bf16.msra.mxu0 0
    %2676 = vmatprep.subr.bf16.mxu0 0
    %2677 = vmatpush1.bf16.msra.mxu0 0
    %2678 = vmatprep.subr.bf16.mxu0 0
    %2679 = vmatpush1.bf16.msra.mxu0 0
    %2680 = vmatprep.subr.bf16.mxu0 0
    %2681 = vmatpush1.bf16.msra.mxu0 0
    %2682 = vmatprep.subr.bf16.mxu0 0
    %2683 = vmatpush1.bf16.msra.mxu0 0
    %2684 = vmatprep.mubr.bf16.mxu0 0
    %2685 = vmatmul.mubr.bf16.gmra.mrb[0].mxu0 %v2647
    %v2686 = vpop.f32.mrb[0].mxu0
    %v2687 = vadd.f32 0.0, %v2686
    %v2688 = vpop.f32.mrb[0].mxu0
    %v2689 = vpop.f32.mrb[0].mxu0
    %v2690 = vpop.f32.mrb[0].mxu0
    %2691 = vdwg.mxu0
    %2692 = vrot.lane.b32.xlu0 %v1898, 64
    %v2693 = vpop.permute.xlu0 %2692
    %v2695 = vsel %vm552, %v2402, 0
    %v2698 = vsel %vm1059, %v2693, 0
    %2700 = vmatprep.subr.bf16.mxu0 0
    %2701 = vmatpush1.bf16.msra.mxu0 %v2698
    %2702 = vmatprep.subr.bf16.mxu0 0
    %2703 = vmatpush1.bf16.msra.mxu0 0
    %2704 = vmatprep.subr.bf16.mxu0 0
    %2705 = vmatpush1.bf16.msra.mxu0 0
    %2706 = vmatprep.subr.bf16.mxu0 0
    %2707 = vmatpush1.bf16.msra.mxu0 0
    %2708 = vmatprep.subr.bf16.mxu0 0
    %2709 = vmatpush1.bf16.msra.mxu0 0
    %2710 = vmatprep.subr.bf16.mxu0 0
    %2711 = vmatpush1.bf16.msra.mxu0 0
    %2712 = vmatprep.subr.bf16.mxu0 0
    %2713 = vmatpush1.bf16.msra.mxu0 0
    %2714 = vmatprep.subr.bf16.mxu0 0
    %2715 = vmatpush1.bf16.msra.mxu0 0
    %2716 = vmatprep.subr.bf16.mxu0 0
    %2717 = vmatpush1.bf16.msra.mxu0 0
    %2718 = vmatprep.subr.bf16.mxu0 0
    %2719 = vmatpush1.bf16.msra.mxu0 0
    %2720 = vmatprep.subr.bf16.mxu0 0
    %2721 = vmatpush1.bf16.msra.mxu0 0
    %2722 = vmatprep.subr.bf16.mxu0 0
    %2723 = vmatpush1.bf16.msra.mxu0 0
    %2724 = vmatprep.subr.bf16.mxu0 0
    %2725 = vmatpush1.bf16.msra.mxu0 0
    %2726 = vmatprep.subr.bf16.mxu0 0
    %2727 = vmatpush1.bf16.msra.mxu0 0
    %2728 = vmatprep.subr.bf16.mxu0 0
    %2729 = vmatpush1.bf16.msra.mxu0 0
    %2730 = vmatprep.subr.bf16.mxu0 0
    %2731 = vmatpush1.bf16.msra.mxu0 0
    %2732 = vmatprep.mubr.bf16.mxu0 0
    %2733 = vmatmul.mubr.bf16.gmra.mrb[0].mxu0 %v2695
    %v2734 = vpop.f32.mrb[0].mxu0
    %v2735 = vadd.f32 0.0, %v2734
    %v2736 = vpop.f32.mrb[0].mxu0
    %v2737 = vpop.f32.mrb[0].mxu0
    %v2738 = vpop.f32.mrb[0].mxu0
    %2739 = vdwg.mxu0
    %2740 = vrot.lane.b32.xlu0 %v1899, 64
    %v2741 = vpop.permute.xlu0 %2740
    %v2743 = vsel %vm552, %v2403, 0
    %v2746 = vsel %vm1059, %v2741, 0
    %2748 = vmatprep.subr.bf16.mxu0 0
    %2749 = vmatpush1.bf16.msra.mxu0 %v2746
    %2750 = vmatprep.subr.bf16.mxu0 0
    %2751 = vmatpush1.bf16.msra.mxu0 0
    %2752 = vmatprep.subr.bf16.mxu0 0
    %2753 = vmatpush1.bf16.msra.mxu0 0
    %2754 = vmatprep.subr.bf16.mxu0 0
    %2755 = vmatpush1.bf16.msra.mxu0 0
    %2756 = vmatprep.subr.bf16.mxu0 0
    %2757 = vmatpush1.bf16.msra.mxu0 0
    %2758 = vmatprep.subr.bf16.mxu0 0
    %2759 = vmatpush1.bf16.msra.mxu0 0
    %2760 = vmatprep.subr.bf16.mxu0 0
    %2761 = vmatpush1.bf16.msra.mxu0 0
    %2762 = vmatprep.subr.bf16.mxu0 0
    %2763 = vmatpush1.bf16.msra.mxu0 0
    %2764 = vmatprep.subr.bf16.mxu0 0
    %2765 = vmatpush1.bf16.msra.mxu0 0
    %2766 = vmatprep.subr.bf16.mxu0 0
    %2767 = vmatpush1.bf16.msra.mxu0 0
    %2768 = vmatprep.subr.bf16.mxu0 0
    %2769 = vmatpush1.bf16.msra.mxu0 0
    %2770 = vmatprep.subr.bf16.mxu0 0
    %2771 = vmatpush1.bf16.msra.mxu0 0
    %2772 = vmatprep.subr.bf16.mxu0 0
    %2773 = vmatpush1.bf16.msra.mxu0 0
    %2774 = vmatprep.subr.bf16.mxu0 0
    %2775 = vmatpush1.bf16.msra.mxu0 0
    %2776 = vmatprep.subr.bf16.mxu0 0
    %2777 = vmatpush1.bf16.msra.mxu0 0
    %2778 = vmatprep.subr.bf16.mxu0 0
    %2779 = vmatpush1.bf16.msra.mxu0 0
    %2780 = vmatprep.mubr.bf16.mxu0 0
    %2781 = vmatmul.mubr.bf16.gmra.mrb[0].mxu0 %v2743
    %v2782 = vpop.f32.mrb[0].mxu0
    %v2783 = vadd.f32 0.0, %v2782
    %v2784 = vpop.f32.mrb[0].mxu0
    %v2785 = vpop.f32.mrb[0].mxu0
    %v2786 = vpop.f32.mrb[0].mxu0
    %2787 = vdwg.mxu0
    %2790 = vrot.lane.b32.xlu0 %v2543, 8
    %v2791 = vpop.permute.xlu0 %2790
    %2792 = vrot.lane.b32.xlu0 %v2591, 8
    %v2793 = vpop.permute.xlu0 %2792
    %2798 = vrot.lane.b32.xlu0 %v2639, 16
    %v2799 = vpop.permute.xlu0 %2798
    %2800 = vrot.lane.b32.xlu0 %v2687, 16
    %v2801 = vpop.permute.xlu0 %2800
    %2806 = vrot.lane.b32.xlu0 %v2735, 24
    %v2807 = vpop.permute.xlu0 %2806
    %2808 = vrot.lane.b32.xlu0 %v2783, 24
    %v2809 = vpop.permute.xlu0 %2808
    %v2812 = vsel %vm552, %v2447, %v2791
    %v2813 = vsel %vm552, %v2495, %v2793
    %v2814 = vsel %vm1465, %v2812, %v2799
    %v2815 = vsel %vm1465, %v2813, %v2801
    %v2816 = vsel %vm1468, %v2814, %v2807
    %v2817 = vsel %vm1468, %v2815, %v2809
    %v2818 = vpack.c.bf16 %v2817, %v2816
    %s2819 = scalar_lea.vmem %s9, 16
    %v2820 = vld [vmem:[%s2819] sm:$0xf]
    %v2821 = vld [vmem:[%s2819 + $0x4] sm:$0xf]
    %v2822 = vld [vmem:[%s2819 + $0x8] sm:$0xf]
    %v2823 = vld [vmem:[%s2819 + $0xc] sm:$0xf]
    %s2824 = scalar_lea.vmem [#allocation8], 1
    %v2825 = vld [vmem:[%s2824] sm:$0x1]
    %v2827 = vlaneseq
    %v2828 = vshrl.u32 %v2827, 7
    %v2829 = vsub.s32 0, %v2828
    %v2830 = vrot.slane %v2825, %v2829
    %v2836 = vunpack.c.l.b16 %v2820
    %v2837 = vunpack.c.l.b16 %v2821
    %v2838 = vunpack.c.l.b16 %v2822
    %v2839 = vunpack.c.l.b16 %v2823
    %v2840 = vpack.c.b16 %v2837, %v2836
    %v2841 = vpack.c.b16 %v2839, %v2838
    %v2845 = vsel %vm280, %v2818, 0
    %2847 = vmatprep.subr.bf16.mxu0 0
    %2848 = vmatpush1.bf16.msra.mxu0 %v2840
    %2849 = vmatprep.subr.bf16.mxu0 0
    %2850 = vmatpush1.bf16.msra.mxu0 %v2841
    %2851 = vmatprep.subr.bf16.mxu0 0
    %2852 = vmatpush1.bf16.msra.mxu0 0
    %2853 = vmatprep.subr.bf16.mxu0 0
    %2854 = vmatpush1.bf16.msra.mxu0 0
    %2855 = vmatprep.subr.bf16.mxu0 0
    %2856 = vmatpush1.bf16.msra.mxu0 0
    %2857 = vmatprep.subr.bf16.mxu0 0
    %2858 = vmatpush1.bf16.msra.mxu0 0
    %2859 = vmatprep.subr.bf16.mxu0 0
    %2860 = vmatpush1.bf16.msra.mxu0 0
    %2861 = vmatprep.subr.bf16.mxu0 0
    %2862 = vmatpush1.bf16.msra.mxu0 0
    %2863 = vmatprep.subr.bf16.mxu0 0
    %2864 = vmatpush1.bf16.msra.mxu0 0
    %2865 = vmatprep.subr.bf16.mxu0 0
    %2866 = vmatpush1.bf16.msra.mxu0 0
    %2867 = vmatprep.subr.bf16.mxu0 0
    %2868 = vmatpush1.bf16.msra.mxu0 0
    %2869 = vmatprep.subr.bf16.mxu0 0
    %2870 = vmatpush1.bf16.msra.mxu0 0
    %2871 = vmatprep.subr.bf16.mxu0 0
    %2872 = vmatpush1.bf16.msra.mxu0 0
    %2873 = vmatprep.subr.bf16.mxu0 0
    %2874 = vmatpush1.bf16.msra.mxu0 0
    %2875 = vmatprep.subr.bf16.mxu0 0
    %2876 = vmatpush1.bf16.msra.mxu0 0
    %2877 = vmatprep.subr.bf16.mxu0 0
    %2878 = vmatpush1.bf16.msra.mxu0 0
    %2879 = vmatprep.mubr.bf16.mxu0 0
    %2880 = vmatmul.mubr.bf16.gmra.mrb[0].mxu0 %v2845
    %v2881 = vpop.f32.mrb[0].mxu0
    %v2882 = vadd.f32 %v2830, %v2881
    %v2883 = vpop.f32.mrb[0].mxu0
    %v2884 = vpop.f32.mrb[0].mxu0
    %v2885 = vadd.f32 %v2830, %v2884
    %v2886 = vpop.f32.mrb[0].mxu0
    %2887 = vdwg.mxu0
    %v2888 = vadd.f32 %v2882, %v1800
    %v2889 = vadd.f32 %v2885, %v1801
    %s2890 = scalar_lea.vmem [#allocation10], 1
    %v2891 = vld [vmem:[%s2890] sm:$0x1]
    %s2892 = scalar_lea.vmem [#allocation11], 1
    %v2893 = vld [vmem:[%s2892] sm:$0x1]
    %v2894 = vsel %vm280, %v2888, 0.0
    %2895 = vadd.xlane.f32.xlu0 %v2894
    %v2896 = vpop.xlane.xlu0 %2895
    %v2897 = vsel %vm280, %v2889, 0.0
    %2898 = vadd.xlane.f32.xlu0 %v2897
    %v2899 = vpop.xlane.xlu0 %2898
    %v2900 = vmul.f32 %v2896, %v379
    %v2901 = vmul.f32 %v2899, %v379
    %v2902 = vsub.f32 %v2888, %v2900
    %v2903 = vsub.f32 %v2889, %v2901
    %v2904 = vmul.f32 %v2902, %v2902
    %v2905 = vmul.f32 %v2903, %v2903
    %v2906 = vsel %vm280, %v2904, 0.0
    %2907 = vadd.xlane.f32.xlu0 %v2906
    %v2908 = vpop.xlane.xlu0 %2907
    %v2909 = vsel %vm280, %v2905, 0.0
    %2910 = vadd.xlane.f32.xlu0 %v2909
    %v2911 = vpop.xlane.xlu0 %2910
    %v2912 = vmul.f32 %v2908, %v379
    %v2913 = vmul.f32 %v2911, %v379
    %v2914 = vadd.f32 %v2912, 1e-12
    %v2915 = vadd.f32 %v2913, 1e-12
    %v2916 = vrsqrt.pop %v2914
    %v2917 = vrsqrt.pop %v2915
    %v2918 = vmul.f32 %v2902, %v2916
    %v2919 = vmul.f32 %v2903, %v2917
    %v2921 = vlaneseq
    %v2922 = vshrl.u32 %v2921, 7
    %v2923 = vsub.s32 0, %v2922
    %v2924 = vrot.slane %v2891, %v2923
    %v2926 = vmul.f32 %v2918, %v2924
    %v2927 = vmul.f32 %v2919, %v2924
    %v2929 = vlaneseq
    %v2930 = vshrl.u32 %v2929, 7
    %v2931 = vsub.s32 0, %v2930
    %v2932 = vrot.slane %v2893, %v2931
    %v2934 = vadd.f32 %v2926, %v2932
    %v2935 = vadd.f32 %v2927, %v2932
    %v2936 = vpack.c.bf16 %v2935, %v2934
    %s2937 = scalar_lea.vmem %s13, 16
    %v2938 = vld [vmem:[%s2937] sm:$0xf]
    %v2939 = vld [vmem:[%s2937 + $0x4] sm:$0xf]
    %v2940 = vld [vmem:[%s2937 + $0x8] sm:$0xf]
    %v2941 = vld [vmem:[%s2937 + $0xc] sm:$0xf]
    %s2942 = scalar_lea.vmem [#allocation13], 1
    %v2943 = vld [vmem:[%s2942] sm:$0x1]
    %v2945 = vlaneseq
    %v2946 = vshrl.u32 %v2945, 7
    %v2947 = vsub.s32 0, %v2946
    %v2948 = vrot.slane %v2943, %v2947
    %v2954 = vunpack.c.l.b16 %v2938
    %v2955 = vunpack.c.l.b16 %v2939
    %v2956 = vunpack.c.l.b16 %v2940
    %v2957 = vunpack.c.l.b16 %v2941
    %v2958 = vpack.c.b16 %v2955, %v2954
    %v2959 = vpack.c.b16 %v2957, %v2956
    %v2963 = vsel %vm280, %v2936, 0
    %2965 = vmatprep.subr.bf16.mxu0 0
    %2966 = vmatpush1.bf16.msra.mxu0 %v2958
    %2967 = vmatprep.subr.bf16.mxu0 0
    %2968 = vmatpush1.bf16.msra.mxu0 %v2959
    %2969 = vmatprep.subr.bf16.mxu0 0
    %2970 = vmatpush1.bf16.msra.mxu0 0
    %2971 = vmatprep.subr.bf16.mxu0 0
    %2972 = vmatpush1.bf16.msra.mxu0 0
    %2973 = vmatprep.subr.bf16.mxu0 0
    %2974 = vmatpush1.bf16.msra.mxu0 0
    %2975 = vmatprep.subr.bf16.mxu0 0
    %2976 = vmatpush1.bf16.msra.mxu0 0
    %2977 = vmatprep.subr.bf16.mxu0 0
    %2978 = vmatpush1.bf16.msra.mxu0 0
    %2979 = vmatprep.subr.bf16.mxu0 0
    %2980 = vmatpush1.bf16.msra.mxu0 0
    %2981 = vmatprep.subr.bf16.mxu0 0
    %2982 = vmatpush1.bf16.msra.mxu0 0
    %2983 = vmatprep.subr.bf16.mxu0 0
    %2984 = vmatpush1.bf16.msra.mxu0 0
    %2985 = vmatprep.subr.bf16.mxu0 0
    %2986 = vmatpush1.bf16.msra.mxu0 0
    %2987 = vmatprep.subr.bf16.mxu0 0
    %2988 = vmatpush1.bf16.msra.mxu0 0
    %2989 = vmatprep.subr.bf16.mxu0 0
    %2990 = vmatpush1.bf16.msra.mxu0 0
    %2991 = vmatprep.subr.bf16.mxu0 0
    %2992 = vmatpush1.bf16.msra.mxu0 0
    %2993 = vmatprep.subr.bf16.mxu0 0
    %2994 = vmatpush1.bf16.msra.mxu0 0
    %2995 = vmatprep.subr.bf16.mxu0 0
    %2996 = vmatpush1.bf16.msra.mxu0 0
    %2997 = vmatprep.mubr.bf16.mxu0 0
    %2998 = vmatmul.mubr.bf16.gmra.mrb[0].mxu0 %v2963
    %v2999 = vpop.f32.mrb[0].mxu0
    %v3000 = vadd.f32 %v2948, %v2999
    %v3001 = vpop.f32.mrb[0].mxu0
    %v3002 = vpop.f32.mrb[0].mxu0
    %v3003 = vadd.f32 %v2948, %v3002
    %v3004 = vpop.f32.mrb[0].mxu0
    %3005 = vdwg.mxu0
    %v3006 = vmul.f32 %v3000, 0.5
    %v3007 = vmul.f32 %v3003, 0.5
    %v3008 = vmul.f32 %v3000, 0.044715
    %v3009 = vmul.f32 %v3003, 0.044715
    %v3010 = vmul.f32 %v3008, %v3000
    %v3011 = vmul.f32 %v3009, %v3003
    %v3012 = vmul.f32 %v3010, %v3000
    %v3013 = vmul.f32 %v3011, %v3003
    %v3014 = vadd.f32 %v3000, %v3012
    %v3015 = vadd.f32 %v3003, %v3013
    %v3016 = vmul.f32 %v3014, 0.7978846
    %v3017 = vmul.f32 %v3015, 0.7978846
    %v3018 = vtanh.pop %v3016
    %v3019 = vtanh.pop %v3017
    %v3020 = vadd.f32 %v3018, 1.0
    %v3021 = vadd.f32 %v3019, 1.0
    %v3022 = vmul.f32 %v3006, %v3020
    %v3023 = vmul.f32 %v3007, %v3021
    %v3024 = vpack.c.bf16 %v3023, %v3022
    %s3025 = scalar_lea.vmem %s15, 32
    %v3026 = vld [vmem:[%s3025] sm:$0xf]
    %v3027 = vld [vmem:[%s3025 + $0x4] sm:$0xf]
    %v3028 = vld [vmem:[%s3025 + $0x8] sm:$0xf]
    %v3029 = vld [vmem:[%s3025 + $0xc] sm:$0xf]
    %v3030 = vld [vmem:[%s3025 + $0x10] sm:$0xf]
    %v3031 = vld [vmem:[%s3025 + $0x14] sm:$0xf]
    %v3032 = vld [vmem:[%s3025 + $0x18] sm:$0xf]
    %v3033 = vld [vmem:[%s3025 + $0x1c] sm:$0xf]
    %s3034 = scalar_lea.vmem [#allocation14], 1
    %v3035 = vld [vmem:[%s3034] sm:$0x1]
    %v3037 = vlaneseq
    %v3038 = vshrl.u32 %v3037, 7
    %v3039 = vsub.s32 0, %v3038
    %v3040 = vrot.slane %v3035, %v3039
    %v3050 = vunpack.c.l.b16 %v3026
    %v3051 = vunpack.c.l.b16 %v3027
    %v3052 = vunpack.c.l.b16 %v3028
    %v3053 = vunpack.c.l.b16 %v3029
    %v3054 = vunpack.c.l.b16 %v3030
    %v3055 = vunpack.c.l.b16 %v3031
    %v3056 = vunpack.c.l.b16 %v3032
    %v3057 = vunpack.c.l.b16 %v3033
    %v3058 = vpack.c.b16 %v3051, %v3050
    %v3059 = vpack.c.b16 %v3053, %v3052
    %v3060 = vpack.c.b16 %v3055, %v3054
    %v3061 = vpack.c.b16 %v3057, %v3056
    %v3067 = vsel %vm1711, %v3024, 0
    %3069 = vmatprep.subr.bf16.mxu0 0
    %3070 = vmatpush1.bf16.msra.mxu0 %v3058
    %3071 = vmatprep.subr.bf16.mxu0 0
    %3072 = vmatpush1.bf16.msra.mxu0 %v3059
    %3073 = vmatprep.subr.bf16.mxu0 0
    %3074 = vmatpush1.bf16.msra.mxu0 %v3060
    %3075 = vmatprep.subr.bf16.mxu0 0
    %3076 = vmatpush1.bf16.msra.mxu0 %v3061
    %3077 = vmatprep.subr.bf16.mxu0 0
    %3078 = vmatpush1.bf16.msra.mxu0 0
    %3079 = vmatprep.subr.bf16.mxu0 0
    %3080 = vmatpush1.bf16.msra.mxu0 0
    %3081 = vmatprep.subr.bf16.mxu0 0
    %3082 = vmatpush1.bf16.msra.mxu0 0
    %3083 = vmatprep.subr.bf16.mxu0 0
    %3084 = vmatpush1.bf16.msra.mxu0 0
    %3085 = vmatprep.subr.bf16.mxu0 0
    %3086 = vmatpush1.bf16.msra.mxu0 0
    %3087 = vmatprep.subr.bf16.mxu0 0
    %3088 = vmatpush1.bf16.msra.mxu0 0
    %3089 = vmatprep.subr.bf16.mxu0 0
    %3090 = vmatpush1.bf16.msra.mxu0 0
    %3091 = vmatprep.subr.bf16.mxu0 0
    %3092 = vmatpush1.bf16.msra.mxu0 0
    %3093 = vmatprep.subr.bf16.mxu0 0
    %3094 = vmatpush1.bf16.msra.mxu0 0
    %3095 = vmatprep.subr.bf16.mxu0 0
    %3096 = vmatpush1.bf16.msra.mxu0 0
    %3097 = vmatprep.subr.bf16.mxu0 0
    %3098 = vmatpush1.bf16.msra.mxu0 0
    %3099 = vmatprep.subr.bf16.mxu0 0
    %3100 = vmatpush1.bf16.msra.mxu0 0
    %3101 = vmatprep.mubr.bf16.mxu0 0
    %3102 = vmatmul.mubr.bf16.gmra.mrb[0].mxu0 %v3067
    %v3103 = vpop.f32.mrb[0].mxu0
    %v3104 = vadd.f32 %v3040, %v3103
    %v3105 = vpop.f32.mrb[0].mxu0
    %v3106 = vpop.f32.mrb[0].mxu0
    %v3107 = vadd.f32 %v3040, %v3106
    %v3108 = vpop.f32.mrb[0].mxu0
    %3109 = vdwg.mxu0
    %v3110 = vadd.f32 %v3104, %v2934
    %v3111 = vadd.f32 %v3107, %v2935
    %s3112 = scalar_lea.vmem [#allocation16], 1
    %v3113 = vld [vmem:[%s3112] sm:$0x1]
    %s3114 = scalar_lea.vmem [#allocation17], 1
    %v3115 = vld [vmem:[%s3114] sm:$0x1]
    %v3116 = vsel %vm280, %v3110, 0.0
    %3117 = vadd.xlane.f32.xlu0 %v3116
    %v3118 = vpop.xlane.xlu0 %3117
    %v3119 = vsel %vm280, %v3111, 0.0
    %3120 = vadd.xlane.f32.xlu0 %v3119
    %v3121 = vpop.xlane.xlu0 %3120
    %v3122 = vmul.f32 %v3118, %v379
    %v3123 = vmul.f32 %v3121, %v379
    %v3124 = vsub.f32 %v3110, %v3122
    %v3125 = vsub.f32 %v3111, %v3123
    %v3126 = vmul.f32 %v3124, %v3124
    %v3127 = vmul.f32 %v3125, %v3125
    %v3128 = vsel %vm280, %v3126, 0.0
    %3129 = vadd.xlane.f32.xlu0 %v3128
    %v3130 = vpop.xlane.xlu0 %3129
    %v3131 = vsel %vm280, %v3127, 0.0
    %3132 = vadd.xlane.f32.xlu0 %v3131
    %v3133 = vpop.xlane.xlu0 %3132
    %v3134 = vmul.f32 %v3130, %v379
    %v3135 = vmul.f32 %v3133, %v379
    %v3136 = vadd.f32 %v3134, 1e-12
    %v3137 = vadd.f32 %v3135, 1e-12
    %v3138 = vrsqrt.pop %v3136
    %v3139 = vrsqrt.pop %v3137
    %v3140 = vmul.f32 %v3124, %v3138
    %v3141 = vmul.f32 %v3125, %v3139
    %v3143 = vlaneseq
    %v3144 = vshrl.u32 %v3143, 7
    %v3145 = vsub.s32 0, %v3144
    %v3146 = vrot.slane %v3113, %v3145
    %v3148 = vmul.f32 %v3140, %v3146
    %v3149 = vmul.f32 %v3141, %v3146
    %v3151 = vlaneseq
    %v3152 = vshrl.u32 %v3151, 7
    %v3153 = vsub.s32 0, %v3152
    %v3154 = vrot.slane %v3115, %v3153
    %v3156 = vadd.f32 %v3148, %v3154
    %v3157 = vadd.f32 %v3149, %v3154
    %v3159 = vrot.slane %v3157, 7
    %vm3161 = vcmask 1040384
    %v3162 = vsel %vm3161, %v3156, %v3159
    %v3163 = vpack.c.bf16 %v3162, %v3162
    %v3164 = vld [vmem:[#allocation19] sm:$0xf]
    %v3165 = vld [vmem:[#allocation19 + $0x4] sm:$0xf]
    %v3166 = vld [vmem:[#allocation19 + $0x8] sm:$0xf]
    %v3167 = vld [vmem:[#allocation19 + $0xc] sm:$0xf]
    %v3168 = vld [vmem:[#allocation20] sm:$0x1]
    %v3170 = vlaneseq
    %v3171 = vshrl.u32 %v3170, 7
    %v3172 = vsub.s32 0, %v3171
    %v3173 = vrot.slane %v3168, %v3172
    %v3179 = vunpack.c.l.b16 %v3164
    %v3180 = vunpack.c.l.b16 %v3165
    %v3181 = vunpack.c.l.b16 %v3166
    %v3182 = vunpack.c.l.b16 %v3167
    %v3183 = vpack.c.b16 %v3180, %v3179
    %v3184 = vpack.c.b16 %v3182, %v3181
    %v3188 = vsel %vm280, %v3163, 0
    %3190 = vmatprep.subr.bf16.mxu0 0
    %3191 = vmatpush1.bf16.msra.mxu0 %v3183
    %3192 = vmatprep.subr.bf16.mxu0 0
    %3193 = vmatpush1.bf16.msra.mxu0 %v3184
    %3194 = vmatprep.subr.bf16.mxu0 0
    %3195 = vmatpush1.bf16.msra.mxu0 0
    %3196 = vmatprep.subr.bf16.mxu0 0
    %3197 = vmatpush1.bf16.msra.mxu0 0
    %3198 = vmatprep.subr.bf16.mxu0 0
    %3199 = vmatpush1.bf16.msra.mxu0 0
    %3200 = vmatprep.subr.bf16.mxu0 0
    %3201 = vmatpush1.bf16.msra.mxu0 0
    %3202 = vmatprep.subr.bf16.mxu0 0
    %3203 = vmatpush1.bf16.msra.mxu0 0
    %3204 = vmatprep.subr.bf16.mxu0 0
    %3205 = vmatpush1.bf16.msra.mxu0 0
    %3206 = vmatprep.subr.bf16.mxu0 0
    %3207 = vmatpush1.bf16.msra.mxu0 0
    %3208 = vmatprep.subr.bf16.mxu0 0
    %3209 = vmatpush1.bf16.msra.mxu0 0
    %3210 = vmatprep.subr.bf16.mxu0 0
    %3211 = vmatpush1.bf16.msra.mxu0 0
    %3212 = vmatprep.subr.bf16.mxu0 0
    %3213 = vmatpush1.bf16.msra.mxu0 0
    %3214 = vmatprep.subr.bf16.mxu0 0
    %3215 = vmatpush1.bf16.msra.mxu0 0
    %3216 = vmatprep.subr.bf16.mxu0 0
    %3217 = vmatpush1.bf16.msra.mxu0 0
    %3218 = vmatprep.subr.bf16.mxu0 0
    %3219 = vmatpush1.bf16.msra.mxu0 0
    %3220 = vmatprep.subr.bf16.mxu0 0
    %3221 = vmatpush1.bf16.msra.mxu0 0
    %3222 = vmatprep.mubr.bf16.mxu0 0
    %3223 = vmatmul.mubr.bf16.gmra.mrb[0].mxu0 %v3188
    %v3224 = vpop.f32.mrb[0].mxu0
    %v3225 = vadd.f32 %v3173, %v3224
    %v3226 = vpop.f32.mrb[0].mxu0
    %v3227 = vpop.f32.mrb[0].mxu0
    %v3228 = vpop.f32.mrb[0].mxu0
    %3229 = vdwg.mxu0
    %v3230 = vtanh.pop %v3225
    %v3231 = vpack.c.bf16 %v3230, %v3230
    %v3232 = vld [vmem:[#allocation22] sm:$0xf]
    %v3233 = vld [vmem:[#allocation22 + $0x4] sm:$0xf]
    %v3234 = vld [vmem:[#allocation22 + $0x8] sm:$0xf]
    %v3235 = vld [vmem:[#allocation22 + $0xc] sm:$0xf]
    %v3236 = vld [vmem:[#allocation23] sm:$0x1]
    %v3238 = vlaneseq
    %v3239 = vshrl.u32 %v3238, 7
    %v3240 = vsub.s32 0, %v3239
    %v3241 = vrot.slane %v3236, %v3240
    %v3247 = vunpack.c.l.b16 %v3232
    %v3248 = vunpack.c.l.b16 %v3233
    %v3249 = vunpack.c.l.b16 %v3234
    %v3250 = vunpack.c.l.b16 %v3235
    %v3251 = vpack.c.b16 %v3248, %v3247
    %v3252 = vpack.c.b16 %v3250, %v3249
    %v3256 = vsel %vm280, %v3231, 0
    %3258 = vmatprep.subr.bf16.mxu0 0
    %3259 = vmatpush1.bf16.msra.mxu0 %v3251
    %3260 = vmatprep.subr.bf16.mxu0 0
    %3261 = vmatpush1.bf16.msra.mxu0 %v3252
    %3262 = vmatprep.subr.bf16.mxu0 0
    %3263 = vmatpush1.bf16.msra.mxu0 0
    %3264 = vmatprep.subr.bf16.mxu0 0
    %3265 = vmatpush1.bf16.msra.mxu0 0
    %3266 = vmatprep.subr.bf16.mxu0 0
    %3267 = vmatpush1.bf16.msra.mxu0 0
    %3268 = vmatprep.subr.bf16.mxu0 0
    %3269 = vmatpush1.bf16.msra.mxu0 0
    %3270 = vmatprep.subr.bf16.mxu0 0
    %3271 = vmatpush1.bf16.msra.mxu0 0
    %3272 = vmatprep.subr.bf16.mxu0 0
    %3273 = vmatpush1.bf16.msra.mxu0 0
    %3274 = vmatprep.subr.bf16.mxu0 0
    %3275 = vmatpush1.bf16.msra.mxu0 0
    %3276 = vmatprep.subr.bf16.mxu0 0
    %3277 = vmatpush1.bf16.msra.mxu0 0
    %3278 = vmatprep.subr.bf16.mxu0 0
    %3279 = vmatpush1.bf16.msra.mxu0 0
    %3280 = vmatprep.subr.bf16.mxu0 0
    %3281 = vmatpush1.bf16.msra.mxu0 0
    %3282 = vmatprep.subr.bf16.mxu0 0
    %3283 = vmatpush1.bf16.msra.mxu0 0
    %3284 = vmatprep.subr.bf16.mxu0 0
    %3285 = vmatpush1.bf16.msra.mxu0 0
    %3286 = vmatprep.subr.bf16.mxu0 0
    %3287 = vmatpush1.bf16.msra.mxu0 0
    %3288 = vmatprep.subr.bf16.mxu0 0
    %3289 = vmatpush1.bf16.msra.mxu0 0
    %3290 = vmatprep.mubr.bf16.mxu0 0
    %3291 = vmatmul.mubr.bf16.gmra.mrb[0].mxu0 %v3256
    %v3292 = vpop.f32.mrb[0].mxu0
    %v3293 = vadd.f32 %v3241, %v3292
    %v3294 = vpop.f32.mrb[0].mxu0
    %v3295 = vpop.f32.mrb[0].mxu0
    %v3296 = vpop.f32.mrb[0].mxu0
    %3297 = vdwg.mxu0
    %3298 = vst [vmem:[#allocation25] sm:$0x3] %v3293
    // Predicated region
    $region150: #{bert_paired_classifier_forward.1} parent=1 // pred_check
      _
    $region151: #{bert_paired_classifier_forward.1} parent=1 // pred_check_branch
      %3300 = sbr.rel (0) target = $region153
    $region152: #{bert_paired_classifier_forward.1} parent=1 // pred_region
      %s3302 = ssub.s32 32, 32
      %3303 = vsyncadd [#allocation4], %s3302
      %s3305 = sshll.u32 [#allocation25], 4
      %s3306 = int_to_ptr.vmem [resolvable:$true] %s3305
      %3308 = dma.vmem_to_hbm [thread:$0]  %s3306, 32, %s23, [#allocation4]
    $region153: #{bert_paired_classifier_forward.1} parent=1 // pred_fallthru
      _
    // Predicated region
    $region154: #{bert_paired_classifier_forward.1} parent=1 // pred_check
      _
    $region155: #{bert_paired_classifier_forward.1} parent=1 // pred_check_branch
      %3310 = sbr.rel (0) target = $region157
    $region156: #{bert_paired_classifier_forward.1} parent=1 // pred_region
      %3311 = dma.done [#allocation4], 32
    $region157: #{bert_paired_classifier_forward.1} parent=1 // pred_fallthru
      _
    %3312 = vsyncpa [#allocation3], 1
    %3313 = vsyncpa [#allocation6], 1
    %3314 = vsyncpa [#allocation9], 1
    %3315 = vsyncpa [#allocation12], 1
    %3316 = vsyncpa [#allocation15], 1
    %3317 = vsyncpa [#allocation18], 1
    %3318 = vsyncpa [#allocation21], 1
    %3319 = vsyncpa [#allocation24], 1
    %3320 = vsyncpa [#allocation4], 1

</llo_original>
